<compile_context>
chip_gen: v5e
topology: v5e:2x2
jax: 0.10.0
libtpu: 0.0.40
codegen_flags: <defaults>
</compile_context>

<pallas_src>
import functools

import jax
import jax.numpy as jnp
from jax.experimental import pallas as pl

DATA_LEN = 500
FFT_LEN = DATA_LEN // 2          # 250: input length of the Extractor
BN_EPS = 1e-5                    # nn.BatchNorm1d default eps
NEG_SLOPE = 0.01                 # nn.LeakyReLU default negative_slope


# ------------------------------ kernel body ----------------------------------
def _conv_bn_lrelu(h, w2, b, g, be, *, n_batch):
    """Conv1d('same' zero padding) + BatchNorm1d(batch stats) + LeakyReLU.

    h  : (Cin, N*L)    lane axis = flattened (sample, position), n-major
    w2 : (Cout, K*Cin) conv weight, column q = k*Cin + ci
    b / g / be : (Cout, 1)
    returns (Cout, N*L)
    """
    cin, m = h.shape
    cout, kcin = w2.shape
    ksize = kcin // cin
    pad = (ksize - 1) // 2          # all three convs are 'same'-padded
    length = m // n_batch

    # im2col built in-kernel from static shifted slices (zero padding is per
    # sample, so it never leaks across the sample boundary of the lane axis).
    zpad = jnp.zeros((cin, pad), jnp.float32)
    cols = []
    for n in range(n_batch):
        hn = h[:, n * length:(n + 1) * length]                    # (Cin, L)
        xpn = jnp.concatenate([zpad, hn, zpad], axis=1)           # (Cin, L+2P)
        taps = [xpn[:, k:k + length] for k in range(ksize)]       # K x (Cin, L)
        cols.append(jnp.concatenate(taps, axis=0))                # (K*Cin, L)
    patches = jnp.concatenate(cols, axis=1)                       # (K*Cin, N*L)

    # Conv1d == one full-batch MXU matmul (default precision per perf review).
    z = jnp.dot(w2, patches, preferred_element_type=jnp.float32) + b

    # BatchNorm1d, training-mode biased batch statistics over (N, L).
    mean = jnp.mean(z, axis=1, keepdims=True)
    var = jnp.mean(jnp.square(z - mean), axis=1, keepdims=True)
    z = (z - mean) * jax.lax.rsqrt(var + BN_EPS)
    z = z * g + be

    # LeakyReLU.
    return jnp.where(z >= 0, z, NEG_SLOPE * z)


def _maxpool2(z, sel):
    """MaxPool1d(kernel=2, stride=2), floor mode, applied per sample.

    z   : (C, M)       M = N*L, n-major flattened lane axis
    sel : (M-1, Mout)  0/1 matrix with sel[n*L + 2l, n*(L//2) + l] = 1
    """
    m = jnp.maximum(z[:, :-1], z[:, 1:])      # m[:, j] = max(z[:, j], z[:, j+1])
    # Exact 0/1 column selection of the even per-sample positions; handles the
    # odd-length (125 -> 62) floor case and sample boundaries by construction.
    # HIGHEST keeps the selected maxima bit-exact; this contraction is tiny
    # (<=15 x 499 x 250), so the extra MXU passes are noise -- the big conv
    # matmuls above stay at DEFAULT precision per the perf review.
    return jnp.dot(m, sel, preferred_element_type=jnp.float32,
                   precision=jax.lax.Precision.HIGHEST)


def _extractor_kernel(x_ref,
                      w1_ref, b1_ref, g1_ref, be1_ref,
                      w2_ref, b2_ref, g2_ref, be2_ref,
                      w3_ref, b3_ref, g3_ref, be3_ref,
                      s1_ref, s2_ref, s3_ref,
                      out_ref, *, n_batch):
    """All three Extractor stages fused; activations stay in VMEM/vregs."""
    h = _conv_bn_lrelu(x_ref[...], w1_ref[...], b1_ref[...], g1_ref[...],
                       be1_ref[...], n_batch=n_batch)
    h = _maxpool2(h, s1_ref[...])                                 # (5,  N*125)
    h = _conv_bn_lrelu(h, w2_ref[...], b2_ref[...], g2_ref[...], be2_ref[...],
                       n_batch=n_batch)
    h = _maxpool2(h, s2_ref[...])                                 # (10, N*62)
    h = _conv_bn_lrelu(h, w3_ref[...], b3_ref[...], g3_ref[...], be3_ref[...],
                       n_batch=n_batch)
    h = _maxpool2(h, s3_ref[...])                                 # (15, N*31)

    # Rearrange (C, N*Lp) -> (N*C, Lp) so one full-block store plus a plain
    # reshape in the wrapper yields torch's channel-major flatten.
    lp = out_ref.shape[1]
    out_ref[...] = jnp.concatenate(
        [h[:, n * lp:(n + 1) * lp] for n in range(n_batch)], axis=0)


# ------------------------------ host wrapper ---------------------------------
def _prep_weight(w):
    cout, cin, k = w.shape
    # W2[o, k*Cin + ci] = w[o, ci, k]  (matches in-kernel patch row order).
    return jnp.transpose(w, (0, 2, 1)).reshape(cout, k * cin).astype(jnp.float32)


def _col(v):
    return v.reshape(-1, 1).astype(jnp.float32)


def _pool_select(length, n_batch):
    """(N*L - 1, N*(L//2)) 0/1 matrix picking source column n*L + 2l."""
    lout = length // 2
    m, mout = n_batch * length, n_batch * lout
    j = jnp.arange(mout)
    src = (j // lout) * length + (j % lout) * 2
    return (jnp.arange(m - 1)[:, None] == src[None, :]).astype(jnp.float32)


def extractor_forward(x, p):
    """x: (N, 1, FFT_LEN) in PyTorch NCL layout -> (N, 15 * 31)."""
    n, cin, l1 = x.shape
    # (Cin, N*L): channels on sublanes, flattened (sample, position) on lanes.
    h0 = jnp.transpose(x, (1, 0, 2)).reshape(cin, n * l1).astype(jnp.float32)

    l2, l3 = l1 // 2, l1 // 2 // 2                # conv-input lengths 250/125/62
    s1 = _pool_select(l1, n)
    s2 = _pool_select(l2, n)
    s3 = _pool_select(l3, n)

    cout3 = p['w3'].shape[0]
    lp3 = l3 // 2

    # NOTE(scaling): total live data is <1 MiB, so a single grid-less launch
    # with whole-array VMEM operands is optimal here.  At real batch sizes,
    # split N over a grid axis marked "parallel" (v7x has 2 TensorCores) and
    # re-derive tiles for v7x's 64 MiB VMEM; BN batch stats couple the batch,
    # so either keep the whole batch per core or use a two-pass reduction.
    kern = functools.partial(_extractor_kernel, n_batch=n)
    out = pl.pallas_call(
        kern,
        out_shape=jax.ShapeDtypeStruct((n * cout3, lp3), jnp.float32),
    )(h0,
      _prep_weight(p['w1']), _col(p['b1']), _col(p['g1']), _col(p['be1']),
      _prep_weight(p['w2']), _col(p['b2']), _col(p['g2']), _col(p['be2']),
      _prep_weight(p['w3']), _col(p['b3']), _col(p['g3']), _col(p['be3']),
      s1, s2, s3)

    # torch.flatten(x, start_dim=1) on (N, C, L): channel-major flatten.
    return out.reshape(n, cout3 * lp3)


# ----------------------------- pure-JAX reference ----------------------------
def _ref_stage(x, w, b, gamma, beta, padding):
    y = jax.lax.conv_general_dilated(
        x, w, window_strides=(1,), padding=[(padding, padding)],
        dimension_numbers=('NCH', 'OIH', 'NCH'),
        precision=jax.lax.Precision.HIGHEST)
    y = y + b[None, :, None]
    mean = jnp.mean(y, axis=(0, 2), keepdims=True)
    var = jnp.mean(jnp.square(y - mean), axis=(0, 2), keepdims=True)
    z = (y - mean) / jnp.sqrt(var + BN_EPS)
    z = z * gamma[None, :, None] + beta[None, :, None]
    z = jnp.where(z >= 0, z, NEG_SLOPE * z)
    n, c, l = z.shape
    lp = l // 2
    return jnp.max(z[:, :, :2 * lp].reshape(n, c, lp, 2), axis=-1)


def ref_forward(x, p):
    h = _ref_stage(x, p['w1'], p['b1'], p['g1'], p['be1'], 25)
    h = _ref_stage(h, p['w2'], p['b2'], p['g2'], p['be2'], 2)
    h = _ref_stage(h, p['w3'], p['b3'], p['g3'], p['be3'], 5)
    return h.reshape(h.shape[0], -1)


if __name__ == "__main__":
    key = jax.random.PRNGKey(0)
    ks = jax.random.split(key, 16)
    N = 2
    x = jax.random.normal(ks[0], (N, 1, FFT_LEN), dtype=jnp.float32)

    def winit(k, shape):
        fan_in = shape[1] * shape[2]
        return jax.random.normal(k, shape, jnp.float32) / jnp.sqrt(float(fan_in))

    params = {
        'w1': winit(ks[1], (5, 1, 51)),
        'b1': 0.1 * jax.random.normal(ks[2], (5,), jnp.float32),
        'g1': 1.0 + 0.1 * jax.random.normal(ks[3], (5,), jnp.float32),
        'be1': 0.1 * jax.random.normal(ks[4], (5,), jnp.float32),
        'w2': winit(ks[5], (10, 5, 5)),
        'b2': 0.1 * jax.random.normal(ks[6], (10,), jnp.float32),
        'g2': 1.0 + 0.1 * jax.random.normal(ks[7], (10,), jnp.float32),
        'be2': 0.1 * jax.random.normal(ks[8], (10,), jnp.float32),
        'w3': winit(ks[9], (15, 10, 11)),
        'b3': 0.1 * jax.random.normal(ks[10], (15,), jnp.float32),
        'g3': 1.0 + 0.1 * jax.random.normal(ks[11], (15,), jnp.float32),
        'be3': 0.1 * jax.random.normal(ks[12], (15,), jnp.float32),
    }

    out = jax.jit(extractor_forward)(x, params)
    out = jax.block_until_ready(out)
    assert out.shape == (N, 15 * 31), out.shape
    assert bool(jnp.all(jnp.isfinite(out)))

    ref = ref_forward(x, params)
    max_err = float(jnp.max(jnp.abs(out - ref)))
    # Kernel conv matmuls run at default MXU precision (per perf review);
    # the reference conv runs at HIGHEST -> allow a few e-3 of drift.
    assert jnp.allclose(out, ref, rtol=1e-2, atol=1e-2), max_err

    print("KERNEL_OK")
</pallas_src>

<mosaic_0001>
module attributes {stable_mosaic.version = 11 : i64} {
  func.func @_extractor_kernel(%arg0: memref<1x500xf32, #tpu.memory_space<vmem>>, %arg1: memref<5x51xf32, #tpu.memory_space<vmem>>, %arg2: memref<5x1xf32, #tpu.memory_space<vmem>>, %arg3: memref<5x1xf32, #tpu.memory_space<vmem>>, %arg4: memref<5x1xf32, #tpu.memory_space<vmem>>, %arg5: memref<10x25xf32, #tpu.memory_space<vmem>>, %arg6: memref<10x1xf32, #tpu.memory_space<vmem>>, %arg7: memref<10x1xf32, #tpu.memory_space<vmem>>, %arg8: memref<10x1xf32, #tpu.memory_space<vmem>>, %arg9: memref<15x110xf32, #tpu.memory_space<vmem>>, %arg10: memref<15x1xf32, #tpu.memory_space<vmem>>, %arg11: memref<15x1xf32, #tpu.memory_space<vmem>>, %arg12: memref<15x1xf32, #tpu.memory_space<vmem>>, %arg13: memref<499x250xf32, #tpu.memory_space<vmem>>, %arg14: memref<249x124xf32, #tpu.memory_space<vmem>>, %arg15: memref<123x62xf32, #tpu.memory_space<vmem>>, %arg16: memref<30x31xf32, #tpu.memory_space<vmem>>) attributes {dimension_semantics = [], scalar_prefetch = 0 : i64, scratch_operands = 0 : i64, tpu.core_type = #tpu.core_type<tc>} {
    %c0 = arith.constant 0 : index
    %c0_0 = arith.constant 0 : index
    %0 = vector.load %arg0[%c0, %c0_0] : memref<1x500xf32, #tpu.memory_space<vmem>>, vector<1x500xf32>
    %c0_1 = arith.constant 0 : index
    %c0_2 = arith.constant 0 : index
    %1 = vector.load %arg1[%c0_1, %c0_2] : memref<5x51xf32, #tpu.memory_space<vmem>>, vector<5x51xf32>
    %c0_3 = arith.constant 0 : index
    %c0_4 = arith.constant 0 : index
    %2 = vector.load %arg2[%c0_3, %c0_4] : memref<5x1xf32, #tpu.memory_space<vmem>>, vector<5x1xf32>
    %c0_5 = arith.constant 0 : index
    %c0_6 = arith.constant 0 : index
    %3 = vector.load %arg3[%c0_5, %c0_6] : memref<5x1xf32, #tpu.memory_space<vmem>>, vector<5x1xf32>
    %c0_7 = arith.constant 0 : index
    %c0_8 = arith.constant 0 : index
    %4 = vector.load %arg4[%c0_7, %c0_8] : memref<5x1xf32, #tpu.memory_space<vmem>>, vector<5x1xf32>
    %cst = arith.constant 0.000000e+00 : f32
    %5 = vector.broadcast %cst : f32 to vector<1x25xf32>
    %6 = vector.extract_strided_slice %0 {offsets = [0, 0], sizes = [1, 250], strides = [1, 1]} : vector<1x500xf32> to vector<1x250xf32>
    %7 = tpu.concatenate %5, %6, %5 in 1 : vector<1x25xf32>, vector<1x250xf32>, vector<1x25xf32> -> vector<1x300xf32>
    %8 = vector.extract_strided_slice %7 {offsets = [0, 0], sizes = [1, 250], strides = [1, 1]} : vector<1x300xf32> to vector<1x250xf32>
    %9 = vector.extract_strided_slice %7 {offsets = [0, 1], sizes = [1, 250], strides = [1, 1]} : vector<1x300xf32> to vector<1x250xf32>
    %10 = vector.extract_strided_slice %7 {offsets = [0, 2], sizes = [1, 250], strides = [1, 1]} : vector<1x300xf32> to vector<1x250xf32>
    %11 = vector.extract_strided_slice %7 {offsets = [0, 3], sizes = [1, 250], strides = [1, 1]} : vector<1x300xf32> to vector<1x250xf32>
    %12 = vector.extract_strided_slice %7 {offsets = [0, 4], sizes = [1, 250], strides = [1, 1]} : vector<1x300xf32> to vector<1x250xf32>
    %13 = vector.extract_strided_slice %7 {offsets = [0, 5], sizes = [1, 250], strides = [1, 1]} : vector<1x300xf32> to vector<1x250xf32>
    %14 = vector.extract_strided_slice %7 {offsets = [0, 6], sizes = [1, 250], strides = [1, 1]} : vector<1x300xf32> to vector<1x250xf32>
    %15 = vector.extract_strided_slice %7 {offsets = [0, 7], sizes = [1, 250], strides = [1, 1]} : vector<1x300xf32> to vector<1x250xf32>
    %16 = vector.extract_strided_slice %7 {offsets = [0, 8], sizes = [1, 250], strides = [1, 1]} : vector<1x300xf32> to vector<1x250xf32>
    %17 = vector.extract_strided_slice %7 {offsets = [0, 9], sizes = [1, 250], strides = [1, 1]} : vector<1x300xf32> to vector<1x250xf32>
    %18 = vector.extract_strided_slice %7 {offsets = [0, 10], sizes = [1, 250], strides = [1, 1]} : vector<1x300xf32> to vector<1x250xf32>
    %19 = vector.extract_strided_slice %7 {offsets = [0, 11], sizes = [1, 250], strides = [1, 1]} : vector<1x300xf32> to vector<1x250xf32>
    %20 = vector.extract_strided_slice %7 {offsets = [0, 12], sizes = [1, 250], strides = [1, 1]} : vector<1x300xf32> to vector<1x250xf32>
    %21 = vector.extract_strided_slice %7 {offsets = [0, 13], sizes = [1, 250], strides = [1, 1]} : vector<1x300xf32> to vector<1x250xf32>
    %22 = vector.extract_strided_slice %7 {offsets = [0, 14], sizes = [1, 250], strides = [1, 1]} : vector<1x300xf32> to vector<1x250xf32>
    %23 = vector.extract_strided_slice %7 {offsets = [0, 15], sizes = [1, 250], strides = [1, 1]} : vector<1x300xf32> to vector<1x250xf32>
    %24 = vector.extract_strided_slice %7 {offsets = [0, 16], sizes = [1, 250], strides = [1, 1]} : vector<1x300xf32> to vector<1x250xf32>
    %25 = vector.extract_strided_slice %7 {offsets = [0, 17], sizes = [1, 250], strides = [1, 1]} : vector<1x300xf32> to vector<1x250xf32>
    %26 = vector.extract_strided_slice %7 {offsets = [0, 18], sizes = [1, 250], strides = [1, 1]} : vector<1x300xf32> to vector<1x250xf32>
    %27 = vector.extract_strided_slice %7 {offsets = [0, 19], sizes = [1, 250], strides = [1, 1]} : vector<1x300xf32> to vector<1x250xf32>
    %28 = vector.extract_strided_slice %7 {offsets = [0, 20], sizes = [1, 250], strides = [1, 1]} : vector<1x300xf32> to vector<1x250xf32>
    %29 = vector.extract_strided_slice %7 {offsets = [0, 21], sizes = [1, 250], strides = [1, 1]} : vector<1x300xf32> to vector<1x250xf32>
    %30 = vector.extract_strided_slice %7 {offsets = [0, 22], sizes = [1, 250], strides = [1, 1]} : vector<1x300xf32> to vector<1x250xf32>
    %31 = vector.extract_strided_slice %7 {offsets = [0, 23], sizes = [1, 250], strides = [1, 1]} : vector<1x300xf32> to vector<1x250xf32>
    %32 = vector.extract_strided_slice %7 {offsets = [0, 24], sizes = [1, 250], strides = [1, 1]} : vector<1x300xf32> to vector<1x250xf32>
    %33 = vector.extract_strided_slice %7 {offsets = [0, 25], sizes = [1, 250], strides = [1, 1]} : vector<1x300xf32> to vector<1x250xf32>
    %34 = vector.extract_strided_slice %7 {offsets = [0, 26], sizes = [1, 250], strides = [1, 1]} : vector<1x300xf32> to vector<1x250xf32>
    %35 = vector.extract_strided_slice %7 {offsets = [0, 27], sizes = [1, 250], strides = [1, 1]} : vector<1x300xf32> to vector<1x250xf32>
    %36 = vector.extract_strided_slice %7 {offsets = [0, 28], sizes = [1, 250], strides = [1, 1]} : vector<1x300xf32> to vector<1x250xf32>
    %37 = vector.extract_strided_slice %7 {offsets = [0, 29], sizes = [1, 250], strides = [1, 1]} : vector<1x300xf32> to vector<1x250xf32>
    %38 = vector.extract_strided_slice %7 {offsets = [0, 30], sizes = [1, 250], strides = [1, 1]} : vector<1x300xf32> to vector<1x250xf32>
    %39 = vector.extract_strided_slice %7 {offsets = [0, 31], sizes = [1, 250], strides = [1, 1]} : vector<1x300xf32> to vector<1x250xf32>
    %40 = vector.extract_strided_slice %7 {offsets = [0, 32], sizes = [1, 250], strides = [1, 1]} : vector<1x300xf32> to vector<1x250xf32>
    %41 = vector.extract_strided_slice %7 {offsets = [0, 33], sizes = [1, 250], strides = [1, 1]} : vector<1x300xf32> to vector<1x250xf32>
    %42 = vector.extract_strided_slice %7 {offsets = [0, 34], sizes = [1, 250], strides = [1, 1]} : vector<1x300xf32> to vector<1x250xf32>
    %43 = vector.extract_strided_slice %7 {offsets = [0, 35], sizes = [1, 250], strides = [1, 1]} : vector<1x300xf32> to vector<1x250xf32>
    %44 = vector.extract_strided_slice %7 {offsets = [0, 36], sizes = [1, 250], strides = [1, 1]} : vector<1x300xf32> to vector<1x250xf32>
    %45 = vector.extract_strided_slice %7 {offsets = [0, 37], sizes = [1, 250], strides = [1, 1]} : vector<1x300xf32> to vector<1x250xf32>
    %46 = vector.extract_strided_slice %7 {offsets = [0, 38], sizes = [1, 250], strides = [1, 1]} : vector<1x300xf32> to vector<1x250xf32>
    %47 = vector.extract_strided_slice %7 {offsets = [0, 39], sizes = [1, 250], strides = [1, 1]} : vector<1x300xf32> to vector<1x250xf32>
    %48 = vector.extract_strided_slice %7 {offsets = [0, 40], sizes = [1, 250], strides = [1, 1]} : vector<1x300xf32> to vector<1x250xf32>
    %49 = vector.extract_strided_slice %7 {offsets = [0, 41], sizes = [1, 250], strides = [1, 1]} : vector<1x300xf32> to vector<1x250xf32>
    %50 = vector.extract_strided_slice %7 {offsets = [0, 42], sizes = [1, 250], strides = [1, 1]} : vector<1x300xf32> to vector<1x250xf32>
    %51 = vector.extract_strided_slice %7 {offsets = [0, 43], sizes = [1, 250], strides = [1, 1]} : vector<1x300xf32> to vector<1x250xf32>
    %52 = vector.extract_strided_slice %7 {offsets = [0, 44], sizes = [1, 250], strides = [1, 1]} : vector<1x300xf32> to vector<1x250xf32>
    %53 = vector.extract_strided_slice %7 {offsets = [0, 45], sizes = [1, 250], strides = [1, 1]} : vector<1x300xf32> to vector<1x250xf32>
    %54 = vector.extract_strided_slice %7 {offsets = [0, 46], sizes = [1, 250], strides = [1, 1]} : vector<1x300xf32> to vector<1x250xf32>
    %55 = vector.extract_strided_slice %7 {offsets = [0, 47], sizes = [1, 250], strides = [1, 1]} : vector<1x300xf32> to vector<1x250xf32>
    %56 = vector.extract_strided_slice %7 {offsets = [0, 48], sizes = [1, 250], strides = [1, 1]} : vector<1x300xf32> to vector<1x250xf32>
    %57 = vector.extract_strided_slice %7 {offsets = [0, 49], sizes = [1, 250], strides = [1, 1]} : vector<1x300xf32> to vector<1x250xf32>
    %58 = vector.extract_strided_slice %7 {offsets = [0, 50], sizes = [1, 250], strides = [1, 1]} : vector<1x300xf32> to vector<1x250xf32>
    %59 = tpu.concatenate %8, %9, %10, %11, %12, %13, %14, %15, %16, %17, %18, %19, %20, %21, %22, %23 in 0 : vector<1x250xf32>, vector<1x250xf32>, vector<1x250xf32>, vector<1x250xf32>, vector<1x250xf32>, vector<1x250xf32>, vector<1x250xf32>, vector<1x250xf32>, vector<1x250xf32>, vector<1x250xf32>, vector<1x250xf32>, vector<1x250xf32>, vector<1x250xf32>, vector<1x250xf32>, vector<1x250xf32>, vector<1x250xf32> -> vector<16x250xf32>
    %60 = tpu.concatenate %24, %25, %26, %27, %28, %29, %30, %31, %32, %33, %34, %35, %36, %37, %38, %39 in 0 : vector<1x250xf32>, vector<1x250xf32>, vector<1x250xf32>, vector<1x250xf32>, vector<1x250xf32>, vector<1x250xf32>, vector<1x250xf32>, vector<1x250xf32>, vector<1x250xf32>, vector<1x250xf32>, vector<1x250xf32>, vector<1x250xf32>, vector<1x250xf32>, vector<1x250xf32>, vector<1x250xf32>, vector<1x250xf32> -> vector<16x250xf32>
    %61 = tpu.concatenate %40, %41, %42, %43, %44, %45, %46, %47, %48, %49, %50, %51, %52, %53, %54, %55 in 0 : vector<1x250xf32>, vector<1x250xf32>, vector<1x250xf32>, vector<1x250xf32>, vector<1x250xf32>, vector<1x250xf32>, vector<1x250xf32>, vector<1x250xf32>, vector<1x250xf32>, vector<1x250xf32>, vector<1x250xf32>, vector<1x250xf32>, vector<1x250xf32>, vector<1x250xf32>, vector<1x250xf32>, vector<1x250xf32> -> vector<16x250xf32>
    %62 = tpu.concatenate %56, %57, %58 in 0 : vector<1x250xf32>, vector<1x250xf32>, vector<1x250xf32> -> vector<3x250xf32>
    %63 = tpu.concatenate %59, %60, %61, %62 in 0 : vector<16x250xf32>, vector<16x250xf32>, vector<16x250xf32>, vector<3x250xf32> -> vector<51x250xf32>
    %64 = vector.extract_strided_slice %0 {offsets = [0, 250], sizes = [1, 250], strides = [1, 1]} : vector<1x500xf32> to vector<1x250xf32>
    %65 = tpu.concatenate %5, %64, %5 in 1 : vector<1x25xf32>, vector<1x250xf32>, vector<1x25xf32> -> vector<1x300xf32>
    %66 = vector.extract_strided_slice %65 {offsets = [0, 0], sizes = [1, 250], strides = [1, 1]} : vector<1x300xf32> to vector<1x250xf32>
    %67 = vector.extract_strided_slice %65 {offsets = [0, 1], sizes = [1, 250], strides = [1, 1]} : vector<1x300xf32> to vector<1x250xf32>
    %68 = vector.extract_strided_slice %65 {offsets = [0, 2], sizes = [1, 250], strides = [1, 1]} : vector<1x300xf32> to vector<1x250xf32>
    %69 = vector.extract_strided_slice %65 {offsets = [0, 3], sizes = [1, 250], strides = [1, 1]} : vector<1x300xf32> to vector<1x250xf32>
    %70 = vector.extract_strided_slice %65 {offsets = [0, 4], sizes = [1, 250], strides = [1, 1]} : vector<1x300xf32> to vector<1x250xf32>
    %71 = vector.extract_strided_slice %65 {offsets = [0, 5], sizes = [1, 250], strides = [1, 1]} : vector<1x300xf32> to vector<1x250xf32>
    %72 = vector.extract_strided_slice %65 {offsets = [0, 6], sizes = [1, 250], strides = [1, 1]} : vector<1x300xf32> to vector<1x250xf32>
    %73 = vector.extract_strided_slice %65 {offsets = [0, 7], sizes = [1, 250], strides = [1, 1]} : vector<1x300xf32> to vector<1x250xf32>
    %74 = vector.extract_strided_slice %65 {offsets = [0, 8], sizes = [1, 250], strides = [1, 1]} : vector<1x300xf32> to vector<1x250xf32>
    %75 = vector.extract_strided_slice %65 {offsets = [0, 9], sizes = [1, 250], strides = [1, 1]} : vector<1x300xf32> to vector<1x250xf32>
    %76 = vector.extract_strided_slice %65 {offsets = [0, 10], sizes = [1, 250], strides = [1, 1]} : vector<1x300xf32> to vector<1x250xf32>
    %77 = vector.extract_strided_slice %65 {offsets = [0, 11], sizes = [1, 250], strides = [1, 1]} : vector<1x300xf32> to vector<1x250xf32>
    %78 = vector.extract_strided_slice %65 {offsets = [0, 12], sizes = [1, 250], strides = [1, 1]} : vector<1x300xf32> to vector<1x250xf32>
    %79 = vector.extract_strided_slice %65 {offsets = [0, 13], sizes = [1, 250], strides = [1, 1]} : vector<1x300xf32> to vector<1x250xf32>
    %80 = vector.extract_strided_slice %65 {offsets = [0, 14], sizes = [1, 250], strides = [1, 1]} : vector<1x300xf32> to vector<1x250xf32>
    %81 = vector.extract_strided_slice %65 {offsets = [0, 15], sizes = [1, 250], strides = [1, 1]} : vector<1x300xf32> to vector<1x250xf32>
    %82 = vector.extract_strided_slice %65 {offsets = [0, 16], sizes = [1, 250], strides = [1, 1]} : vector<1x300xf32> to vector<1x250xf32>
    %83 = vector.extract_strided_slice %65 {offsets = [0, 17], sizes = [1, 250], strides = [1, 1]} : vector<1x300xf32> to vector<1x250xf32>
    %84 = vector.extract_strided_slice %65 {offsets = [0, 18], sizes = [1, 250], strides = [1, 1]} : vector<1x300xf32> to vector<1x250xf32>
    %85 = vector.extract_strided_slice %65 {offsets = [0, 19], sizes = [1, 250], strides = [1, 1]} : vector<1x300xf32> to vector<1x250xf32>
    %86 = vector.extract_strided_slice %65 {offsets = [0, 20], sizes = [1, 250], strides = [1, 1]} : vector<1x300xf32> to vector<1x250xf32>
    %87 = vector.extract_strided_slice %65 {offsets = [0, 21], sizes = [1, 250], strides = [1, 1]} : vector<1x300xf32> to vector<1x250xf32>
    %88 = vector.extract_strided_slice %65 {offsets = [0, 22], sizes = [1, 250], strides = [1, 1]} : vector<1x300xf32> to vector<1x250xf32>
    %89 = vector.extract_strided_slice %65 {offsets = [0, 23], sizes = [1, 250], strides = [1, 1]} : vector<1x300xf32> to vector<1x250xf32>
    %90 = vector.extract_strided_slice %65 {offsets = [0, 24], sizes = [1, 250], strides = [1, 1]} : vector<1x300xf32> to vector<1x250xf32>
    %91 = vector.extract_strided_slice %65 {offsets = [0, 25], sizes = [1, 250], strides = [1, 1]} : vector<1x300xf32> to vector<1x250xf32>
    %92 = vector.extract_strided_slice %65 {offsets = [0, 26], sizes = [1, 250], strides = [1, 1]} : vector<1x300xf32> to vector<1x250xf32>
    %93 = vector.extract_strided_slice %65 {offsets = [0, 27], sizes = [1, 250], strides = [1, 1]} : vector<1x300xf32> to vector<1x250xf32>
    %94 = vector.extract_strided_slice %65 {offsets = [0, 28], sizes = [1, 250], strides = [1, 1]} : vector<1x300xf32> to vector<1x250xf32>
    %95 = vector.extract_strided_slice %65 {offsets = [0, 29], sizes = [1, 250], strides = [1, 1]} : vector<1x300xf32> to vector<1x250xf32>
    %96 = vector.extract_strided_slice %65 {offsets = [0, 30], sizes = [1, 250], strides = [1, 1]} : vector<1x300xf32> to vector<1x250xf32>
    %97 = vector.extract_strided_slice %65 {offsets = [0, 31], sizes = [1, 250], strides = [1, 1]} : vector<1x300xf32> to vector<1x250xf32>
    %98 = vector.extract_strided_slice %65 {offsets = [0, 32], sizes = [1, 250], strides = [1, 1]} : vector<1x300xf32> to vector<1x250xf32>
    %99 = vector.extract_strided_slice %65 {offsets = [0, 33], sizes = [1, 250], strides = [1, 1]} : vector<1x300xf32> to vector<1x250xf32>
    %100 = vector.extract_strided_slice %65 {offsets = [0, 34], sizes = [1, 250], strides = [1, 1]} : vector<1x300xf32> to vector<1x250xf32>
    %101 = vector.extract_strided_slice %65 {offsets = [0, 35], sizes = [1, 250], strides = [1, 1]} : vector<1x300xf32> to vector<1x250xf32>
    %102 = vector.extract_strided_slice %65 {offsets = [0, 36], sizes = [1, 250], strides = [1, 1]} : vector<1x300xf32> to vector<1x250xf32>
    %103 = vector.extract_strided_slice %65 {offsets = [0, 37], sizes = [1, 250], strides = [1, 1]} : vector<1x300xf32> to vector<1x250xf32>
    %104 = vector.extract_strided_slice %65 {offsets = [0, 38], sizes = [1, 250], strides = [1, 1]} : vector<1x300xf32> to vector<1x250xf32>
    %105 = vector.extract_strided_slice %65 {offsets = [0, 39], sizes = [1, 250], strides = [1, 1]} : vector<1x300xf32> to vector<1x250xf32>
    %106 = vector.extract_strided_slice %65 {offsets = [0, 40], sizes = [1, 250], strides = [1, 1]} : vector<1x300xf32> to vector<1x250xf32>
    %107 = vector.extract_strided_slice %65 {offsets = [0, 41], sizes = [1, 250], strides = [1, 1]} : vector<1x300xf32> to vector<1x250xf32>
    %108 = vector.extract_strided_slice %65 {offsets = [0, 42], sizes = [1, 250], strides = [1, 1]} : vector<1x300xf32> to vector<1x250xf32>
    %109 = vector.extract_strided_slice %65 {offsets = [0, 43], sizes = [1, 250], strides = [1, 1]} : vector<1x300xf32> to vector<1x250xf32>
    %110 = vector.extract_strided_slice %65 {offsets = [0, 44], sizes = [1, 250], strides = [1, 1]} : vector<1x300xf32> to vector<1x250xf32>
    %111 = vector.extract_strided_slice %65 {offsets = [0, 45], sizes = [1, 250], strides = [1, 1]} : vector<1x300xf32> to vector<1x250xf32>
    %112 = vector.extract_strided_slice %65 {offsets = [0, 46], sizes = [1, 250], strides = [1, 1]} : vector<1x300xf32> to vector<1x250xf32>
    %113 = vector.extract_strided_slice %65 {offsets = [0, 47], sizes = [1, 250], strides = [1, 1]} : vector<1x300xf32> to vector<1x250xf32>
    %114 = vector.extract_strided_slice %65 {offsets = [0, 48], sizes = [1, 250], strides = [1, 1]} : vector<1x300xf32> to vector<1x250xf32>
    %115 = vector.extract_strided_slice %65 {offsets = [0, 49], sizes = [1, 250], strides = [1, 1]} : vector<1x300xf32> to vector<1x250xf32>
    %116 = vector.extract_strided_slice %65 {offsets = [0, 50], sizes = [1, 250], strides = [1, 1]} : vector<1x300xf32> to vector<1x250xf32>
    %117 = tpu.concatenate %66, %67, %68, %69, %70, %71, %72, %73, %74, %75, %76, %77, %78, %79, %80, %81 in 0 : vector<1x250xf32>, vector<1x250xf32>, vector<1x250xf32>, vector<1x250xf32>, vector<1x250xf32>, vector<1x250xf32>, vector<1x250xf32>, vector<1x250xf32>, vector<1x250xf32>, vector<1x250xf32>, vector<1x250xf32>, vector<1x250xf32>, vector<1x250xf32>, vector<1x250xf32>, vector<1x250xf32>, vector<1x250xf32> -> vector<16x250xf32>
    %118 = tpu.concatenate %82, %83, %84, %85, %86, %87, %88, %89, %90, %91, %92, %93, %94, %95, %96, %97 in 0 : vector<1x250xf32>, vector<1x250xf32>, vector<1x250xf32>, vector<1x250xf32>, vector<1x250xf32>, vector<1x250xf32>, vector<1x250xf32>, vector<1x250xf32>, vector<1x250xf32>, vector<1x250xf32>, vector<1x250xf32>, vector<1x250xf32>, vector<1x250xf32>, vector<1x250xf32>, vector<1x250xf32>, vector<1x250xf32> -> vector<16x250xf32>
    %119 = tpu.concatenate %98, %99, %100, %101, %102, %103, %104, %105, %106, %107, %108, %109, %110, %111, %112, %113 in 0 : vector<1x250xf32>, vector<1x250xf32>, vector<1x250xf32>, vector<1x250xf32>, vector<1x250xf32>, vector<1x250xf32>, vector<1x250xf32>, vector<1x250xf32>, vector<1x250xf32>, vector<1x250xf32>, vector<1x250xf32>, vector<1x250xf32>, vector<1x250xf32>, vector<1x250xf32>, vector<1x250xf32>, vector<1x250xf32> -> vector<16x250xf32>
    %120 = tpu.concatenate %114, %115, %116 in 0 : vector<1x250xf32>, vector<1x250xf32>, vector<1x250xf32> -> vector<3x250xf32>
    %121 = tpu.concatenate %117, %118, %119, %120 in 0 : vector<16x250xf32>, vector<16x250xf32>, vector<16x250xf32>, vector<3x250xf32> -> vector<51x250xf32>
    %122 = tpu.concatenate %63, %121 in 1 : vector<51x250xf32>, vector<51x250xf32> -> vector<51x500xf32>
    %cst_9 = arith.constant dense<0.000000e+00> : vector<5x500xf32>
    %123 = tpu.matmul %1, %122, %cst_9 {dimension_numbers = #tpu.dot_dimension_numbers<[1], [0], [0], [1], [0, 0, 1, 1], [], []>} : vector<5x51xf32>, vector<51x500xf32>, vector<5x500xf32> -> vector<5x500xf32>
    %124 = vector.broadcast %2 : vector<5x1xf32> to vector<5x500xf32>
    %125 = arith.addf %123, %124 : vector<5x500xf32>
    %cst_10 = arith.constant dense<0.000000e+00> : vector<5xf32>
    %126 = vector.multi_reduction <add>, %125, %cst_10 [1] : vector<5x500xf32> to vector<5xf32>
    %127 = vector.shape_cast %126 : vector<5xf32> to vector<5x1xf32>
    %cst_11 = arith.constant 5.000000e+02 : f32
    %128 = vector.broadcast %cst_11 : f32 to vector<5x1xf32>
    %129 = arith.divf %127, %128 : vector<5x1xf32>
    %130 = vector.broadcast %129 : vector<5x1xf32> to vector<5x500xf32>
    %131 = arith.subf %125, %130 : vector<5x500xf32>
    %132 = arith.mulf %131, %131 : vector<5x500xf32>
    %cst_12 = arith.constant dense<0.000000e+00> : vector<5xf32>
    %133 = vector.multi_reduction <add>, %132, %cst_12 [1] : vector<5x500xf32> to vector<5xf32>
    %134 = vector.shape_cast %133 : vector<5xf32> to vector<5x1xf32>
    %cst_13 = arith.constant 5.000000e+02 : f32
    %135 = vector.broadcast %cst_13 : f32 to vector<5x1xf32>
    %136 = arith.divf %134, %135 : vector<5x1xf32>
    %137 = vector.broadcast %129 : vector<5x1xf32> to vector<5x500xf32>
    %138 = arith.subf %125, %137 : vector<5x500xf32>
    %cst_14 = arith.constant 9.99999974E-6 : f32
    %139 = vector.broadcast %cst_14 : f32 to vector<5x1xf32>
    %140 = arith.addf %136, %139 : vector<5x1xf32>
    %141 = math.rsqrt %140 : vector<5x1xf32>
    %142 = vector.broadcast %141 : vector<5x1xf32> to vector<5x500xf32>
    %143 = arith.mulf %138, %142 : vector<5x500xf32>
    %144 = vector.broadcast %3 : vector<5x1xf32> to vector<5x500xf32>
    %145 = arith.mulf %143, %144 : vector<5x500xf32>
    %146 = vector.broadcast %4 : vector<5x1xf32> to vector<5x500xf32>
    %147 = arith.addf %145, %146 : vector<5x500xf32>
    %cst_15 = arith.constant 0.000000e+00 : f32
    %148 = vector.broadcast %cst_15 : f32 to vector<5x500xf32>
    %149 = arith.cmpf oge, %147, %148 : vector<5x500xf32>
    %cst_16 = arith.constant 0.00999999977 : f32
    %150 = vector.broadcast %cst_16 : f32 to vector<5x500xf32>
    %151 = arith.mulf %150, %147 : vector<5x500xf32>
    %152 = arith.select %149, %147, %151 : vector<5x500xi1>, vector<5x500xf32>
    %c0_17 = arith.constant 0 : index
    %c0_18 = arith.constant 0 : index
    %153 = vector.load %arg13[%c0_17, %c0_18] : memref<499x250xf32, #tpu.memory_space<vmem>>, vector<499x250xf32>
    %154 = vector.extract_strided_slice %152 {offsets = [0, 0], sizes = [5, 499], strides = [1, 1]} : vector<5x500xf32> to vector<5x499xf32>
    %155 = vector.extract_strided_slice %152 {offsets = [0, 1], sizes = [5, 499], strides = [1, 1]} : vector<5x500xf32> to vector<5x499xf32>
    %156 = arith.maximumf %154, %155 : vector<5x499xf32>
    %cst_19 = arith.constant dense<0.000000e+00> : vector<5x250xf32>
    %157 = tpu.matmul %156, %153, %cst_19 {dimension_numbers = #tpu.dot_dimension_numbers<[1], [0], [0], [1], [0, 0, 1, 1], [], []>, precision = #tpu.contract_precision<fp32>} : vector<5x499xf32>, vector<499x250xf32>, vector<5x250xf32> -> vector<5x250xf32>
    %c0_20 = arith.constant 0 : index
    %c0_21 = arith.constant 0 : index
    %158 = vector.load %arg5[%c0_20, %c0_21] : memref<10x25xf32, #tpu.memory_space<vmem>>, vector<10x25xf32>
    %c0_22 = arith.constant 0 : index
    %c0_23 = arith.constant 0 : index
    %159 = vector.load %arg6[%c0_22, %c0_23] : memref<10x1xf32, #tpu.memory_space<vmem>>, vector<10x1xf32>
    %c0_24 = arith.constant 0 : index
    %c0_25 = arith.constant 0 : index
    %160 = vector.load %arg7[%c0_24, %c0_25] : memref<10x1xf32, #tpu.memory_space<vmem>>, vector<10x1xf32>
    %c0_26 = arith.constant 0 : index
    %c0_27 = arith.constant 0 : index
    %161 = vector.load %arg8[%c0_26, %c0_27] : memref<10x1xf32, #tpu.memory_space<vmem>>, vector<10x1xf32>
    %cst_28 = arith.constant 0.000000e+00 : f32
    %162 = vector.broadcast %cst_28 : f32 to vector<5x2xf32>
    %163 = vector.extract_strided_slice %157 {offsets = [0, 0], sizes = [5, 125], strides = [1, 1]} : vector<5x250xf32> to vector<5x125xf32>
    %164 = tpu.concatenate %162, %163, %162 in 1 : vector<5x2xf32>, vector<5x125xf32>, vector<5x2xf32> -> vector<5x129xf32>
    %165 = vector.extract_strided_slice %164 {offsets = [0, 0], sizes = [5, 125], strides = [1, 1]} : vector<5x129xf32> to vector<5x125xf32>
    %166 = vector.extract_strided_slice %164 {offsets = [0, 1], sizes = [5, 125], strides = [1, 1]} : vector<5x129xf32> to vector<5x125xf32>
    %167 = vector.extract_strided_slice %164 {offsets = [0, 2], sizes = [5, 125], strides = [1, 1]} : vector<5x129xf32> to vector<5x125xf32>
    %168 = vector.extract_strided_slice %164 {offsets = [0, 3], sizes = [5, 125], strides = [1, 1]} : vector<5x129xf32> to vector<5x125xf32>
    %169 = vector.extract_strided_slice %164 {offsets = [0, 4], sizes = [5, 125], strides = [1, 1]} : vector<5x129xf32> to vector<5x125xf32>
    %170 = tpu.concatenate %165, %166, %167, %168, %169 in 0 : vector<5x125xf32>, vector<5x125xf32>, vector<5x125xf32>, vector<5x125xf32>, vector<5x125xf32> -> vector<25x125xf32>
    %171 = vector.extract_strided_slice %157 {offsets = [0, 125], sizes = [5, 125], strides = [1, 1]} : vector<5x250xf32> to vector<5x125xf32>
    %172 = tpu.concatenate %162, %171, %162 in 1 : vector<5x2xf32>, vector<5x125xf32>, vector<5x2xf32> -> vector<5x129xf32>
    %173 = vector.extract_strided_slice %172 {offsets = [0, 0], sizes = [5, 125], strides = [1, 1]} : vector<5x129xf32> to vector<5x125xf32>
    %174 = vector.extract_strided_slice %172 {offsets = [0, 1], sizes = [5, 125], strides = [1, 1]} : vector<5x129xf32> to vector<5x125xf32>
    %175 = vector.extract_strided_slice %172 {offsets = [0, 2], sizes = [5, 125], strides = [1, 1]} : vector<5x129xf32> to vector<5x125xf32>
    %176 = vector.extract_strided_slice %172 {offsets = [0, 3], sizes = [5, 125], strides = [1, 1]} : vector<5x129xf32> to vector<5x125xf32>
    %177 = vector.extract_strided_slice %172 {offsets = [0, 4], sizes = [5, 125], strides = [1, 1]} : vector<5x129xf32> to vector<5x125xf32>
    %178 = tpu.concatenate %173, %174, %175, %176, %177 in 0 : vector<5x125xf32>, vector<5x125xf32>, vector<5x125xf32>, vector<5x125xf32>, vector<5x125xf32> -> vector<25x125xf32>
    %179 = tpu.concatenate %170, %178 in 1 : vector<25x125xf32>, vector<25x125xf32> -> vector<25x250xf32>
    %cst_29 = arith.constant dense<0.000000e+00> : vector<10x250xf32>
    %180 = tpu.matmul %158, %179, %cst_29 {dimension_numbers = #tpu.dot_dimension_numbers<[1], [0], [0], [1], [0, 0, 1, 1], [], []>} : vector<10x25xf32>, vector<25x250xf32>, vector<10x250xf32> -> vector<10x250xf32>
    %181 = vector.broadcast %159 : vector<10x1xf32> to vector<10x250xf32>
    %182 = arith.addf %180, %181 : vector<10x250xf32>
    %cst_30 = arith.constant dense<0.000000e+00> : vector<10xf32>
    %183 = vector.multi_reduction <add>, %182, %cst_30 [1] : vector<10x250xf32> to vector<10xf32>
    %184 = vector.shape_cast %183 : vector<10xf32> to vector<10x1xf32>
    %cst_31 = arith.constant 2.500000e+02 : f32
    %185 = vector.broadcast %cst_31 : f32 to vector<10x1xf32>
    %186 = arith.divf %184, %185 : vector<10x1xf32>
    %187 = vector.broadcast %186 : vector<10x1xf32> to vector<10x250xf32>
    %188 = arith.subf %182, %187 : vector<10x250xf32>
    %189 = arith.mulf %188, %188 : vector<10x250xf32>
    %cst_32 = arith.constant dense<0.000000e+00> : vector<10xf32>
    %190 = vector.multi_reduction <add>, %189, %cst_32 [1] : vector<10x250xf32> to vector<10xf32>
    %191 = vector.shape_cast %190 : vector<10xf32> to vector<10x1xf32>
    %cst_33 = arith.constant 2.500000e+02 : f32
    %192 = vector.broadcast %cst_33 : f32 to vector<10x1xf32>
    %193 = arith.divf %191, %192 : vector<10x1xf32>
    %194 = vector.broadcast %186 : vector<10x1xf32> to vector<10x250xf32>
    %195 = arith.subf %182, %194 : vector<10x250xf32>
    %cst_34 = arith.constant 9.99999974E-6 : f32
    %196 = vector.broadcast %cst_34 : f32 to vector<10x1xf32>
    %197 = arith.addf %193, %196 : vector<10x1xf32>
    %198 = math.rsqrt %197 : vector<10x1xf32>
    %199 = vector.broadcast %198 : vector<10x1xf32> to vector<10x250xf32>
    %200 = arith.mulf %195, %199 : vector<10x250xf32>
    %201 = vector.broadcast %160 : vector<10x1xf32> to vector<10x250xf32>
    %202 = arith.mulf %200, %201 : vector<10x250xf32>
    %203 = vector.broadcast %161 : vector<10x1xf32> to vector<10x250xf32>
    %204 = arith.addf %202, %203 : vector<10x250xf32>
    %cst_35 = arith.constant 0.000000e+00 : f32
    %205 = vector.broadcast %cst_35 : f32 to vector<10x250xf32>
    %206 = arith.cmpf oge, %204, %205 : vector<10x250xf32>
    %cst_36 = arith.constant 0.00999999977 : f32
    %207 = vector.broadcast %cst_36 : f32 to vector<10x250xf32>
    %208 = arith.mulf %207, %204 : vector<10x250xf32>
    %209 = arith.select %206, %204, %208 : vector<10x250xi1>, vector<10x250xf32>
    %c0_37 = arith.constant 0 : index
    %c0_38 = arith.constant 0 : index
    %210 = vector.load %arg14[%c0_37, %c0_38] : memref<249x124xf32, #tpu.memory_space<vmem>>, vector<249x124xf32>
    %211 = vector.extract_strided_slice %209 {offsets = [0, 0], sizes = [10, 249], strides = [1, 1]} : vector<10x250xf32> to vector<10x249xf32>
    %212 = vector.extract_strided_slice %209 {offsets = [0, 1], sizes = [10, 249], strides = [1, 1]} : vector<10x250xf32> to vector<10x249xf32>
    %213 = arith.maximumf %211, %212 : vector<10x249xf32>
    %cst_39 = arith.constant dense<0.000000e+00> : vector<10x124xf32>
    %214 = tpu.matmul %213, %210, %cst_39 {dimension_numbers = #tpu.dot_dimension_numbers<[1], [0], [0], [1], [0, 0, 1, 1], [], []>, precision = #tpu.contract_precision<fp32>} : vector<10x249xf32>, vector<249x124xf32>, vector<10x124xf32> -> vector<10x124xf32>
    %c0_40 = arith.constant 0 : index
    %c0_41 = arith.constant 0 : index
    %215 = vector.load %arg9[%c0_40, %c0_41] : memref<15x110xf32, #tpu.memory_space<vmem>>, vector<15x110xf32>
    %c0_42 = arith.constant 0 : index
    %c0_43 = arith.constant 0 : index
    %216 = vector.load %arg10[%c0_42, %c0_43] : memref<15x1xf32, #tpu.memory_space<vmem>>, vector<15x1xf32>
    %c0_44 = arith.constant 0 : index
    %c0_45 = arith.constant 0 : index
    %217 = vector.load %arg11[%c0_44, %c0_45] : memref<15x1xf32, #tpu.memory_space<vmem>>, vector<15x1xf32>
    %c0_46 = arith.constant 0 : index
    %c0_47 = arith.constant 0 : index
    %218 = vector.load %arg12[%c0_46, %c0_47] : memref<15x1xf32, #tpu.memory_space<vmem>>, vector<15x1xf32>
    %cst_48 = arith.constant 0.000000e+00 : f32
    %219 = vector.broadcast %cst_48 : f32 to vector<10x5xf32>
    %220 = vector.extract_strided_slice %214 {offsets = [0, 0], sizes = [10, 62], strides = [1, 1]} : vector<10x124xf32> to vector<10x62xf32>
    %221 = tpu.concatenate %219, %220, %219 in 1 : vector<10x5xf32>, vector<10x62xf32>, vector<10x5xf32> -> vector<10x72xf32>
    %222 = vector.extract_strided_slice %221 {offsets = [0, 0], sizes = [10, 62], strides = [1, 1]} : vector<10x72xf32> to vector<10x62xf32>
    %223 = vector.extract_strided_slice %221 {offsets = [0, 1], sizes = [10, 62], strides = [1, 1]} : vector<10x72xf32> to vector<10x62xf32>
    %224 = vector.extract_strided_slice %221 {offsets = [0, 2], sizes = [10, 62], strides = [1, 1]} : vector<10x72xf32> to vector<10x62xf32>
    %225 = vector.extract_strided_slice %221 {offsets = [0, 3], sizes = [10, 62], strides = [1, 1]} : vector<10x72xf32> to vector<10x62xf32>
    %226 = vector.extract_strided_slice %221 {offsets = [0, 4], sizes = [10, 62], strides = [1, 1]} : vector<10x72xf32> to vector<10x62xf32>
    %227 = vector.extract_strided_slice %221 {offsets = [0, 5], sizes = [10, 62], strides = [1, 1]} : vector<10x72xf32> to vector<10x62xf32>
    %228 = vector.extract_strided_slice %221 {offsets = [0, 6], sizes = [10, 62], strides = [1, 1]} : vector<10x72xf32> to vector<10x62xf32>
    %229 = vector.extract_strided_slice %221 {offsets = [0, 7], sizes = [10, 62], strides = [1, 1]} : vector<10x72xf32> to vector<10x62xf32>
    %230 = vector.extract_strided_slice %221 {offsets = [0, 8], sizes = [10, 62], strides = [1, 1]} : vector<10x72xf32> to vector<10x62xf32>
    %231 = vector.extract_strided_slice %221 {offsets = [0, 9], sizes = [10, 62], strides = [1, 1]} : vector<10x72xf32> to vector<10x62xf32>
    %232 = vector.extract_strided_slice %221 {offsets = [0, 10], sizes = [10, 62], strides = [1, 1]} : vector<10x72xf32> to vector<10x62xf32>
    %233 = tpu.concatenate %222, %223, %224, %225, %226, %227, %228, %229, %230, %231, %232 in 0 : vector<10x62xf32>, vector<10x62xf32>, vector<10x62xf32>, vector<10x62xf32>, vector<10x62xf32>, vector<10x62xf32>, vector<10x62xf32>, vector<10x62xf32>, vector<10x62xf32>, vector<10x62xf32>, vector<10x62xf32> -> vector<110x62xf32>
    %234 = vector.extract_strided_slice %214 {offsets = [0, 62], sizes = [10, 62], strides = [1, 1]} : vector<10x124xf32> to vector<10x62xf32>
    %235 = tpu.concatenate %219, %234, %219 in 1 : vector<10x5xf32>, vector<10x62xf32>, vector<10x5xf32> -> vector<10x72xf32>
    %236 = vector.extract_strided_slice %235 {offsets = [0, 0], sizes = [10, 62], strides = [1, 1]} : vector<10x72xf32> to vector<10x62xf32>
    %237 = vector.extract_strided_slice %235 {offsets = [0, 1], sizes = [10, 62], strides = [1, 1]} : vector<10x72xf32> to vector<10x62xf32>
    %238 = vector.extract_strided_slice %235 {offsets = [0, 2], sizes = [10, 62], strides = [1, 1]} : vector<10x72xf32> to vector<10x62xf32>
    %239 = vector.extract_strided_slice %235 {offsets = [0, 3], sizes = [10, 62], strides = [1, 1]} : vector<10x72xf32> to vector<10x62xf32>
    %240 = vector.extract_strided_slice %235 {offsets = [0, 4], sizes = [10, 62], strides = [1, 1]} : vector<10x72xf32> to vector<10x62xf32>
    %241 = vector.extract_strided_slice %235 {offsets = [0, 5], sizes = [10, 62], strides = [1, 1]} : vector<10x72xf32> to vector<10x62xf32>
    %242 = vector.extract_strided_slice %235 {offsets = [0, 6], sizes = [10, 62], strides = [1, 1]} : vector<10x72xf32> to vector<10x62xf32>
    %243 = vector.extract_strided_slice %235 {offsets = [0, 7], sizes = [10, 62], strides = [1, 1]} : vector<10x72xf32> to vector<10x62xf32>
    %244 = vector.extract_strided_slice %235 {offsets = [0, 8], sizes = [10, 62], strides = [1, 1]} : vector<10x72xf32> to vector<10x62xf32>
    %245 = vector.extract_strided_slice %235 {offsets = [0, 9], sizes = [10, 62], strides = [1, 1]} : vector<10x72xf32> to vector<10x62xf32>
    %246 = vector.extract_strided_slice %235 {offsets = [0, 10], sizes = [10, 62], strides = [1, 1]} : vector<10x72xf32> to vector<10x62xf32>
    %247 = tpu.concatenate %236, %237, %238, %239, %240, %241, %242, %243, %244, %245, %246 in 0 : vector<10x62xf32>, vector<10x62xf32>, vector<10x62xf32>, vector<10x62xf32>, vector<10x62xf32>, vector<10x62xf32>, vector<10x62xf32>, vector<10x62xf32>, vector<10x62xf32>, vector<10x62xf32>, vector<10x62xf32> -> vector<110x62xf32>
    %248 = tpu.concatenate %233, %247 in 1 : vector<110x62xf32>, vector<110x62xf32> -> vector<110x124xf32>
    %cst_49 = arith.constant dense<0.000000e+00> : vector<15x124xf32>
    %249 = tpu.matmul %215, %248, %cst_49 {dimension_numbers = #tpu.dot_dimension_numbers<[1], [0], [0], [1], [0, 0, 1, 1], [], []>} : vector<15x110xf32>, vector<110x124xf32>, vector<15x124xf32> -> vector<15x124xf32>
    %250 = vector.broadcast %216 : vector<15x1xf32> to vector<15x124xf32>
    %251 = arith.addf %249, %250 : vector<15x124xf32>
    %cst_50 = arith.constant dense<0.000000e+00> : vector<15xf32>
    %252 = vector.multi_reduction <add>, %251, %cst_50 [1] : vector<15x124xf32> to vector<15xf32>
    %253 = vector.shape_cast %252 : vector<15xf32> to vector<15x1xf32>
    %cst_51 = arith.constant 1.240000e+02 : f32
    %254 = vector.broadcast %cst_51 : f32 to vector<15x1xf32>
    %255 = arith.divf %253, %254 : vector<15x1xf32>
    %256 = vector.broadcast %255 : vector<15x1xf32> to vector<15x124xf32>
    %257 = arith.subf %251, %256 : vector<15x124xf32>
    %258 = arith.mulf %257, %257 : vector<15x124xf32>
    %cst_52 = arith.constant dense<0.000000e+00> : vector<15xf32>
    %259 = vector.multi_reduction <add>, %258, %cst_52 [1] : vector<15x124xf32> to vector<15xf32>
    %260 = vector.shape_cast %259 : vector<15xf32> to vector<15x1xf32>
    %cst_53 = arith.constant 1.240000e+02 : f32
    %261 = vector.broadcast %cst_53 : f32 to vector<15x1xf32>
    %262 = arith.divf %260, %261 : vector<15x1xf32>
    %263 = vector.broadcast %255 : vector<15x1xf32> to vector<15x124xf32>
    %264 = arith.subf %251, %263 : vector<15x124xf32>
    %cst_54 = arith.constant 9.99999974E-6 : f32
    %265 = vector.broadcast %cst_54 : f32 to vector<15x1xf32>
    %266 = arith.addf %262, %265 : vector<15x1xf32>
    %267 = math.rsqrt %266 : vector<15x1xf32>
    %268 = vector.broadcast %267 : vector<15x1xf32> to vector<15x124xf32>
    %269 = arith.mulf %264, %268 : vector<15x124xf32>
    %270 = vector.broadcast %217 : vector<15x1xf32> to vector<15x124xf32>
    %271 = arith.mulf %269, %270 : vector<15x124xf32>
    %272 = vector.broadcast %218 : vector<15x1xf32> to vector<15x124xf32>
    %273 = arith.addf %271, %272 : vector<15x124xf32>
    %cst_55 = arith.constant 0.000000e+00 : f32
    %274 = vector.broadcast %cst_55 : f32 to vector<15x124xf32>
    %275 = arith.cmpf oge, %273, %274 : vector<15x124xf32>
    %cst_56 = arith.constant 0.00999999977 : f32
    %276 = vector.broadcast %cst_56 : f32 to vector<15x124xf32>
    %277 = arith.mulf %276, %273 : vector<15x124xf32>
    %278 = arith.select %275, %273, %277 : vector<15x124xi1>, vector<15x124xf32>
    %c0_57 = arith.constant 0 : index
    %c0_58 = arith.constant 0 : index
    %279 = vector.load %arg15[%c0_57, %c0_58] : memref<123x62xf32, #tpu.memory_space<vmem>>, vector<123x62xf32>
    %280 = vector.extract_strided_slice %278 {offsets = [0, 0], sizes = [15, 123], strides = [1, 1]} : vector<15x124xf32> to vector<15x123xf32>
    %281 = vector.extract_strided_slice %278 {offsets = [0, 1], sizes = [15, 123], strides = [1, 1]} : vector<15x124xf32> to vector<15x123xf32>
    %282 = arith.maximumf %280, %281 : vector<15x123xf32>
    %cst_59 = arith.constant dense<0.000000e+00> : vector<15x62xf32>
    %283 = tpu.matmul %282, %279, %cst_59 {dimension_numbers = #tpu.dot_dimension_numbers<[1], [0], [0], [1], [0, 0, 1, 1], [], []>, precision = #tpu.contract_precision<fp32>} : vector<15x123xf32>, vector<123x62xf32>, vector<15x62xf32> -> vector<15x62xf32>
    %284 = vector.extract_strided_slice %283 {offsets = [0, 0], sizes = [15, 31], strides = [1, 1]} : vector<15x62xf32> to vector<15x31xf32>
    %285 = vector.extract_strided_slice %283 {offsets = [0, 31], sizes = [15, 31], strides = [1, 1]} : vector<15x62xf32> to vector<15x31xf32>
    %286 = tpu.concatenate %284, %285 in 0 : vector<15x31xf32>, vector<15x31xf32> -> vector<30x31xf32>
    %c0_60 = arith.constant 0 : index
    %c0_61 = arith.constant 0 : index
    %287 = vector.load %arg16[%c0_60, %c0_61] : memref<30x31xf32, #tpu.memory_space<vmem>>, vector<30x31xf32>
    tpu.vector_store %arg16[%c0_60, %c0_61], %286 {strides = array<i32>} : memref<30x31xf32, #tpu.memory_space<vmem>>, vector<30x31xf32>,
    return
  }
}

</mosaic_0001>

<llo_original>
// kernel: extractor_forward.1
$region0: #{extractor_forward.1}
  #allocation0 [shape = 'u32[]', space=smem, size = 0x4, offset = 0x4, fixed_abs, tag = 'smem constant byte address 0x4 - core index']
  #allocation1 [shape = 'u32[72,128]{1,0:T(1,128)}', space=vmem, size = 0x9000, scoped, tag = 'internal scratch']
  %s0 = inlined_call_operand.vmem [shape: f32[1,500], index: 0, kind: input, shape index: {}]
  %s1 = inlined_call_operand.vmem [shape: f32[5,51], index: 1, kind: input, shape index: {}]
  %s2 = inlined_call_operand.vmem [shape: f32[5,1], index: 2, kind: input, shape index: {}]
  %s3 = inlined_call_operand.vmem [shape: f32[5,1], index: 3, kind: input, shape index: {}]
  %s4 = inlined_call_operand.vmem [shape: f32[5,1], index: 4, kind: input, shape index: {}]
  %s5 = inlined_call_operand.vmem [shape: f32[10,25], index: 5, kind: input, shape index: {}]
  %s6 = inlined_call_operand.vmem [shape: f32[10,1], index: 6, kind: input, shape index: {}]
  %s7 = inlined_call_operand.vmem [shape: f32[10,1], index: 7, kind: input, shape index: {}]
  %s8 = inlined_call_operand.vmem [shape: f32[10,1], index: 8, kind: input, shape index: {}]
  %s9 = inlined_call_operand.vmem [shape: f32[15,110], index: 9, kind: input, shape index: {}]
  %s10 = inlined_call_operand.vmem [shape: f32[15,1], index: 10, kind: input, shape index: {}]
  %s11 = inlined_call_operand.vmem [shape: f32[15,1], index: 11, kind: input, shape index: {}]
  %s12 = inlined_call_operand.vmem [shape: f32[15,1], index: 12, kind: input, shape index: {}]
  %s13 = inlined_call_operand.vmem [shape: f32[499,250], index: 13, kind: input, shape index: {}]
  %s14 = inlined_call_operand.vmem [shape: f32[249,124], index: 14, kind: input, shape index: {}]
  %s15 = inlined_call_operand.vmem [shape: f32[123,62], index: 15, kind: input, shape index: {}]
  %s16 = inlined_call_operand.vmem [shape: f32[30,31], index: 16, kind: output, shape index: {}]
  %s17 = sld [smem:[#allocation0]]
  $region74: #{extractor_forward.1} parent=0
    _
  %s19 = ssub.s32 1, %s17
  %s20 = scalar_select 0, %s19, %s17
  // Predicated region
  $region2: #{extractor_forward.1} parent=0 // pred_check
    _
  $region3: #{extractor_forward.1} parent=0 // pred_check_branch
    %22 = sbr.rel (0) target = $region5
  $region4: #{extractor_forward.1} parent=0 // pred_region
    _
  $region5: #{extractor_forward.1} parent=0 // pred_fallthru
    _
  // Predicated region
  $region6: #{extractor_forward.1} parent=0 // pred_check
    _
  $region7: #{extractor_forward.1} parent=0 // pred_check_branch
    %24 = sbr.rel (0) target = $region9
  $region8: #{extractor_forward.1} parent=0 // pred_region
    _
  $region9: #{extractor_forward.1} parent=0 // pred_fallthru
    _
  // Predicated region
  $region10: #{extractor_forward.1} parent=0 // pred_check
    _
  $region11: #{extractor_forward.1} parent=0 // pred_check_branch
    %26 = sbr.rel (0) target = $region13
  $region12: #{extractor_forward.1} parent=0 // pred_region
    _
  $region13: #{extractor_forward.1} parent=0 // pred_fallthru
    _
  // Predicated region
  $region14: #{extractor_forward.1} parent=0 // pred_check
    _
  $region15: #{extractor_forward.1} parent=0 // pred_check_branch
    %28 = sbr.rel (0) target = $region17
  $region16: #{extractor_forward.1} parent=0 // pred_region
    _
  $region17: #{extractor_forward.1} parent=0 // pred_fallthru
    _
  // Predicated region
  $region18: #{extractor_forward.1} parent=0 // pred_check
    _
  $region19: #{extractor_forward.1} parent=0 // pred_check_branch
    %30 = sbr.rel (0) target = $region21
  $region20: #{extractor_forward.1} parent=0 // pred_region
    _
  $region21: #{extractor_forward.1} parent=0 // pred_fallthru
    _
  // Predicated region
  $region22: #{extractor_forward.1} parent=0 // pred_check
    _
  $region23: #{extractor_forward.1} parent=0 // pred_check_branch
    %32 = sbr.rel (0) target = $region25
  $region24: #{extractor_forward.1} parent=0 // pred_region
    _
  $region25: #{extractor_forward.1} parent=0 // pred_fallthru
    _
  // Predicated region
  $region26: #{extractor_forward.1} parent=0 // pred_check
    _
  $region27: #{extractor_forward.1} parent=0 // pred_check_branch
    %34 = sbr.rel (0) target = $region29
  $region28: #{extractor_forward.1} parent=0 // pred_region
    _
  $region29: #{extractor_forward.1} parent=0 // pred_fallthru
    _
  // Predicated region
  $region30: #{extractor_forward.1} parent=0 // pred_check
    _
  $region31: #{extractor_forward.1} parent=0 // pred_check_branch
    %36 = sbr.rel (0) target = $region33
  $region32: #{extractor_forward.1} parent=0 // pred_region
    _
  $region33: #{extractor_forward.1} parent=0 // pred_fallthru
    _
  // Predicated region
  $region34: #{extractor_forward.1} parent=0 // pred_check
    _
  $region35: #{extractor_forward.1} parent=0 // pred_check_branch
    %38 = sbr.rel (0) target = $region37
  $region36: #{extractor_forward.1} parent=0 // pred_region
    _
  $region37: #{extractor_forward.1} parent=0 // pred_fallthru
    _
  // Predicated region
  $region38: #{extractor_forward.1} parent=0 // pred_check
    _
  $region39: #{extractor_forward.1} parent=0 // pred_check_branch
    %40 = sbr.rel (0) target = $region41
  $region40: #{extractor_forward.1} parent=0 // pred_region
    _
  $region41: #{extractor_forward.1} parent=0 // pred_fallthru
    _
  // Predicated region
  $region42: #{extractor_forward.1} parent=0 // pred_check
    _
  $region43: #{extractor_forward.1} parent=0 // pred_check_branch
    %42 = sbr.rel (0) target = $region45
  $region44: #{extractor_forward.1} parent=0 // pred_region
    _
  $region45: #{extractor_forward.1} parent=0 // pred_fallthru
    _
  // Predicated region
  $region46: #{extractor_forward.1} parent=0 // pred_check
    _
  $region47: #{extractor_forward.1} parent=0 // pred_check_branch
    %44 = sbr.rel (0) target = $region49
  $region48: #{extractor_forward.1} parent=0 // pred_region
    _
  $region49: #{extractor_forward.1} parent=0 // pred_fallthru
    _
  // Predicated region
  $region50: #{extractor_forward.1} parent=0 // pred_check
    _
  $region51: #{extractor_forward.1} parent=0 // pred_check_branch
    %46 = sbr.rel (0) target = $region53
  $region52: #{extractor_forward.1} parent=0 // pred_region
    _
  $region53: #{extractor_forward.1} parent=0 // pred_fallthru
    _
  // Predicated region
  $region54: #{extractor_forward.1} parent=0 // pred_check
    _
  $region55: #{extractor_forward.1} parent=0 // pred_check_branch
    %48 = sbr.rel (0) target = $region57
  $region56: #{extractor_forward.1} parent=0 // pred_region
    _
  $region57: #{extractor_forward.1} parent=0 // pred_fallthru
    _
  // Predicated region
  $region58: #{extractor_forward.1} parent=0 // pred_check
    _
  $region59: #{extractor_forward.1} parent=0 // pred_check_branch
    %50 = sbr.rel (0) target = $region61
  $region60: #{extractor_forward.1} parent=0 // pred_region
    _
  $region61: #{extractor_forward.1} parent=0 // pred_fallthru
    _
  // Predicated region
  $region62: #{extractor_forward.1} parent=0 // pred_check
    _
  $region63: #{extractor_forward.1} parent=0 // pred_check_branch
    %52 = sbr.rel (0) target = $region65
  $region64: #{extractor_forward.1} parent=0 // pred_region
    _
  $region65: #{extractor_forward.1} parent=0 // pred_fallthru
    _
  %v53 = vld [vmem:[%s0] sm:$0xf]
  %v54 = vld [vmem:[%s1] sm:$0x1f]
  %v55 = vld [vmem:[%s2] sm:$0x1f]
  %v56 = vld [vmem:[%s3] sm:$0x1f]
  %v57 = vld [vmem:[%s4] sm:$0x1f]
  %v59 = vperm.slane %v53, 0
  %v60 = vperm.slane %v53, 1
  %61 = vrot.lane.b32.xlu0 %v59, 25
  %v62 = vpop.permute.xlu0 %61
  %63 = vrot.lane.b32.xlu0 %v60, 25
  %v64 = vpop.permute.xlu0 %63
  %vm65 = vcmask 203776
  %v66 = vsel %vm65, %v62, %v64
  %v70 = vsel %vm65, 0.0, %v62
  %vm71 = vcmask 154624
  %v72 = vsel %vm71, %v64, 0.0
  %v74 = vrot.slane %v70, 7
  %v75 = vrot.slane %v66, 7
  %76 = vrot.lane.b32.xlu0 %v74, 127
  %v77 = vpop.permute.xlu0 %76
  %78 = vrot.lane.b32.xlu0 %v75, 127
  %v79 = vpop.permute.xlu0 %78
  %vm80 = vcmask 1039360
  %v81 = vsel %vm80, %v77, %v79
  %v84 = vrot.slane %v70, 6
  %v85 = vrot.slane %v66, 6
  %86 = vrot.lane.b32.xlu0 %v84, 126
  %v87 = vpop.permute.xlu0 %86
  %88 = vrot.lane.b32.xlu0 %v85, 126
  %v89 = vpop.permute.xlu0 %88
  %vm90 = vcmask 1031168
  %v91 = vsel %vm90, %v87, %v89
  %v94 = vrot.slane %v70, 5
  %v95 = vrot.slane %v66, 5
  %96 = vrot.lane.b32.xlu0 %v94, 125
  %v97 = vpop.permute.xlu0 %96
  %98 = vrot.lane.b32.xlu0 %v95, 125
  %v99 = vpop.permute.xlu0 %98
  %vm100 = vcmask 1022976
  %v101 = vsel %vm100, %v97, %v99
  %v104 = vrot.slane %v70, 4
  %v105 = vrot.slane %v66, 4
  %106 = vrot.lane.b32.xlu0 %v104, 124
  %v107 = vpop.permute.xlu0 %106
  %108 = vrot.lane.b32.xlu0 %v105, 124
  %v109 = vpop.permute.xlu0 %108
  %vm110 = vcmask 1014784
  %v111 = vsel %vm110, %v107, %v109
  %v114 = vrot.slane %v70, 3
  %v115 = vrot.slane %v66, 3
  %116 = vrot.lane.b32.xlu0 %v114, 123
  %v117 = vpop.permute.xlu0 %116
  %118 = vrot.lane.b32.xlu0 %v115, 123
  %v119 = vpop.permute.xlu0 %118
  %vm120 = vcmask 1006592
  %v121 = vsel %vm120, %v117, %v119
  %v124 = vrot.slane %v70, 2
  %v125 = vrot.slane %v66, 2
  %126 = vrot.lane.b32.xlu0 %v124, 122
  %v127 = vpop.permute.xlu0 %126
  %128 = vrot.lane.b32.xlu0 %v125, 122
  %v129 = vpop.permute.xlu0 %128
  %vm130 = vcmask 998400
  %v131 = vsel %vm130, %v127, %v129
  %v135 = vrot.slane %v70, 1
  %v136 = vrot.slane %v66, 1
  %v137 = vrot.slane %v72, 1
  %138 = vrot.lane.b32.xlu0 %v135, 121
  %v139 = vpop.permute.xlu0 %138
  %140 = vrot.lane.b32.xlu0 %v136, 121
  %v141 = vpop.permute.xlu0 %140
  %142 = vrot.lane.b32.xlu0 %v137, 121
  %v143 = vpop.permute.xlu0 %142
  %vm144 = vcmask 990208
  %v145 = vsel %vm144, %v139, %v141
  %v146 = vsel %vm144, %v141, %v143
  %149 = vrot.lane.b32.xlu0 %v70, 120
  %v150 = vpop.permute.xlu0 %149
  %151 = vrot.lane.b32.xlu0 %v66, 120
  %v152 = vpop.permute.xlu0 %151
  %153 = vrot.lane.b32.xlu0 %v72, 120
  %v154 = vpop.permute.xlu0 %153
  %vm155 = vcmask 982016
  %v156 = vsel %vm155, %v150, %v152
  %v157 = vsel %vm155, %v152, %v154
  %v160 = vrot.slane %v72, 7
  %161 = vrot.lane.b32.xlu0 %v74, 119
  %v162 = vpop.permute.xlu0 %161
  %163 = vrot.lane.b32.xlu0 %v75, 119
  %v164 = vpop.permute.xlu0 %163
  %165 = vrot.lane.b32.xlu0 %v160, 119
  %v166 = vpop.permute.xlu0 %165
  %vm167 = vcmask 973824
  %v168 = vsel %vm167, %v162, %v164
  %v169 = vsel %vm167, %v164, %v166
  %v172 = vrot.slane %v72, 6
  %173 = vrot.lane.b32.xlu0 %v84, 118
  %v174 = vpop.permute.xlu0 %173
  %175 = vrot.lane.b32.xlu0 %v85, 118
  %v176 = vpop.permute.xlu0 %175
  %177 = vrot.lane.b32.xlu0 %v172, 118
  %v178 = vpop.permute.xlu0 %177
  %vm179 = vcmask 965632
  %v180 = vsel %vm179, %v174, %v176
  %v181 = vsel %vm179, %v176, %v178
  %v184 = vrot.slane %v72, 5
  %185 = vrot.lane.b32.xlu0 %v94, 117
  %v186 = vpop.permute.xlu0 %185
  %187 = vrot.lane.b32.xlu0 %v95, 117
  %v188 = vpop.permute.xlu0 %187
  %189 = vrot.lane.b32.xlu0 %v184, 117
  %v190 = vpop.permute.xlu0 %189
  %vm191 = vcmask 957440
  %v192 = vsel %vm191, %v186, %v188
  %v193 = vsel %vm191, %v188, %v190
  %v196 = vrot.slane %v72, 4
  %197 = vrot.lane.b32.xlu0 %v104, 116
  %v198 = vpop.permute.xlu0 %197
  %199 = vrot.lane.b32.xlu0 %v105, 116
  %v200 = vpop.permute.xlu0 %199
  %201 = vrot.lane.b32.xlu0 %v196, 116
  %v202 = vpop.permute.xlu0 %201
  %vm203 = vcmask 949248
  %v204 = vsel %vm203, %v198, %v200
  %v205 = vsel %vm203, %v200, %v202
  %v208 = vrot.slane %v72, 3
  %209 = vrot.lane.b32.xlu0 %v114, 115
  %v210 = vpop.permute.xlu0 %209
  %211 = vrot.lane.b32.xlu0 %v115, 115
  %v212 = vpop.permute.xlu0 %211
  %213 = vrot.lane.b32.xlu0 %v208, 115
  %v214 = vpop.permute.xlu0 %213
  %vm215 = vcmask 941056
  %v216 = vsel %vm215, %v210, %v212
  %v217 = vsel %vm215, %v212, %v214
  %v220 = vrot.slane %v72, 2
  %221 = vrot.lane.b32.xlu0 %v124, 114
  %v222 = vpop.permute.xlu0 %221
  %223 = vrot.lane.b32.xlu0 %v125, 114
  %v224 = vpop.permute.xlu0 %223
  %225 = vrot.lane.b32.xlu0 %v220, 114
  %v226 = vpop.permute.xlu0 %225
  %vm227 = vcmask 932864
  %v228 = vsel %vm227, %v222, %v224
  %v229 = vsel %vm227, %v224, %v226
  %232 = vrot.lane.b32.xlu0 %v135, 113
  %v233 = vpop.permute.xlu0 %232
  %234 = vrot.lane.b32.xlu0 %v136, 113
  %v235 = vpop.permute.xlu0 %234
  %236 = vrot.lane.b32.xlu0 %v137, 113
  %v237 = vpop.permute.xlu0 %236
  %vm238 = vcmask 924672
  %v239 = vsel %vm238, %v233, %v235
  %v240 = vsel %vm238, %v235, %v237
  %vm243 = vcmask 1040384
  %v244 = vsel %vm243, %v70, %v81
  %v245 = vsel %vm243, %v66, %v79
  %vm246 = vcmask 1041408
  %v247 = vsel %vm246, %v244, %v91
  %v248 = vsel %vm246, %v245, %v89
  %vm249 = vcmask 1042432
  %v250 = vsel %vm249, %v247, %v101
  %v251 = vsel %vm249, %v248, %v99
  %vm252 = vcmask 1043456
  %v253 = vsel %vm252, %v250, %v111
  %v254 = vsel %vm252, %v251, %v109
  %vm255 = vcmask 1044480
  %v256 = vsel %vm255, %v253, %v121
  %v257 = vsel %vm255, %v254, %v119
  %vm258 = vcmask 1045504
  %v259 = vsel %vm258, %v256, %v131
  %v260 = vsel %vm258, %v257, %v129
  %vm261 = vcmask 1046528
  %v262 = vsel %vm261, %v259, %v145
  %v263 = vsel %vm261, %v260, %v146
  %v264 = vsel %vm243, %v156, %v168
  %v265 = vsel %vm243, %v157, %v169
  %v266 = vsel %vm246, %v264, %v180
  %v267 = vsel %vm246, %v265, %v181
  %v268 = vsel %vm249, %v266, %v192
  %v269 = vsel %vm249, %v267, %v193
  %v270 = vsel %vm252, %v268, %v204
  %v271 = vsel %vm252, %v269, %v205
  %v272 = vsel %vm255, %v270, %v216
  %v273 = vsel %vm255, %v271, %v217
  %v274 = vsel %vm258, %v272, %v228
  %v275 = vsel %vm258, %v273, %v229
  %v276 = vsel %vm261, %v274, %v239
  %v277 = vsel %vm261, %v275, %v240
  %278 = vrot.lane.b32.xlu0 %v160, 127
  %v279 = vpop.permute.xlu0 %278
  %v280 = vsel %vm80, %v79, %v279
  %283 = vrot.lane.b32.xlu0 %v172, 126
  %v284 = vpop.permute.xlu0 %283
  %v285 = vsel %vm90, %v89, %v284
  %288 = vrot.lane.b32.xlu0 %v184, 125
  %v289 = vpop.permute.xlu0 %288
  %v290 = vsel %vm100, %v99, %v289
  %293 = vrot.lane.b32.xlu0 %v196, 124
  %v294 = vpop.permute.xlu0 %293
  %v295 = vsel %vm110, %v109, %v294
  %298 = vrot.lane.b32.xlu0 %v208, 123
  %v299 = vpop.permute.xlu0 %298
  %v300 = vsel %vm120, %v119, %v299
  %303 = vrot.lane.b32.xlu0 %v220, 122
  %v304 = vpop.permute.xlu0 %303
  %v305 = vsel %vm130, %v129, %v304
  %v317 = vsel %vm243, %v66, %v280
  %v318 = vsel %vm243, %v72, %v279
  %v319 = vsel %vm246, %v317, %v285
  %v320 = vsel %vm246, %v318, %v284
  %v321 = vsel %vm249, %v319, %v290
  %v322 = vsel %vm249, %v320, %v289
  %v323 = vsel %vm252, %v321, %v295
  %v324 = vsel %vm252, %v322, %v294
  %v325 = vsel %vm255, %v323, %v300
  %v326 = vsel %vm255, %v324, %v299
  %v327 = vsel %vm258, %v325, %v305
  %v328 = vsel %vm258, %v326, %v304
  %v329 = vsel %vm261, %v327, %v146
  %v330 = vsel %vm261, %v328, %v143
  %v331 = vsel %vm243, %v154, %v166
  %v332 = vsel %vm246, %v331, %v178
  %v333 = vsel %vm249, %v332, %v190
  %v334 = vsel %vm252, %v333, %v202
  %v335 = vsel %vm255, %v334, %v214
  %v336 = vsel %vm258, %v335, %v226
  %v337 = vsel %vm261, %v336, %v237
  %344 = vrot.lane.b32.xlu0 %v262, 112
  %v345 = vpop.permute.xlu0 %344
  %346 = vrot.lane.b32.xlu0 %v329, 112
  %v347 = vpop.permute.xlu0 %346
  %348 = vrot.lane.b32.xlu0 %v330, 112
  %v349 = vpop.permute.xlu0 %348
  %350 = vrot.lane.b32.xlu0 %v276, 112
  %v351 = vpop.permute.xlu0 %350
  %352 = vrot.lane.b32.xlu0 %v277, 112
  %v353 = vpop.permute.xlu0 %352
  %354 = vrot.lane.b32.xlu0 %v337, 112
  %v355 = vpop.permute.xlu0 %354
  %vm356 = vcmask 916480
  %v357 = vsel %vm356, %v345, %v347
  %v358 = vsel %vm356, %v347, %v349
  %v359 = vsel %vm356, %v351, %v353
  %v360 = vsel %vm356, %v353, %v355
  %365 = vrot.lane.b32.xlu0 %v262, 96
  %v366 = vpop.permute.xlu0 %365
  %367 = vrot.lane.b32.xlu0 %v329, 96
  %v368 = vpop.permute.xlu0 %367
  %369 = vrot.lane.b32.xlu0 %v330, 96
  %v370 = vpop.permute.xlu0 %369
  %371 = vrot.lane.b32.xlu0 %v276, 96
  %v372 = vpop.permute.xlu0 %371
  %373 = vrot.lane.b32.xlu0 %v277, 96
  %v374 = vpop.permute.xlu0 %373
  %375 = vrot.lane.b32.xlu0 %v337, 96
  %v376 = vpop.permute.xlu0 %375
  %vm377 = vcmask 785408
  %v378 = vsel %vm377, %v366, %v368
  %v379 = vsel %vm377, %v368, %v370
  %v380 = vsel %vm377, %v372, %v374
  %v381 = vsel %vm377, %v374, %v376
  %389 = vrot.lane.b32.xlu0 %v247, 80
  %v390 = vpop.permute.xlu0 %389
  %391 = vrot.lane.b32.xlu0 %v319, 80
  %v392 = vpop.permute.xlu0 %391
  %393 = vrot.lane.b32.xlu0 %v320, 80
  %v394 = vpop.permute.xlu0 %393
  %vm395 = vcmask 654336
  %v396 = vsel %vm395, %v390, %v392
  %v397 = vsel %vm395, %v392, %v394
  %v399 = vperm.slane %v53, 2
  %v400 = vperm.slane %v53, 3
  %401 = vrot.lane.b32.xlu0 %v60, 31
  %v402 = vpop.permute.xlu0 %401
  %403 = vrot.lane.b32.xlu0 %v399, 31
  %v404 = vpop.permute.xlu0 %403
  %405 = vrot.lane.b32.xlu0 %v400, 31
  %v406 = vpop.permute.xlu0 %405
  %vm407 = vcmask 252928
  %v408 = vsel %vm407, %v402, %v404
  %v409 = vsel %vm407, %v404, %v406
  %v413 = vsel %vm65, 0.0, %v408
  %v414 = vsel %vm71, %v406, 0.0
  %v416 = vrot.slane %v413, 7
  %v417 = vrot.slane %v409, 7
  %418 = vrot.lane.b32.xlu0 %v416, 127
  %v419 = vpop.permute.xlu0 %418
  %420 = vrot.lane.b32.xlu0 %v417, 127
  %v421 = vpop.permute.xlu0 %420
  %v422 = vsel %vm80, %v419, %v421
  %v425 = vrot.slane %v413, 6
  %v426 = vrot.slane %v409, 6
  %427 = vrot.lane.b32.xlu0 %v425, 126
  %v428 = vpop.permute.xlu0 %427
  %429 = vrot.lane.b32.xlu0 %v426, 126
  %v430 = vpop.permute.xlu0 %429
  %v431 = vsel %vm90, %v428, %v430
  %v434 = vrot.slane %v413, 5
  %v435 = vrot.slane %v409, 5
  %436 = vrot.lane.b32.xlu0 %v434, 125
  %v437 = vpop.permute.xlu0 %436
  %438 = vrot.lane.b32.xlu0 %v435, 125
  %v439 = vpop.permute.xlu0 %438
  %v440 = vsel %vm100, %v437, %v439
  %v443 = vrot.slane %v413, 4
  %v444 = vrot.slane %v409, 4
  %445 = vrot.lane.b32.xlu0 %v443, 124
  %v446 = vpop.permute.xlu0 %445
  %447 = vrot.lane.b32.xlu0 %v444, 124
  %v448 = vpop.permute.xlu0 %447
  %v449 = vsel %vm110, %v446, %v448
  %v452 = vrot.slane %v413, 3
  %v453 = vrot.slane %v409, 3
  %454 = vrot.lane.b32.xlu0 %v452, 123
  %v455 = vpop.permute.xlu0 %454
  %456 = vrot.lane.b32.xlu0 %v453, 123
  %v457 = vpop.permute.xlu0 %456
  %v458 = vsel %vm120, %v455, %v457
  %v461 = vrot.slane %v413, 2
  %v462 = vrot.slane %v409, 2
  %463 = vrot.lane.b32.xlu0 %v461, 122
  %v464 = vpop.permute.xlu0 %463
  %465 = vrot.lane.b32.xlu0 %v462, 122
  %v466 = vpop.permute.xlu0 %465
  %v467 = vsel %vm130, %v464, %v466
  %v471 = vrot.slane %v413, 1
  %v472 = vrot.slane %v409, 1
  %v473 = vrot.slane %v414, 1
  %474 = vrot.lane.b32.xlu0 %v471, 121
  %v475 = vpop.permute.xlu0 %474
  %476 = vrot.lane.b32.xlu0 %v472, 121
  %v477 = vpop.permute.xlu0 %476
  %478 = vrot.lane.b32.xlu0 %v473, 121
  %v479 = vpop.permute.xlu0 %478
  %v480 = vsel %vm144, %v475, %v477
  %v481 = vsel %vm144, %v477, %v479
  %484 = vrot.lane.b32.xlu0 %v413, 120
  %v485 = vpop.permute.xlu0 %484
  %486 = vrot.lane.b32.xlu0 %v409, 120
  %v487 = vpop.permute.xlu0 %486
  %488 = vrot.lane.b32.xlu0 %v414, 120
  %v489 = vpop.permute.xlu0 %488
  %v490 = vsel %vm155, %v485, %v487
  %v491 = vsel %vm155, %v487, %v489
  %v494 = vrot.slane %v414, 7
  %495 = vrot.lane.b32.xlu0 %v416, 119
  %v496 = vpop.permute.xlu0 %495
  %497 = vrot.lane.b32.xlu0 %v417, 119
  %v498 = vpop.permute.xlu0 %497
  %499 = vrot.lane.b32.xlu0 %v494, 119
  %v500 = vpop.permute.xlu0 %499
  %v501 = vsel %vm167, %v496, %v498
  %v502 = vsel %vm167, %v498, %v500
  %v505 = vrot.slane %v414, 6
  %506 = vrot.lane.b32.xlu0 %v425, 118
  %v507 = vpop.permute.xlu0 %506
  %508 = vrot.lane.b32.xlu0 %v426, 118
  %v509 = vpop.permute.xlu0 %508
  %510 = vrot.lane.b32.xlu0 %v505, 118
  %v511 = vpop.permute.xlu0 %510
  %v512 = vsel %vm179, %v507, %v509
  %v513 = vsel %vm179, %v509, %v511
  %v516 = vrot.slane %v414, 5
  %517 = vrot.lane.b32.xlu0 %v434, 117
  %v518 = vpop.permute.xlu0 %517
  %519 = vrot.lane.b32.xlu0 %v435, 117
  %v520 = vpop.permute.xlu0 %519
  %521 = vrot.lane.b32.xlu0 %v516, 117
  %v522 = vpop.permute.xlu0 %521
  %v523 = vsel %vm191, %v518, %v520
  %v524 = vsel %vm191, %v520, %v522
  %v527 = vrot.slane %v414, 4
  %528 = vrot.lane.b32.xlu0 %v443, 116
  %v529 = vpop.permute.xlu0 %528
  %530 = vrot.lane.b32.xlu0 %v444, 116
  %v531 = vpop.permute.xlu0 %530
  %532 = vrot.lane.b32.xlu0 %v527, 116
  %v533 = vpop.permute.xlu0 %532
  %v534 = vsel %vm203, %v529, %v531
  %v535 = vsel %vm203, %v531, %v533
  %v538 = vrot.slane %v414, 3
  %539 = vrot.lane.b32.xlu0 %v452, 115
  %v540 = vpop.permute.xlu0 %539
  %541 = vrot.lane.b32.xlu0 %v453, 115
  %v542 = vpop.permute.xlu0 %541
  %543 = vrot.lane.b32.xlu0 %v538, 115
  %v544 = vpop.permute.xlu0 %543
  %v545 = vsel %vm215, %v540, %v542
  %v546 = vsel %vm215, %v542, %v544
  %v549 = vrot.slane %v414, 2
  %550 = vrot.lane.b32.xlu0 %v461, 114
  %v551 = vpop.permute.xlu0 %550
  %552 = vrot.lane.b32.xlu0 %v462, 114
  %v553 = vpop.permute.xlu0 %552
  %554 = vrot.lane.b32.xlu0 %v549, 114
  %v555 = vpop.permute.xlu0 %554
  %v556 = vsel %vm227, %v551, %v553
  %v557 = vsel %vm227, %v553, %v555
  %560 = vrot.lane.b32.xlu0 %v471, 113
  %v561 = vpop.permute.xlu0 %560
  %562 = vrot.lane.b32.xlu0 %v472, 113
  %v563 = vpop.permute.xlu0 %562
  %564 = vrot.lane.b32.xlu0 %v473, 113
  %v565 = vpop.permute.xlu0 %564
  %v566 = vsel %vm238, %v561, %v563
  %v567 = vsel %vm238, %v563, %v565
  %v570 = vsel %vm243, %v413, %v422
  %v571 = vsel %vm243, %v409, %v421
  %v572 = vsel %vm246, %v570, %v431
  %v573 = vsel %vm246, %v571, %v430
  %v574 = vsel %vm249, %v572, %v440
  %v575 = vsel %vm249, %v573, %v439
  %v576 = vsel %vm252, %v574, %v449
  %v577 = vsel %vm252, %v575, %v448
  %v578 = vsel %vm255, %v576, %v458
  %v579 = vsel %vm255, %v577, %v457
  %v580 = vsel %vm258, %v578, %v467
  %v581 = vsel %vm258, %v579, %v466
  %v582 = vsel %vm261, %v580, %v480
  %v583 = vsel %vm261, %v581, %v481
  %v584 = vsel %vm243, %v490, %v501
  %v585 = vsel %vm243, %v491, %v502
  %v586 = vsel %vm246, %v584, %v512
  %v587 = vsel %vm246, %v585, %v513
  %v588 = vsel %vm249, %v586, %v523
  %v589 = vsel %vm249, %v587, %v524
  %v590 = vsel %vm252, %v588, %v534
  %v591 = vsel %vm252, %v589, %v535
  %v592 = vsel %vm255, %v590, %v545
  %v593 = vsel %vm255, %v591, %v546
  %v594 = vsel %vm258, %v592, %v556
  %v595 = vsel %vm258, %v593, %v557
  %v596 = vsel %vm261, %v594, %v566
  %v597 = vsel %vm261, %v595, %v567
  %598 = vrot.lane.b32.xlu0 %v494, 127
  %v599 = vpop.permute.xlu0 %598
  %v600 = vsel %vm80, %v421, %v599
  %603 = vrot.lane.b32.xlu0 %v505, 126
  %v604 = vpop.permute.xlu0 %603
  %v605 = vsel %vm90, %v430, %v604
  %608 = vrot.lane.b32.xlu0 %v516, 125
  %v609 = vpop.permute.xlu0 %608
  %v610 = vsel %vm100, %v439, %v609
  %613 = vrot.lane.b32.xlu0 %v527, 124
  %v614 = vpop.permute.xlu0 %613
  %v615 = vsel %vm110, %v448, %v614
  %618 = vrot.lane.b32.xlu0 %v538, 123
  %v619 = vpop.permute.xlu0 %618
  %v620 = vsel %vm120, %v457, %v619
  %623 = vrot.lane.b32.xlu0 %v549, 122
  %v624 = vpop.permute.xlu0 %623
  %v625 = vsel %vm130, %v466, %v624
  %v637 = vsel %vm243, %v409, %v600
  %v638 = vsel %vm243, %v414, %v599
  %v639 = vsel %vm246, %v637, %v605
  %v640 = vsel %vm246, %v638, %v604
  %v641 = vsel %vm249, %v639, %v610
  %v642 = vsel %vm249, %v640, %v609
  %v643 = vsel %vm252, %v641, %v615
  %v644 = vsel %vm252, %v642, %v614
  %v645 = vsel %vm255, %v643, %v620
  %v646 = vsel %vm255, %v644, %v619
  %v647 = vsel %vm258, %v645, %v625
  %v648 = vsel %vm258, %v646, %v624
  %v649 = vsel %vm261, %v647, %v481
  %v650 = vsel %vm261, %v648, %v479
  %v651 = vsel %vm243, %v489, %v500
  %v652 = vsel %vm246, %v651, %v511
  %v653 = vsel %vm249, %v652, %v522
  %v654 = vsel %vm252, %v653, %v533
  %v655 = vsel %vm255, %v654, %v544
  %v656 = vsel %vm258, %v655, %v555
  %v657 = vsel %vm261, %v656, %v565
  %664 = vrot.lane.b32.xlu0 %v582, 112
  %v665 = vpop.permute.xlu0 %664
  %666 = vrot.lane.b32.xlu0 %v649, 112
  %v667 = vpop.permute.xlu0 %666
  %668 = vrot.lane.b32.xlu0 %v650, 112
  %v669 = vpop.permute.xlu0 %668
  %670 = vrot.lane.b32.xlu0 %v596, 112
  %v671 = vpop.permute.xlu0 %670
  %672 = vrot.lane.b32.xlu0 %v597, 112
  %v673 = vpop.permute.xlu0 %672
  %674 = vrot.lane.b32.xlu0 %v657, 112
  %v675 = vpop.permute.xlu0 %674
  %v676 = vsel %vm356, %v665, %v667
  %v677 = vsel %vm356, %v667, %v669
  %v678 = vsel %vm356, %v671, %v673
  %v679 = vsel %vm356, %v673, %v675
  %680 = vrot.lane.b32.xlu0 %v582, 96
  %v681 = vpop.permute.xlu0 %680
  %682 = vrot.lane.b32.xlu0 %v649, 96
  %v683 = vpop.permute.xlu0 %682
  %684 = vrot.lane.b32.xlu0 %v650, 96
  %v685 = vpop.permute.xlu0 %684
  %686 = vrot.lane.b32.xlu0 %v596, 96
  %v687 = vpop.permute.xlu0 %686
  %688 = vrot.lane.b32.xlu0 %v597, 96
  %v689 = vpop.permute.xlu0 %688
  %690 = vrot.lane.b32.xlu0 %v657, 96
  %v691 = vpop.permute.xlu0 %690
  %v692 = vsel %vm377, %v681, %v683
  %v693 = vsel %vm377, %v683, %v685
  %v694 = vsel %vm377, %v687, %v689
  %v695 = vsel %vm377, %v689, %v691
  %699 = vrot.lane.b32.xlu0 %v572, 80
  %v700 = vpop.permute.xlu0 %699
  %701 = vrot.lane.b32.xlu0 %v639, 80
  %v702 = vpop.permute.xlu0 %701
  %703 = vrot.lane.b32.xlu0 %v640, 80
  %v704 = vpop.permute.xlu0 %703
  %v705 = vsel %vm395, %v700, %v702
  %v706 = vsel %vm395, %v702, %v704
  %708 = vrot.lane.b32.xlu0 %v582, 122
  %v709 = vpop.permute.xlu0 %708
  %710 = vrot.lane.b32.xlu0 %v583, 122
  %v711 = vpop.permute.xlu0 %710
  %712 = vrot.lane.b32.xlu0 %v596, 122
  %v713 = vpop.permute.xlu0 %712
  %714 = vrot.lane.b32.xlu0 %v597, 122
  %v715 = vpop.permute.xlu0 %714
  %716 = vrot.lane.b32.xlu0 %v676, 122
  %v717 = vpop.permute.xlu0 %716
  %718 = vrot.lane.b32.xlu0 %v677, 122
  %v719 = vpop.permute.xlu0 %718
  %720 = vrot.lane.b32.xlu0 %v678, 122
  %v721 = vpop.permute.xlu0 %720
  %722 = vrot.lane.b32.xlu0 %v679, 122
  %v723 = vpop.permute.xlu0 %722
  %724 = vrot.lane.b32.xlu0 %v692, 122
  %v725 = vpop.permute.xlu0 %724
  %726 = vrot.lane.b32.xlu0 %v693, 122
  %v727 = vpop.permute.xlu0 %726
  %728 = vrot.lane.b32.xlu0 %v694, 122
  %v729 = vpop.permute.xlu0 %728
  %730 = vrot.lane.b32.xlu0 %v695, 122
  %v731 = vpop.permute.xlu0 %730
  %732 = vrot.lane.b32.xlu0 %v705, 122
  %v733 = vpop.permute.xlu0 %732
  %734 = vrot.lane.b32.xlu0 %v706, 122
  %v735 = vpop.permute.xlu0 %734
  %v736 = vsel %vm130, %v709, %v711
  %v737 = vsel %vm130, %v713, %v715
  %v738 = vsel %vm130, %v717, %v719
  %v739 = vsel %vm130, %v721, %v723
  %v740 = vsel %vm130, %v725, %v727
  %v741 = vsel %vm130, %v729, %v731
  %v742 = vsel %vm130, %v733, %v735
  %v762 = vsel %vm130, %v263, %v709
  %v763 = vsel %vm130, %v277, %v713
  %v764 = vsel %vm130, %v358, %v717
  %v765 = vsel %vm130, %v360, %v721
  %v766 = vsel %vm130, %v379, %v725
  %v767 = vsel %vm130, %v381, %v729
  %v768 = vsel %vm130, %v397, %v733
  %770 = vset.pattern.permute.xlu0 0
  %771 = vperm.xlu0 %770, %v55
  %v772 = vpop.permute.xlu0 %771
  %vm774 = vcmask 416768
  %v776 = vsel %vm774, %v54, 0
  %v778 = vsel %vm249, %v396, 0
  %v781 = vsel %vm249, %v768, 0
  %v783 = vsel %vm249, %v742, 0
  %v785 = vsel %vm249, %v735, 0
  %787 = vmatpush.msra.mxu0 0.0
  %788 = vmatpush.msra.mxu0 0.0
  %789 = vmatpush.msra.mxu0 0.0
  %790 = vmatpush.msra.mxu0 0.0
  %791 = vmatpush.msra.mxu0 0.0
  %792 = vmatpush.msra.mxu0 0.0
  %793 = vmatpush.msra.mxu0 0.0
  %794 = vmatpush.msra.mxu0 0.0
  %795 = vmatpush.msra.mxu0 0.0
  %796 = vmatpush.msra.mxu0 %v778
  %797 = vmatpush.msra.mxu0 %v380
  %798 = vmatpush.msra.mxu0 %v378
  %799 = vmatpush.msra.mxu0 %v359
  %800 = vmatpush.msra.mxu0 %v357
  %801 = vmatpush.msra.mxu0 %v276
  %802 = vmatpush.msra.mxu0 %v262
  %803 = vmatmul.f32.gmra.mxu0 %v776
  %v804 = vpop.f32.mrf.mxu0
  %v805 = vadd.f32 %v772, %v804
  %806 = vdwg.mxu0
  %807 = vmatpush.msra.mxu0 0.0
  %808 = vmatpush.msra.mxu0 0.0
  %809 = vmatpush.msra.mxu0 0.0
  %810 = vmatpush.msra.mxu0 0.0
  %811 = vmatpush.msra.mxu0 0.0
  %812 = vmatpush.msra.mxu0 0.0
  %813 = vmatpush.msra.mxu0 0.0
  %814 = vmatpush.msra.mxu0 0.0
  %815 = vmatpush.msra.mxu0 0.0
  %816 = vmatpush.msra.mxu0 %v781
  %817 = vmatpush.msra.mxu0 %v767
  %818 = vmatpush.msra.mxu0 %v766
  %819 = vmatpush.msra.mxu0 %v765
  %820 = vmatpush.msra.mxu0 %v764
  %821 = vmatpush.msra.mxu0 %v763
  %822 = vmatpush.msra.mxu0 %v762
  %823 = vmatmul.f32.gmra.mxu0 %v776
  %v824 = vpop.f32.mrf.mxu0
  %v825 = vadd.f32 %v772, %v824
  %826 = vdwg.mxu0
  %827 = vmatpush.msra.mxu0 0.0
  %828 = vmatpush.msra.mxu0 0.0
  %829 = vmatpush.msra.mxu0 0.0
  %830 = vmatpush.msra.mxu0 0.0
  %831 = vmatpush.msra.mxu0 0.0
  %832 = vmatpush.msra.mxu0 0.0
  %833 = vmatpush.msra.mxu0 0.0
  %834 = vmatpush.msra.mxu0 0.0
  %835 = vmatpush.msra.mxu0 0.0
  %836 = vmatpush.msra.mxu0 %v783
  %837 = vmatpush.msra.mxu0 %v741
  %838 = vmatpush.msra.mxu0 %v740
  %839 = vmatpush.msra.mxu0 %v739
  %840 = vmatpush.msra.mxu0 %v738
  %841 = vmatpush.msra.mxu0 %v737
  %842 = vmatpush.msra.mxu0 %v736
  %843 = vmatmul.f32.gmra.mxu0 %v776
  %v844 = vpop.f32.mrf.mxu0
  %v845 = vadd.f32 %v772, %v844
  %846 = vdwg.mxu0
  %847 = vmatpush.msra.mxu0 0.0
  %848 = vmatpush.msra.mxu0 0.0
  %849 = vmatpush.msra.mxu0 0.0
  %850 = vmatpush.msra.mxu0 0.0
  %851 = vmatpush.msra.mxu0 0.0
  %852 = vmatpush.msra.mxu0 0.0
  %853 = vmatpush.msra.mxu0 0.0
  %854 = vmatpush.msra.mxu0 0.0
  %855 = vmatpush.msra.mxu0 0.0
  %856 = vmatpush.msra.mxu0 %v785
  %857 = vmatpush.msra.mxu0 %v731
  %858 = vmatpush.msra.mxu0 %v727
  %859 = vmatpush.msra.mxu0 %v723
  %860 = vmatpush.msra.mxu0 %v719
  %861 = vmatpush.msra.mxu0 %v715
  %862 = vmatpush.msra.mxu0 %v711
  %863 = vmatmul.f32.gmra.mxu0 %v776
  %v864 = vpop.f32.mrf.mxu0
  %v865 = vadd.f32 %v772, %v864
  %866 = vdwg.mxu0
  %v867 = vsel %vm255, %v805, 0.0
  %v868 = vsel %vm255, %v825, 0.0
  %v869 = vadd.f32 %v867, %v868
  %v870 = vsel %vm255, %v845, 0.0
  %v871 = vadd.f32 %v869, %v870
  %vm872 = vcmask 946176
  %v873 = vsel %vm872, %v865, 0.0
  %v874 = vadd.f32 %v871, %v873
  %875 = vadd.xlane.f32.xlu0 %v874
  %v876 = vpop.xlane.xlu0 %875
  %v877 = vrcp.pop 500.0
  %v878 = vmul.f32 500.0, %v877
  %v879 = vsub.f32 1.0, %v878
  %v880 = vmul.f32 %v877, %v879
  %v881 = vadd.f32 %v877, %v880
  %vm882 = vweird.f32 %v877
  %v883 = vsel %vm882, %v877, %v881
  %v884 = vmul.f32 %v876, %v883
  %v885 = vsub.f32 %v805, %v884
  %v886 = vsub.f32 %v825, %v884
  %v887 = vsub.f32 %v845, %v884
  %v888 = vsub.f32 %v865, %v884
  %v889 = vmul.f32 %v885, %v885
  %v890 = vmul.f32 %v886, %v886
  %v891 = vmul.f32 %v887, %v887
  %v892 = vmul.f32 %v888, %v888
  %v893 = vsel %vm255, %v889, 0.0
  %v894 = vsel %vm255, %v890, 0.0
  %v895 = vadd.f32 %v893, %v894
  %v896 = vsel %vm255, %v891, 0.0
  %v897 = vadd.f32 %v895, %v896
  %v898 = vsel %vm872, %v892, 0.0
  %v899 = vadd.f32 %v897, %v898
  %900 = vadd.xlane.f32.xlu0 %v899
  %v901 = vpop.xlane.xlu0 %900
  %v902 = vmul.f32 %v901, %v883
  %v903 = vadd.f32 %v902, 1e-05
  %v904 = vrsqrt.pop %v903
  %v905 = vmul.f32 %v904, %v903
  %v906 = vmul.f32 %v905, %v904
  %v907 = vmul.f32 0.5, %v906
  %v908 = vsub.f32 1.5, %v907
  %v909 = vmul.f32 %v904, %v908
  %vm910 = vweird.f32 %v903
  %vm911 = vweird.f32 %v904
  %vm912 = vmor %vm910, %vm911
  %v913 = vsel %vm912, %v904, %v909
  %v914 = vmul.f32 %v885, %v913
  %v915 = vmul.f32 %v886, %v913
  %v916 = vmul.f32 %v887, %v913
  %v917 = vmul.f32 %v888, %v913
  %919 = vset.pattern.permute.xlu0 0
  %920 = vperm.xlu0 %919, %v56
  %v921 = vpop.permute.xlu0 %920
  %v923 = vmul.f32 %v914, %v921
  %v924 = vmul.f32 %v915, %v921
  %v925 = vmul.f32 %v916, %v921
  %v926 = vmul.f32 %v917, %v921
  %928 = vset.pattern.permute.xlu0 0
  %929 = vperm.xlu0 %928, %v57
  %v930 = vpop.permute.xlu0 %929
  %v932 = vadd.f32 %v923, %v930
  %v933 = vadd.f32 %v924, %v930
  %v934 = vadd.f32 %v925, %v930
  %v935 = vadd.f32 %v926, %v930
  %vm936 = vcmp.ge.f32.partialorder %v932, 0.0
  %vm937 = vcmp.ge.f32.partialorder %v933, 0.0
  %vm938 = vcmp.ge.f32.partialorder %v934, 0.0
  %vm939 = vcmp.ge.f32.partialorder %v935, 0.0
  %v940 = vmul.f32 %v932, 0.01
  %v941 = vmul.f32 %v933, 0.01
  %v942 = vmul.f32 %v934, 0.01
  %v943 = vmul.f32 %v935, 0.01
  %v944 = vsel %vm936, %v932, %v940
  %v945 = vsel %vm937, %v933, %v941
  %v946 = vsel %vm938, %v934, %v942
  %v947 = vsel %vm939, %v935, %v943
  %v948 = vld [vmem:[%s13] sm:$0xff]
  %v949 = vld [vmem:[%s13 + $0x8] sm:$0xff]
  %v950 = vld [vmem:[%s13 + $0x10] sm:$0xff]
  %v951 = vld [vmem:[%s13 + $0x18] sm:$0xff]
  %v952 = vld [vmem:[%s13 + $0x20] sm:$0xff]
  %v953 = vld [vmem:[%s13 + $0x28] sm:$0xff]
  %v954 = vld [vmem:[%s13 + $0x30] sm:$0xff]
  %v955 = vld [vmem:[%s13 + $0x38] sm:$0xff]
  %v956 = vld [vmem:[%s13 + $0x40] sm:$0xff]
  %v957 = vld [vmem:[%s13 + $0x48] sm:$0xff]
  %v958 = vld [vmem:[%s13 + $0x50] sm:$0xff]
  %v959 = vld [vmem:[%s13 + $0x58] sm:$0xff]
  %v960 = vld [vmem:[%s13 + $0x60] sm:$0xff]
  %v961 = vld [vmem:[%s13 + $0x68] sm:$0xff]
  %v962 = vld [vmem:[%s13 + $0x70] sm:$0xff]
  %v963 = vld [vmem:[%s13 + $0x78] sm:$0xff]
  %v964 = vld [vmem:[%s13 + $0x80] sm:$0xff]
  %v965 = vld [vmem:[%s13 + $0x88] sm:$0xff]
  %v966 = vld [vmem:[%s13 + $0x90] sm:$0xff]
  %v967 = vld [vmem:[%s13 + $0x98] sm:$0xff]
  %v968 = vld [vmem:[%s13 + $0xa0] sm:$0xff]
  %v969 = vld [vmem:[%s13 + $0xa8] sm:$0xff]
  %v970 = vld [vmem:[%s13 + $0xb0] sm:$0xff]
  %v971 = vld [vmem:[%s13 + $0xb8] sm:$0xff]
  %v972 = vld [vmem:[%s13 + $0xc0] sm:$0xff]
  %v973 = vld [vmem:[%s13 + $0xc8] sm:$0xff]
  %v974 = vld [vmem:[%s13 + $0xd0] sm:$0xff]
  %v975 = vld [vmem:[%s13 + $0xd8] sm:$0xff]
  %v976 = vld [vmem:[%s13 + $0xe0] sm:$0xff]
  %v977 = vld [vmem:[%s13 + $0xe8] sm:$0xff]
  %v978 = vld [vmem:[%s13 + $0xf0] sm:$0xff]
  %v979 = vld [vmem:[%s13 + $0xf8] sm:$0xff]
  %v980 = vld [vmem:[%s13 + $0x100] sm:$0xff]
  %v981 = vld [vmem:[%s13 + $0x108] sm:$0xff]
  %v982 = vld [vmem:[%s13 + $0x110] sm:$0xff]
  %v983 = vld [vmem:[%s13 + $0x118] sm:$0xff]
  %v984 = vld [vmem:[%s13 + $0x120] sm:$0xff]
  %v985 = vld [vmem:[%s13 + $0x128] sm:$0xff]
  %v986 = vld [vmem:[%s13 + $0x130] sm:$0xff]
  %v987 = vld [vmem:[%s13 + $0x138] sm:$0xff]
  %v988 = vld [vmem:[%s13 + $0x140] sm:$0xff]
  %v989 = vld [vmem:[%s13 + $0x148] sm:$0xff]
  %v990 = vld [vmem:[%s13 + $0x150] sm:$0xff]
  %v991 = vld [vmem:[%s13 + $0x158] sm:$0xff]
  %v992 = vld [vmem:[%s13 + $0x160] sm:$0xff]
  %v993 = vld [vmem:[%s13 + $0x168] sm:$0xff]
  %v994 = vld [vmem:[%s13 + $0x170] sm:$0xff]
  %v995 = vld [vmem:[%s13 + $0x178] sm:$0xff]
  %v996 = vld [vmem:[%s13 + $0x180] sm:$0xff]
  %v997 = vld [vmem:[%s13 + $0x188] sm:$0xff]
  %v998 = vld [vmem:[%s13 + $0x190] sm:$0xff]
  %v999 = vld [vmem:[%s13 + $0x198] sm:$0xff]
  %v1000 = vld [vmem:[%s13 + $0x1a0] sm:$0xff]
  %v1001 = vld [vmem:[%s13 + $0x1a8] sm:$0xff]
  %v1002 = vld [vmem:[%s13 + $0x1b0] sm:$0xff]
  %v1003 = vld [vmem:[%s13 + $0x1b8] sm:$0xff]
  %v1004 = vld [vmem:[%s13 + $0x1c0] sm:$0xff]
  %v1005 = vld [vmem:[%s13 + $0x1c8] sm:$0xff]
  %v1006 = vld [vmem:[%s13 + $0x1d0] sm:$0xff]
  %v1007 = vld [vmem:[%s13 + $0x1d8] sm:$0xff]
  %v1008 = vld [vmem:[%s13 + $0x1e0] sm:$0xff]
  %v1009 = vld [vmem:[%s13 + $0x1e8] sm:$0xff]
  %v1010 = vld [vmem:[%s13 + $0x1f0] sm:$0xff]
  %v1011 = vld [vmem:[%s13 + $0x1f8] sm:$0xff]
  %v1012 = vld [vmem:[%s13 + $0x200] sm:$0xff]
  %v1013 = vld [vmem:[%s13 + $0x208] sm:$0xff]
  %v1014 = vld [vmem:[%s13 + $0x210] sm:$0xff]
  %v1015 = vld [vmem:[%s13 + $0x218] sm:$0xff]
  %v1016 = vld [vmem:[%s13 + $0x220] sm:$0xff]
  %v1017 = vld [vmem:[%s13 + $0x228] sm:$0xff]
  %v1018 = vld [vmem:[%s13 + $0x230] sm:$0xff]
  %v1019 = vld [vmem:[%s13 + $0x238] sm:$0xff]
  %v1020 = vld [vmem:[%s13 + $0x240] sm:$0xff]
  %v1021 = vld [vmem:[%s13 + $0x248] sm:$0xff]
  %v1022 = vld [vmem:[%s13 + $0x250] sm:$0xff]
  %v1023 = vld [vmem:[%s13 + $0x258] sm:$0xff]
  %v1024 = vld [vmem:[%s13 + $0x260] sm:$0xff]
  %v1025 = vld [vmem:[%s13 + $0x268] sm:$0xff]
  %v1026 = vld [vmem:[%s13 + $0x270] sm:$0xff]
  %v1027 = vld [vmem:[%s13 + $0x278] sm:$0xff]
  %v1028 = vld [vmem:[%s13 + $0x280] sm:$0xff]
  %v1029 = vld [vmem:[%s13 + $0x288] sm:$0xff]
  %v1030 = vld [vmem:[%s13 + $0x290] sm:$0xff]
  %v1031 = vld [vmem:[%s13 + $0x298] sm:$0xff]
  %v1032 = vld [vmem:[%s13 + $0x2a0] sm:$0xff]
  %v1033 = vld [vmem:[%s13 + $0x2a8] sm:$0xff]
  %v1034 = vld [vmem:[%s13 + $0x2b0] sm:$0xff]
  %v1035 = vld [vmem:[%s13 + $0x2b8] sm:$0xff]
  %v1036 = vld [vmem:[%s13 + $0x2c0] sm:$0xff]
  %v1037 = vld [vmem:[%s13 + $0x2c8] sm:$0xff]
  %v1038 = vld [vmem:[%s13 + $0x2d0] sm:$0xff]
  %v1039 = vld [vmem:[%s13 + $0x2d8] sm:$0xff]
  %v1040 = vld [vmem:[%s13 + $0x2e0] sm:$0xff]
  %v1041 = vld [vmem:[%s13 + $0x2e8] sm:$0xff]
  %v1042 = vld [vmem:[%s13 + $0x2f0] sm:$0xff]
  %v1043 = vld [vmem:[%s13 + $0x2f8] sm:$0xff]
  %v1044 = vld [vmem:[%s13 + $0x300] sm:$0xff]
  %v1045 = vld [vmem:[%s13 + $0x308] sm:$0xff]
  %v1046 = vld [vmem:[%s13 + $0x310] sm:$0xff]
  %v1047 = vld [vmem:[%s13 + $0x318] sm:$0xff]
  %v1048 = vld [vmem:[%s13 + $0x320] sm:$0xff]
  %v1049 = vld [vmem:[%s13 + $0x328] sm:$0xff]
  %v1050 = vld [vmem:[%s13 + $0x330] sm:$0xff]
  %v1051 = vld [vmem:[%s13 + $0x338] sm:$0xff]
  %v1052 = vld [vmem:[%s13 + $0x340] sm:$0xff]
  %v1053 = vld [vmem:[%s13 + $0x348] sm:$0xff]
  %v1054 = vld [vmem:[%s13 + $0x350] sm:$0xff]
  %v1055 = vld [vmem:[%s13 + $0x358] sm:$0xff]
  %v1056 = vld [vmem:[%s13 + $0x360] sm:$0xff]
  %v1057 = vld [vmem:[%s13 + $0x368] sm:$0xff]
  %v1058 = vld [vmem:[%s13 + $0x370] sm:$0xff]
  %v1059 = vld [vmem:[%s13 + $0x378] sm:$0xff]
  %v1060 = vld [vmem:[%s13 + $0x380] sm:$0xff]
  %v1061 = vld [vmem:[%s13 + $0x388] sm:$0xff]
  %v1062 = vld [vmem:[%s13 + $0x390] sm:$0xff]
  %v1063 = vld [vmem:[%s13 + $0x398] sm:$0xff]
  %v1064 = vld [vmem:[%s13 + $0x3a0] sm:$0xff]
  %v1065 = vld [vmem:[%s13 + $0x3a8] sm:$0xff]
  %v1066 = vld [vmem:[%s13 + $0x3b0] sm:$0xff]
  %v1067 = vld [vmem:[%s13 + $0x3b8] sm:$0xff]
  %v1068 = vld [vmem:[%s13 + $0x3c0] sm:$0xff]
  %v1069 = vld [vmem:[%s13 + $0x3c8] sm:$0xff]
  %v1070 = vld [vmem:[%s13 + $0x3d0] sm:$0xff]
  %v1071 = vld [vmem:[%s13 + $0x3d8] sm:$0xff]
  %v1072 = vld [vmem:[%s13 + $0x3e0] sm:$0x7]
  %v1073 = vld [vmem:[%s13 + $0x3e8] sm:$0x7]
  %1078 = vrot.lane.b32.xlu0 %v944, 127
  %v1079 = vpop.permute.xlu0 %1078
  %1080 = vrot.lane.b32.xlu0 %v945, 127
  %v1081 = vpop.permute.xlu0 %1080
  %1082 = vrot.lane.b32.xlu0 %v946, 127
  %v1083 = vpop.permute.xlu0 %1082
  %1084 = vrot.lane.b32.xlu0 %v947, 127
  %v1085 = vpop.permute.xlu0 %1084
  %v1086 = vsel %vm80, %v1079, %v1081
  %v1087 = vsel %vm80, %v1081, %v1083
  %v1088 = vsel %vm80, %v1083, %v1085
  %v1093 = vmax.f32 %v944, %v1086
  %v1094 = vmax.f32 %v945, %v1087
  %v1095 = vmax.f32 %v946, %v1088
  %v1096 = vmax.f32 %v947, %v1085
  %v1098 = vsel %vm215, %v1096, 0
  %v1101 = vsel %vm249, %v1072, 0
  %v1104 = vsel %vm249, %v1073, 0
  %v1106 = vand.u32 %v978, 4294901760
  %1107 = vmatpush.msra.mxu0 %v1106
  %v1108 = vand.u32 %v976, 4294901760
  %1109 = vmatpush.msra.mxu0 %v1108
  %v1110 = vand.u32 %v974, 4294901760
  %1111 = vmatpush.msra.mxu0 %v1110
  %v1112 = vand.u32 %v972, 4294901760
  %1113 = vmatpush.msra.mxu0 %v1112
  %v1114 = vand.u32 %v970, 4294901760
  %1115 = vmatpush.msra.mxu0 %v1114
  %v1116 = vand.u32 %v968, 4294901760
  %1117 = vmatpush.msra.mxu0 %v1116
  %v1118 = vand.u32 %v966, 4294901760
  %1119 = vmatpush.msra.mxu0 %v1118
  %v1120 = vand.u32 %v964, 4294901760
  %1121 = vmatpush.msra.mxu0 %v1120
  %v1122 = vand.u32 %v962, 4294901760
  %1123 = vmatpush.msra.mxu0 %v1122
  %v1124 = vand.u32 %v960, 4294901760
  %1125 = vmatpush.msra.mxu0 %v1124
  %v1126 = vand.u32 %v958, 4294901760
  %1127 = vmatpush.msra.mxu0 %v1126
  %v1128 = vand.u32 %v956, 4294901760
  %1129 = vmatpush.msra.mxu0 %v1128
  %v1130 = vand.u32 %v954, 4294901760
  %1131 = vmatpush.msra.mxu0 %v1130
  %v1132 = vand.u32 %v952, 4294901760
  %1133 = vmatpush.msra.mxu0 %v1132
  %v1134 = vand.u32 %v950, 4294901760
  %1135 = vmatpush.msra.mxu0 %v1134
  %v1136 = vand.u32 %v948, 4294901760
  %1137 = vmatpush.msra.mxu0 %v1136
  %v1138 = vand.u32 %v1093, 4294901760
  %v1139 = vsub.f32 %v1093, %v1138
  %v1140 = vand.u32 %v1139, 4294901760
  %v1141 = vsub.f32 %v1139, %v1140
  %v1142 = vand.u32 %v1141, 4294901760
  %1143 = vmatmul.f32.gmra.mxu0 %v1142
  %v1144 = vpop.f32.mrf.mxu0
  %v1145 = vadd.f32 0.0, %v1144
  %1146 = vdwg.mxu0
  %v1147 = vand.u32 %v978, 4294901760
  %v1148 = vsub.f32 %v978, %v1147
  %v1149 = vand.u32 %v1148, 4294901760
  %v1150 = vsub.f32 %v1148, %v1149
  %v1151 = vand.u32 %v1150, 4294901760
  %1152 = vmatpush.msra.mxu0 %v1151
  %v1153 = vand.u32 %v976, 4294901760
  %v1154 = vsub.f32 %v976, %v1153
  %v1155 = vand.u32 %v1154, 4294901760
  %v1156 = vsub.f32 %v1154, %v1155
  %v1157 = vand.u32 %v1156, 4294901760
  %1158 = vmatpush.msra.mxu0 %v1157
  %v1159 = vand.u32 %v974, 4294901760
  %v1160 = vsub.f32 %v974, %v1159
  %v1161 = vand.u32 %v1160, 4294901760
  %v1162 = vsub.f32 %v1160, %v1161
  %v1163 = vand.u32 %v1162, 4294901760
  %1164 = vmatpush.msra.mxu0 %v1163
  %v1165 = vand.u32 %v972, 4294901760
  %v1166 = vsub.f32 %v972, %v1165
  %v1167 = vand.u32 %v1166, 4294901760
  %v1168 = vsub.f32 %v1166, %v1167
  %v1169 = vand.u32 %v1168, 4294901760
  %1170 = vmatpush.msra.mxu0 %v1169
  %v1171 = vand.u32 %v970, 4294901760
  %v1172 = vsub.f32 %v970, %v1171
  %v1173 = vand.u32 %v1172, 4294901760
  %v1174 = vsub.f32 %v1172, %v1173
  %v1175 = vand.u32 %v1174, 4294901760
  %1176 = vmatpush.msra.mxu0 %v1175
  %v1177 = vand.u32 %v968, 4294901760
  %v1178 = vsub.f32 %v968, %v1177
  %v1179 = vand.u32 %v1178, 4294901760
  %v1180 = vsub.f32 %v1178, %v1179
  %v1181 = vand.u32 %v1180, 4294901760
  %1182 = vmatpush.msra.mxu0 %v1181
  %v1183 = vand.u32 %v966, 4294901760
  %v1184 = vsub.f32 %v966, %v1183
  %v1185 = vand.u32 %v1184, 4294901760
  %v1186 = vsub.f32 %v1184, %v1185
  %v1187 = vand.u32 %v1186, 4294901760
  %1188 = vmatpush.msra.mxu0 %v1187
  %v1189 = vand.u32 %v964, 4294901760
  %v1190 = vsub.f32 %v964, %v1189
  %v1191 = vand.u32 %v1190, 4294901760
  %v1192 = vsub.f32 %v1190, %v1191
  %v1193 = vand.u32 %v1192, 4294901760
  %1194 = vmatpush.msra.mxu0 %v1193
  %v1195 = vand.u32 %v962, 4294901760
  %v1196 = vsub.f32 %v962, %v1195
  %v1197 = vand.u32 %v1196, 4294901760
  %v1198 = vsub.f32 %v1196, %v1197
  %v1199 = vand.u32 %v1198, 4294901760
  %1200 = vmatpush.msra.mxu0 %v1199
  %v1201 = vand.u32 %v960, 4294901760
  %v1202 = vsub.f32 %v960, %v1201
  %v1203 = vand.u32 %v1202, 4294901760
  %v1204 = vsub.f32 %v1202, %v1203
  %v1205 = vand.u32 %v1204, 4294901760
  %1206 = vmatpush.msra.mxu0 %v1205
  %v1207 = vand.u32 %v958, 4294901760
  %v1208 = vsub.f32 %v958, %v1207
  %v1209 = vand.u32 %v1208, 4294901760
  %v1210 = vsub.f32 %v1208, %v1209
  %v1211 = vand.u32 %v1210, 4294901760
  %1212 = vmatpush.msra.mxu0 %v1211
  %v1213 = vand.u32 %v956, 4294901760
  %v1214 = vsub.f32 %v956, %v1213
  %v1215 = vand.u32 %v1214, 4294901760
  %v1216 = vsub.f32 %v1214, %v1215
  %v1217 = vand.u32 %v1216, 4294901760
  %1218 = vmatpush.msra.mxu0 %v1217
  %v1219 = vand.u32 %v954, 4294901760
  %v1220 = vsub.f32 %v954, %v1219
  %v1221 = vand.u32 %v1220, 4294901760
  %v1222 = vsub.f32 %v1220, %v1221
  %v1223 = vand.u32 %v1222, 4294901760
  %1224 = vmatpush.msra.mxu0 %v1223
  %v1225 = vand.u32 %v952, 4294901760
  %v1226 = vsub.f32 %v952, %v1225
  %v1227 = vand.u32 %v1226, 4294901760
  %v1228 = vsub.f32 %v1226, %v1227
  %v1229 = vand.u32 %v1228, 4294901760
  %1230 = vmatpush.msra.mxu0 %v1229
  %v1231 = vand.u32 %v950, 4294901760
  %v1232 = vsub.f32 %v950, %v1231
  %v1233 = vand.u32 %v1232, 4294901760
  %v1234 = vsub.f32 %v1232, %v1233
  %v1235 = vand.u32 %v1234, 4294901760
  %1236 = vmatpush.msra.mxu0 %v1235
  %v1237 = vand.u32 %v948, 4294901760
  %v1238 = vsub.f32 %v948, %v1237
  %v1239 = vand.u32 %v1238, 4294901760
  %v1240 = vsub.f32 %v1238, %v1239
  %v1241 = vand.u32 %v1240, 4294901760
  %1242 = vmatpush.msra.mxu0 %v1241
  %v1243 = vand.u32 %v1093, 4294901760
  %1244 = vmatmul.f32.gmra.mxu0 %v1243
  %v1245 = vpop.f32.mrf.mxu0
  %v1246 = vadd.f32 %v1145, %v1245
  %1247 = vdwg.mxu0
  %v1248 = vand.u32 %v978, 4294901760
  %v1249 = vsub.f32 %v978, %v1248
  %1250 = vmatpush.msra.mxu0 %v1249
  %v1251 = vand.u32 %v976, 4294901760
  %v1252 = vsub.f32 %v976, %v1251
  %1253 = vmatpush.msra.mxu0 %v1252
  %v1254 = vand.u32 %v974, 4294901760
  %v1255 = vsub.f32 %v974, %v1254
  %1256 = vmatpush.msra.mxu0 %v1255
  %v1257 = vand.u32 %v972, 4294901760
  %v1258 = vsub.f32 %v972, %v1257
  %1259 = vmatpush.msra.mxu0 %v1258
  %v1260 = vand.u32 %v970, 4294901760
  %v1261 = vsub.f32 %v970, %v1260
  %1262 = vmatpush.msra.mxu0 %v1261
  %v1263 = vand.u32 %v968, 4294901760
  %v1264 = vsub.f32 %v968, %v1263
  %1265 = vmatpush.msra.mxu0 %v1264
  %v1266 = vand.u32 %v966, 4294901760
  %v1267 = vsub.f32 %v966, %v1266
  %1268 = vmatpush.msra.mxu0 %v1267
  %v1269 = vand.u32 %v964, 4294901760
  %v1270 = vsub.f32 %v964, %v1269
  %1271 = vmatpush.msra.mxu0 %v1270
  %v1272 = vand.u32 %v962, 4294901760
  %v1273 = vsub.f32 %v962, %v1272
  %1274 = vmatpush.msra.mxu0 %v1273
  %v1275 = vand.u32 %v960, 4294901760
  %v1276 = vsub.f32 %v960, %v1275
  %1277 = vmatpush.msra.mxu0 %v1276
  %v1278 = vand.u32 %v958, 4294901760
  %v1279 = vsub.f32 %v958, %v1278
  %1280 = vmatpush.msra.mxu0 %v1279
  %v1281 = vand.u32 %v956, 4294901760
  %v1282 = vsub.f32 %v956, %v1281
  %1283 = vmatpush.msra.mxu0 %v1282
  %v1284 = vand.u32 %v954, 4294901760
  %v1285 = vsub.f32 %v954, %v1284
  %1286 = vmatpush.msra.mxu0 %v1285
  %v1287 = vand.u32 %v952, 4294901760
  %v1288 = vsub.f32 %v952, %v1287
  %1289 = vmatpush.msra.mxu0 %v1288
  %v1290 = vand.u32 %v950, 4294901760
  %v1291 = vsub.f32 %v950, %v1290
  %1292 = vmatpush.msra.mxu0 %v1291
  %v1293 = vand.u32 %v948, 4294901760
  %v1294 = vsub.f32 %v948, %v1293
  %1295 = vmatpush.msra.mxu0 %v1294
  %v1296 = vand.u32 %v1093, 4294901760
  %v1297 = vsub.f32 %v1093, %v1296
  %1298 = vmatmul.f32.gmra.mxu0 %v1297
  %v1299 = vpop.f32.mrf.mxu0
  %v1300 = vadd.f32 %v1246, %v1299
  %1301 = vdwg.mxu0
  %v1302 = vand.u32 %v978, 4294901760
  %1303 = vmatpush.msra.mxu0 %v1302
  %v1304 = vand.u32 %v976, 4294901760
  %1305 = vmatpush.msra.mxu0 %v1304
  %v1306 = vand.u32 %v974, 4294901760
  %1307 = vmatpush.msra.mxu0 %v1306
  %v1308 = vand.u32 %v972, 4294901760
  %1309 = vmatpush.msra.mxu0 %v1308
  %v1310 = vand.u32 %v970, 4294901760
  %1311 = vmatpush.msra.mxu0 %v1310
  %v1312 = vand.u32 %v968, 4294901760
  %1313 = vmatpush.msra.mxu0 %v1312
  %v1314 = vand.u32 %v966, 4294901760
  %1315 = vmatpush.msra.mxu0 %v1314
  %v1316 = vand.u32 %v964, 4294901760
  %1317 = vmatpush.msra.mxu0 %v1316
  %v1318 = vand.u32 %v962, 4294901760
  %1319 = vmatpush.msra.mxu0 %v1318
  %v1320 = vand.u32 %v960, 4294901760
  %1321 = vmatpush.msra.mxu0 %v1320
  %v1322 = vand.u32 %v958, 4294901760
  %1323 = vmatpush.msra.mxu0 %v1322
  %v1324 = vand.u32 %v956, 4294901760
  %1325 = vmatpush.msra.mxu0 %v1324
  %v1326 = vand.u32 %v954, 4294901760
  %1327 = vmatpush.msra.mxu0 %v1326
  %v1328 = vand.u32 %v952, 4294901760
  %1329 = vmatpush.msra.mxu0 %v1328
  %v1330 = vand.u32 %v950, 4294901760
  %1331 = vmatpush.msra.mxu0 %v1330
  %v1332 = vand.u32 %v948, 4294901760
  %1333 = vmatpush.msra.mxu0 %v1332
  %v1334 = vand.u32 %v1093, 4294901760
  %v1335 = vsub.f32 %v1093, %v1334
  %v1336 = vand.u32 %v1335, 4294901760
  %1337 = vmatmul.f32.gmra.mxu0 %v1336
  %v1338 = vpop.f32.mrf.mxu0
  %v1339 = vadd.f32 %v1300, %v1338
  %1340 = vdwg.mxu0
  %v1341 = vand.u32 %v978, 4294901760
  %v1342 = vsub.f32 %v978, %v1341
  %v1343 = vand.u32 %v1342, 4294901760
  %1344 = vmatpush.msra.mxu0 %v1343
  %v1345 = vand.u32 %v976, 4294901760
  %v1346 = vsub.f32 %v976, %v1345
  %v1347 = vand.u32 %v1346, 4294901760
  %1348 = vmatpush.msra.mxu0 %v1347
  %v1349 = vand.u32 %v974, 4294901760
  %v1350 = vsub.f32 %v974, %v1349
  %v1351 = vand.u32 %v1350, 4294901760
  %1352 = vmatpush.msra.mxu0 %v1351
  %v1353 = vand.u32 %v972, 4294901760
  %v1354 = vsub.f32 %v972, %v1353
  %v1355 = vand.u32 %v1354, 4294901760
  %1356 = vmatpush.msra.mxu0 %v1355
  %v1357 = vand.u32 %v970, 4294901760
  %v1358 = vsub.f32 %v970, %v1357
  %v1359 = vand.u32 %v1358, 4294901760
  %1360 = vmatpush.msra.mxu0 %v1359
  %v1361 = vand.u32 %v968, 4294901760
  %v1362 = vsub.f32 %v968, %v1361
  %v1363 = vand.u32 %v1362, 4294901760
  %1364 = vmatpush.msra.mxu0 %v1363
  %v1365 = vand.u32 %v966, 4294901760
  %v1366 = vsub.f32 %v966, %v1365
  %v1367 = vand.u32 %v1366, 4294901760
  %1368 = vmatpush.msra.mxu0 %v1367
  %v1369 = vand.u32 %v964, 4294901760
  %v1370 = vsub.f32 %v964, %v1369
  %v1371 = vand.u32 %v1370, 4294901760
  %1372 = vmatpush.msra.mxu0 %v1371
  %v1373 = vand.u32 %v962, 4294901760
  %v1374 = vsub.f32 %v962, %v1373
  %v1375 = vand.u32 %v1374, 4294901760
  %1376 = vmatpush.msra.mxu0 %v1375
  %v1377 = vand.u32 %v960, 4294901760
  %v1378 = vsub.f32 %v960, %v1377
  %v1379 = vand.u32 %v1378, 4294901760
  %1380 = vmatpush.msra.mxu0 %v1379
  %v1381 = vand.u32 %v958, 4294901760
  %v1382 = vsub.f32 %v958, %v1381
  %v1383 = vand.u32 %v1382, 4294901760
  %1384 = vmatpush.msra.mxu0 %v1383
  %v1385 = vand.u32 %v956, 4294901760
  %v1386 = vsub.f32 %v956, %v1385
  %v1387 = vand.u32 %v1386, 4294901760
  %1388 = vmatpush.msra.mxu0 %v1387
  %v1389 = vand.u32 %v954, 4294901760
  %v1390 = vsub.f32 %v954, %v1389
  %v1391 = vand.u32 %v1390, 4294901760
  %1392 = vmatpush.msra.mxu0 %v1391
  %v1393 = vand.u32 %v952, 4294901760
  %v1394 = vsub.f32 %v952, %v1393
  %v1395 = vand.u32 %v1394, 4294901760
  %1396 = vmatpush.msra.mxu0 %v1395
  %v1397 = vand.u32 %v950, 4294901760
  %v1398 = vsub.f32 %v950, %v1397
  %v1399 = vand.u32 %v1398, 4294901760
  %1400 = vmatpush.msra.mxu0 %v1399
  %v1401 = vand.u32 %v948, 4294901760
  %v1402 = vsub.f32 %v948, %v1401
  %v1403 = vand.u32 %v1402, 4294901760
  %1404 = vmatpush.msra.mxu0 %v1403
  %v1405 = vand.u32 %v1093, 4294901760
  %1406 = vmatmul.f32.gmra.mxu0 %v1405
  %v1407 = vpop.f32.mrf.mxu0
  %v1408 = vadd.f32 %v1339, %v1407
  %1409 = vdwg.mxu0
  %v1410 = vand.u32 %v978, 4294901760
  %1411 = vmatpush.msra.mxu0 %v1410
  %v1412 = vand.u32 %v976, 4294901760
  %1413 = vmatpush.msra.mxu0 %v1412
  %v1414 = vand.u32 %v974, 4294901760
  %1415 = vmatpush.msra.mxu0 %v1414
  %v1416 = vand.u32 %v972, 4294901760
  %1417 = vmatpush.msra.mxu0 %v1416
  %v1418 = vand.u32 %v970, 4294901760
  %1419 = vmatpush.msra.mxu0 %v1418
  %v1420 = vand.u32 %v968, 4294901760
  %1421 = vmatpush.msra.mxu0 %v1420
  %v1422 = vand.u32 %v966, 4294901760
  %1423 = vmatpush.msra.mxu0 %v1422
  %v1424 = vand.u32 %v964, 4294901760
  %1425 = vmatpush.msra.mxu0 %v1424
  %v1426 = vand.u32 %v962, 4294901760
  %1427 = vmatpush.msra.mxu0 %v1426
  %v1428 = vand.u32 %v960, 4294901760
  %1429 = vmatpush.msra.mxu0 %v1428
  %v1430 = vand.u32 %v958, 4294901760
  %1431 = vmatpush.msra.mxu0 %v1430
  %v1432 = vand.u32 %v956, 4294901760
  %1433 = vmatpush.msra.mxu0 %v1432
  %v1434 = vand.u32 %v954, 4294901760
  %1435 = vmatpush.msra.mxu0 %v1434
  %v1436 = vand.u32 %v952, 4294901760
  %1437 = vmatpush.msra.mxu0 %v1436
  %v1438 = vand.u32 %v950, 4294901760
  %1439 = vmatpush.msra.mxu0 %v1438
  %v1440 = vand.u32 %v948, 4294901760
  %1441 = vmatpush.msra.mxu0 %v1440
  %v1442 = vand.u32 %v1093, 4294901760
  %1443 = vmatmul.f32.gmra.mxu0 %v1442
  %v1444 = vpop.f32.mrf.mxu0
  %v1445 = vadd.f32 %v1408, %v1444
  %1446 = vdwg.mxu0
  %v1447 = vand.u32 %v1010, 4294901760
  %1448 = vmatpush.msra.mxu0 %v1447
  %v1449 = vand.u32 %v1008, 4294901760
  %1450 = vmatpush.msra.mxu0 %v1449
  %v1451 = vand.u32 %v1006, 4294901760
  %1452 = vmatpush.msra.mxu0 %v1451
  %v1453 = vand.u32 %v1004, 4294901760
  %1454 = vmatpush.msra.mxu0 %v1453
  %v1455 = vand.u32 %v1002, 4294901760
  %1456 = vmatpush.msra.mxu0 %v1455
  %v1457 = vand.u32 %v1000, 4294901760
  %1458 = vmatpush.msra.mxu0 %v1457
  %v1459 = vand.u32 %v998, 4294901760
  %1460 = vmatpush.msra.mxu0 %v1459
  %v1461 = vand.u32 %v996, 4294901760
  %1462 = vmatpush.msra.mxu0 %v1461
  %v1463 = vand.u32 %v994, 4294901760
  %1464 = vmatpush.msra.mxu0 %v1463
  %v1465 = vand.u32 %v992, 4294901760
  %1466 = vmatpush.msra.mxu0 %v1465
  %v1467 = vand.u32 %v990, 4294901760
  %1468 = vmatpush.msra.mxu0 %v1467
  %v1469 = vand.u32 %v988, 4294901760
  %1470 = vmatpush.msra.mxu0 %v1469
  %v1471 = vand.u32 %v986, 4294901760
  %1472 = vmatpush.msra.mxu0 %v1471
  %v1473 = vand.u32 %v984, 4294901760
  %1474 = vmatpush.msra.mxu0 %v1473
  %v1475 = vand.u32 %v982, 4294901760
  %1476 = vmatpush.msra.mxu0 %v1475
  %v1477 = vand.u32 %v980, 4294901760
  %1478 = vmatpush.msra.mxu0 %v1477
  %v1479 = vand.u32 %v1094, 4294901760
  %v1480 = vsub.f32 %v1094, %v1479
  %v1481 = vand.u32 %v1480, 4294901760
  %v1482 = vsub.f32 %v1480, %v1481
  %v1483 = vand.u32 %v1482, 4294901760
  %1484 = vmatmul.f32.gmra.mxu0 %v1483
  %v1485 = vpop.f32.mrf.mxu0
  %v1486 = vadd.f32 %v1445, %v1485
  %1487 = vdwg.mxu0
  %v1488 = vand.u32 %v1010, 4294901760
  %v1489 = vsub.f32 %v1010, %v1488
  %v1490 = vand.u32 %v1489, 4294901760
  %v1491 = vsub.f32 %v1489, %v1490
  %v1492 = vand.u32 %v1491, 4294901760
  %1493 = vmatpush.msra.mxu0 %v1492
  %v1494 = vand.u32 %v1008, 4294901760
  %v1495 = vsub.f32 %v1008, %v1494
  %v1496 = vand.u32 %v1495, 4294901760
  %v1497 = vsub.f32 %v1495, %v1496
  %v1498 = vand.u32 %v1497, 4294901760
  %1499 = vmatpush.msra.mxu0 %v1498
  %v1500 = vand.u32 %v1006, 4294901760
  %v1501 = vsub.f32 %v1006, %v1500
  %v1502 = vand.u32 %v1501, 4294901760
  %v1503 = vsub.f32 %v1501, %v1502
  %v1504 = vand.u32 %v1503, 4294901760
  %1505 = vmatpush.msra.mxu0 %v1504
  %v1506 = vand.u32 %v1004, 4294901760
  %v1507 = vsub.f32 %v1004, %v1506
  %v1508 = vand.u32 %v1507, 4294901760
  %v1509 = vsub.f32 %v1507, %v1508
  %v1510 = vand.u32 %v1509, 4294901760
  %1511 = vmatpush.msra.mxu0 %v1510
  %v1512 = vand.u32 %v1002, 4294901760
  %v1513 = vsub.f32 %v1002, %v1512
  %v1514 = vand.u32 %v1513, 4294901760
  %v1515 = vsub.f32 %v1513, %v1514
  %v1516 = vand.u32 %v1515, 4294901760
  %1517 = vmatpush.msra.mxu0 %v1516
  %v1518 = vand.u32 %v1000, 4294901760
  %v1519 = vsub.f32 %v1000, %v1518
  %v1520 = vand.u32 %v1519, 4294901760
  %v1521 = vsub.f32 %v1519, %v1520
  %v1522 = vand.u32 %v1521, 4294901760
  %1523 = vmatpush.msra.mxu0 %v1522
  %v1524 = vand.u32 %v998, 4294901760
  %v1525 = vsub.f32 %v998, %v1524
  %v1526 = vand.u32 %v1525, 4294901760
  %v1527 = vsub.f32 %v1525, %v1526
  %v1528 = vand.u32 %v1527, 4294901760
  %1529 = vmatpush.msra.mxu0 %v1528
  %v1530 = vand.u32 %v996, 4294901760
  %v1531 = vsub.f32 %v996, %v1530
  %v1532 = vand.u32 %v1531, 4294901760
  %v1533 = vsub.f32 %v1531, %v1532
  %v1534 = vand.u32 %v1533, 4294901760
  %1535 = vmatpush.msra.mxu0 %v1534
  %v1536 = vand.u32 %v994, 4294901760
  %v1537 = vsub.f32 %v994, %v1536
  %v1538 = vand.u32 %v1537, 4294901760
  %v1539 = vsub.f32 %v1537, %v1538
  %v1540 = vand.u32 %v1539, 4294901760
  %1541 = vmatpush.msra.mxu0 %v1540
  %v1542 = vand.u32 %v992, 4294901760
  %v1543 = vsub.f32 %v992, %v1542
  %v1544 = vand.u32 %v1543, 4294901760
  %v1545 = vsub.f32 %v1543, %v1544
  %v1546 = vand.u32 %v1545, 4294901760
  %1547 = vmatpush.msra.mxu0 %v1546
  %v1548 = vand.u32 %v990, 4294901760
  %v1549 = vsub.f32 %v990, %v1548
  %v1550 = vand.u32 %v1549, 4294901760
  %v1551 = vsub.f32 %v1549, %v1550
  %v1552 = vand.u32 %v1551, 4294901760
  %1553 = vmatpush.msra.mxu0 %v1552
  %v1554 = vand.u32 %v988, 4294901760
  %v1555 = vsub.f32 %v988, %v1554
  %v1556 = vand.u32 %v1555, 4294901760
  %v1557 = vsub.f32 %v1555, %v1556
  %v1558 = vand.u32 %v1557, 4294901760
  %1559 = vmatpush.msra.mxu0 %v1558
  %v1560 = vand.u32 %v986, 4294901760
  %v1561 = vsub.f32 %v986, %v1560
  %v1562 = vand.u32 %v1561, 4294901760
  %v1563 = vsub.f32 %v1561, %v1562
  %v1564 = vand.u32 %v1563, 4294901760
  %1565 = vmatpush.msra.mxu0 %v1564
  %v1566 = vand.u32 %v984, 4294901760
  %v1567 = vsub.f32 %v984, %v1566
  %v1568 = vand.u32 %v1567, 4294901760
  %v1569 = vsub.f32 %v1567, %v1568
  %v1570 = vand.u32 %v1569, 4294901760
  %1571 = vmatpush.msra.mxu0 %v1570
  %v1572 = vand.u32 %v982, 4294901760
  %v1573 = vsub.f32 %v982, %v1572
  %v1574 = vand.u32 %v1573, 4294901760
  %v1575 = vsub.f32 %v1573, %v1574
  %v1576 = vand.u32 %v1575, 4294901760
  %1577 = vmatpush.msra.mxu0 %v1576
  %v1578 = vand.u32 %v980, 4294901760
  %v1579 = vsub.f32 %v980, %v1578
  %v1580 = vand.u32 %v1579, 4294901760
  %v1581 = vsub.f32 %v1579, %v1580
  %v1582 = vand.u32 %v1581, 4294901760
  %1583 = vmatpush.msra.mxu0 %v1582
  %v1584 = vand.u32 %v1094, 4294901760
  %1585 = vmatmul.f32.gmra.mxu0 %v1584
  %v1586 = vpop.f32.mrf.mxu0
  %v1587 = vadd.f32 %v1486, %v1586
  %1588 = vdwg.mxu0
  %v1589 = vand.u32 %v1010, 4294901760
  %v1590 = vsub.f32 %v1010, %v1589
  %1591 = vmatpush.msra.mxu0 %v1590
  %v1592 = vand.u32 %v1008, 4294901760
  %v1593 = vsub.f32 %v1008, %v1592
  %1594 = vmatpush.msra.mxu0 %v1593
  %v1595 = vand.u32 %v1006, 4294901760
  %v1596 = vsub.f32 %v1006, %v1595
  %1597 = vmatpush.msra.mxu0 %v1596
  %v1598 = vand.u32 %v1004, 4294901760
  %v1599 = vsub.f32 %v1004, %v1598
  %1600 = vmatpush.msra.mxu0 %v1599
  %v1601 = vand.u32 %v1002, 4294901760
  %v1602 = vsub.f32 %v1002, %v1601
  %1603 = vmatpush.msra.mxu0 %v1602
  %v1604 = vand.u32 %v1000, 4294901760
  %v1605 = vsub.f32 %v1000, %v1604
  %1606 = vmatpush.msra.mxu0 %v1605
  %v1607 = vand.u32 %v998, 4294901760
  %v1608 = vsub.f32 %v998, %v1607
  %1609 = vmatpush.msra.mxu0 %v1608
  %v1610 = vand.u32 %v996, 4294901760
  %v1611 = vsub.f32 %v996, %v1610
  %1612 = vmatpush.msra.mxu0 %v1611
  %v1613 = vand.u32 %v994, 4294901760
  %v1614 = vsub.f32 %v994, %v1613
  %1615 = vmatpush.msra.mxu0 %v1614
  %v1616 = vand.u32 %v992, 4294901760
  %v1617 = vsub.f32 %v992, %v1616
  %1618 = vmatpush.msra.mxu0 %v1617
  %v1619 = vand.u32 %v990, 4294901760
  %v1620 = vsub.f32 %v990, %v1619
  %1621 = vmatpush.msra.mxu0 %v1620
  %v1622 = vand.u32 %v988, 4294901760
  %v1623 = vsub.f32 %v988, %v1622
  %1624 = vmatpush.msra.mxu0 %v1623
  %v1625 = vand.u32 %v986, 4294901760
  %v1626 = vsub.f32 %v986, %v1625
  %1627 = vmatpush.msra.mxu0 %v1626
  %v1628 = vand.u32 %v984, 4294901760
  %v1629 = vsub.f32 %v984, %v1628
  %1630 = vmatpush.msra.mxu0 %v1629
  %v1631 = vand.u32 %v982, 4294901760
  %v1632 = vsub.f32 %v982, %v1631
  %1633 = vmatpush.msra.mxu0 %v1632
  %v1634 = vand.u32 %v980, 4294901760
  %v1635 = vsub.f32 %v980, %v1634
  %1636 = vmatpush.msra.mxu0 %v1635
  %v1637 = vand.u32 %v1094, 4294901760
  %v1638 = vsub.f32 %v1094, %v1637
  %1639 = vmatmul.f32.gmra.mxu0 %v1638
  %v1640 = vpop.f32.mrf.mxu0
  %v1641 = vadd.f32 %v1587, %v1640
  %1642 = vdwg.mxu0
  %v1643 = vand.u32 %v1010, 4294901760
  %1644 = vmatpush.msra.mxu0 %v1643
  %v1645 = vand.u32 %v1008, 4294901760
  %1646 = vmatpush.msra.mxu0 %v1645
  %v1647 = vand.u32 %v1006, 4294901760
  %1648 = vmatpush.msra.mxu0 %v1647
  %v1649 = vand.u32 %v1004, 4294901760
  %1650 = vmatpush.msra.mxu0 %v1649
  %v1651 = vand.u32 %v1002, 4294901760
  %1652 = vmatpush.msra.mxu0 %v1651
  %v1653 = vand.u32 %v1000, 4294901760
  %1654 = vmatpush.msra.mxu0 %v1653
  %v1655 = vand.u32 %v998, 4294901760
  %1656 = vmatpush.msra.mxu0 %v1655
  %v1657 = vand.u32 %v996, 4294901760
  %1658 = vmatpush.msra.mxu0 %v1657
  %v1659 = vand.u32 %v994, 4294901760
  %1660 = vmatpush.msra.mxu0 %v1659
  %v1661 = vand.u32 %v992, 4294901760
  %1662 = vmatpush.msra.mxu0 %v1661
  %v1663 = vand.u32 %v990, 4294901760
  %1664 = vmatpush.msra.mxu0 %v1663
  %v1665 = vand.u32 %v988, 4294901760
  %1666 = vmatpush.msra.mxu0 %v1665
  %v1667 = vand.u32 %v986, 4294901760
  %1668 = vmatpush.msra.mxu0 %v1667
  %v1669 = vand.u32 %v984, 4294901760
  %1670 = vmatpush.msra.mxu0 %v1669
  %v1671 = vand.u32 %v982, 4294901760
  %1672 = vmatpush.msra.mxu0 %v1671
  %v1673 = vand.u32 %v980, 4294901760
  %1674 = vmatpush.msra.mxu0 %v1673
  %v1675 = vand.u32 %v1094, 4294901760
  %v1676 = vsub.f32 %v1094, %v1675
  %v1677 = vand.u32 %v1676, 4294901760
  %1678 = vmatmul.f32.gmra.mxu0 %v1677
  %v1679 = vpop.f32.mrf.mxu0
  %v1680 = vadd.f32 %v1641, %v1679
  %1681 = vdwg.mxu0
  %v1682 = vand.u32 %v1010, 4294901760
  %v1683 = vsub.f32 %v1010, %v1682
  %v1684 = vand.u32 %v1683, 4294901760
  %1685 = vmatpush.msra.mxu0 %v1684
  %v1686 = vand.u32 %v1008, 4294901760
  %v1687 = vsub.f32 %v1008, %v1686
  %v1688 = vand.u32 %v1687, 4294901760
  %1689 = vmatpush.msra.mxu0 %v1688
  %v1690 = vand.u32 %v1006, 4294901760
  %v1691 = vsub.f32 %v1006, %v1690
  %v1692 = vand.u32 %v1691, 4294901760
  %1693 = vmatpush.msra.mxu0 %v1692
  %v1694 = vand.u32 %v1004, 4294901760
  %v1695 = vsub.f32 %v1004, %v1694
  %v1696 = vand.u32 %v1695, 4294901760
  %1697 = vmatpush.msra.mxu0 %v1696
  %v1698 = vand.u32 %v1002, 4294901760
  %v1699 = vsub.f32 %v1002, %v1698
  %v1700 = vand.u32 %v1699, 4294901760
  %1701 = vmatpush.msra.mxu0 %v1700
  %v1702 = vand.u32 %v1000, 4294901760
  %v1703 = vsub.f32 %v1000, %v1702
  %v1704 = vand.u32 %v1703, 4294901760
  %1705 = vmatpush.msra.mxu0 %v1704
  %v1706 = vand.u32 %v998, 4294901760
  %v1707 = vsub.f32 %v998, %v1706
  %v1708 = vand.u32 %v1707, 4294901760
  %1709 = vmatpush.msra.mxu0 %v1708
  %v1710 = vand.u32 %v996, 4294901760
  %v1711 = vsub.f32 %v996, %v1710
  %v1712 = vand.u32 %v1711, 4294901760
  %1713 = vmatpush.msra.mxu0 %v1712
  %v1714 = vand.u32 %v994, 4294901760
  %v1715 = vsub.f32 %v994, %v1714
  %v1716 = vand.u32 %v1715, 4294901760
  %1717 = vmatpush.msra.mxu0 %v1716
  %v1718 = vand.u32 %v992, 4294901760
  %v1719 = vsub.f32 %v992, %v1718
  %v1720 = vand.u32 %v1719, 4294901760
  %1721 = vmatpush.msra.mxu0 %v1720
  %v1722 = vand.u32 %v990, 4294901760
  %v1723 = vsub.f32 %v990, %v1722
  %v1724 = vand.u32 %v1723, 4294901760
  %1725 = vmatpush.msra.mxu0 %v1724
  %v1726 = vand.u32 %v988, 4294901760
  %v1727 = vsub.f32 %v988, %v1726
  %v1728 = vand.u32 %v1727, 4294901760
  %1729 = vmatpush.msra.mxu0 %v1728
  %v1730 = vand.u32 %v986, 4294901760
  %v1731 = vsub.f32 %v986, %v1730
  %v1732 = vand.u32 %v1731, 4294901760
  %1733 = vmatpush.msra.mxu0 %v1732
  %v1734 = vand.u32 %v984, 4294901760
  %v1735 = vsub.f32 %v984, %v1734
  %v1736 = vand.u32 %v1735, 4294901760
  %1737 = vmatpush.msra.mxu0 %v1736
  %v1738 = vand.u32 %v982, 4294901760
  %v1739 = vsub.f32 %v982, %v1738
  %v1740 = vand.u32 %v1739, 4294901760
  %1741 = vmatpush.msra.mxu0 %v1740
  %v1742 = vand.u32 %v980, 4294901760
  %v1743 = vsub.f32 %v980, %v1742
  %v1744 = vand.u32 %v1743, 4294901760
  %1745 = vmatpush.msra.mxu0 %v1744
  %v1746 = vand.u32 %v1094, 4294901760
  %1747 = vmatmul.f32.gmra.mxu0 %v1746
  %v1748 = vpop.f32.mrf.mxu0
  %v1749 = vadd.f32 %v1680, %v1748
  %1750 = vdwg.mxu0
  %v1751 = vand.u32 %v1010, 4294901760
  %1752 = vmatpush.msra.mxu0 %v1751
  %v1753 = vand.u32 %v1008, 4294901760
  %1754 = vmatpush.msra.mxu0 %v1753
  %v1755 = vand.u32 %v1006, 4294901760
  %1756 = vmatpush.msra.mxu0 %v1755
  %v1757 = vand.u32 %v1004, 4294901760
  %1758 = vmatpush.msra.mxu0 %v1757
  %v1759 = vand.u32 %v1002, 4294901760
  %1760 = vmatpush.msra.mxu0 %v1759
  %v1761 = vand.u32 %v1000, 4294901760
  %1762 = vmatpush.msra.mxu0 %v1761
  %v1763 = vand.u32 %v998, 4294901760
  %1764 = vmatpush.msra.mxu0 %v1763
  %v1765 = vand.u32 %v996, 4294901760
  %1766 = vmatpush.msra.mxu0 %v1765
  %v1767 = vand.u32 %v994, 4294901760
  %1768 = vmatpush.msra.mxu0 %v1767
  %v1769 = vand.u32 %v992, 4294901760
  %1770 = vmatpush.msra.mxu0 %v1769
  %v1771 = vand.u32 %v990, 4294901760
  %1772 = vmatpush.msra.mxu0 %v1771
  %v1773 = vand.u32 %v988, 4294901760
  %1774 = vmatpush.msra.mxu0 %v1773
  %v1775 = vand.u32 %v986, 4294901760
  %1776 = vmatpush.msra.mxu0 %v1775
  %v1777 = vand.u32 %v984, 4294901760
  %1778 = vmatpush.msra.mxu0 %v1777
  %v1779 = vand.u32 %v982, 4294901760
  %1780 = vmatpush.msra.mxu0 %v1779
  %v1781 = vand.u32 %v980, 4294901760
  %1782 = vmatpush.msra.mxu0 %v1781
  %v1783 = vand.u32 %v1094, 4294901760
  %1784 = vmatmul.f32.gmra.mxu0 %v1783
  %v1785 = vpop.f32.mrf.mxu0
  %v1786 = vadd.f32 %v1749, %v1785
  %1787 = vdwg.mxu0
  %v1788 = vand.u32 %v1042, 4294901760
  %1789 = vmatpush.msra.mxu0 %v1788
  %v1790 = vand.u32 %v1040, 4294901760
  %1791 = vmatpush.msra.mxu0 %v1790
  %v1792 = vand.u32 %v1038, 4294901760
  %1793 = vmatpush.msra.mxu0 %v1792
  %v1794 = vand.u32 %v1036, 4294901760
  %1795 = vmatpush.msra.mxu0 %v1794
  %v1796 = vand.u32 %v1034, 4294901760
  %1797 = vmatpush.msra.mxu0 %v1796
  %v1798 = vand.u32 %v1032, 4294901760
  %1799 = vmatpush.msra.mxu0 %v1798
  %v1800 = vand.u32 %v1030, 4294901760
  %1801 = vmatpush.msra.mxu0 %v1800
  %v1802 = vand.u32 %v1028, 4294901760
  %1803 = vmatpush.msra.mxu0 %v1802
  %v1804 = vand.u32 %v1026, 4294901760
  %1805 = vmatpush.msra.mxu0 %v1804
  %v1806 = vand.u32 %v1024, 4294901760
  %1807 = vmatpush.msra.mxu0 %v1806
  %v1808 = vand.u32 %v1022, 4294901760
  %1809 = vmatpush.msra.mxu0 %v1808
  %v1810 = vand.u32 %v1020, 4294901760
  %1811 = vmatpush.msra.mxu0 %v1810
  %v1812 = vand.u32 %v1018, 4294901760
  %1813 = vmatpush.msra.mxu0 %v1812
  %v1814 = vand.u32 %v1016, 4294901760
  %1815 = vmatpush.msra.mxu0 %v1814
  %v1816 = vand.u32 %v1014, 4294901760
  %1817 = vmatpush.msra.mxu0 %v1816
  %v1818 = vand.u32 %v1012, 4294901760
  %1819 = vmatpush.msra.mxu0 %v1818
  %v1820 = vand.u32 %v1095, 4294901760
  %v1821 = vsub.f32 %v1095, %v1820
  %v1822 = vand.u32 %v1821, 4294901760
  %v1823 = vsub.f32 %v1821, %v1822
  %v1824 = vand.u32 %v1823, 4294901760
  %1825 = vmatmul.f32.gmra.mxu0 %v1824
  %v1826 = vpop.f32.mrf.mxu0
  %v1827 = vadd.f32 %v1786, %v1826
  %1828 = vdwg.mxu0
  %v1829 = vand.u32 %v1042, 4294901760
  %v1830 = vsub.f32 %v1042, %v1829
  %v1831 = vand.u32 %v1830, 4294901760
  %v1832 = vsub.f32 %v1830, %v1831
  %v1833 = vand.u32 %v1832, 4294901760
  %1834 = vmatpush.msra.mxu0 %v1833
  %v1835 = vand.u32 %v1040, 4294901760
  %v1836 = vsub.f32 %v1040, %v1835
  %v1837 = vand.u32 %v1836, 4294901760
  %v1838 = vsub.f32 %v1836, %v1837
  %v1839 = vand.u32 %v1838, 4294901760
  %1840 = vmatpush.msra.mxu0 %v1839
  %v1841 = vand.u32 %v1038, 4294901760
  %v1842 = vsub.f32 %v1038, %v1841
  %v1843 = vand.u32 %v1842, 4294901760
  %v1844 = vsub.f32 %v1842, %v1843
  %v1845 = vand.u32 %v1844, 4294901760
  %1846 = vmatpush.msra.mxu0 %v1845
  %v1847 = vand.u32 %v1036, 4294901760
  %v1848 = vsub.f32 %v1036, %v1847
  %v1849 = vand.u32 %v1848, 4294901760
  %v1850 = vsub.f32 %v1848, %v1849
  %v1851 = vand.u32 %v1850, 4294901760
  %1852 = vmatpush.msra.mxu0 %v1851
  %v1853 = vand.u32 %v1034, 4294901760
  %v1854 = vsub.f32 %v1034, %v1853
  %v1855 = vand.u32 %v1854, 4294901760
  %v1856 = vsub.f32 %v1854, %v1855
  %v1857 = vand.u32 %v1856, 4294901760
  %1858 = vmatpush.msra.mxu0 %v1857
  %v1859 = vand.u32 %v1032, 4294901760
  %v1860 = vsub.f32 %v1032, %v1859
  %v1861 = vand.u32 %v1860, 4294901760
  %v1862 = vsub.f32 %v1860, %v1861
  %v1863 = vand.u32 %v1862, 4294901760
  %1864 = vmatpush.msra.mxu0 %v1863
  %v1865 = vand.u32 %v1030, 4294901760
  %v1866 = vsub.f32 %v1030, %v1865
  %v1867 = vand.u32 %v1866, 4294901760
  %v1868 = vsub.f32 %v1866, %v1867
  %v1869 = vand.u32 %v1868, 4294901760
  %1870 = vmatpush.msra.mxu0 %v1869
  %v1871 = vand.u32 %v1028, 4294901760
  %v1872 = vsub.f32 %v1028, %v1871
  %v1873 = vand.u32 %v1872, 4294901760
  %v1874 = vsub.f32 %v1872, %v1873
  %v1875 = vand.u32 %v1874, 4294901760
  %1876 = vmatpush.msra.mxu0 %v1875
  %v1877 = vand.u32 %v1026, 4294901760
  %v1878 = vsub.f32 %v1026, %v1877
  %v1879 = vand.u32 %v1878, 4294901760
  %v1880 = vsub.f32 %v1878, %v1879
  %v1881 = vand.u32 %v1880, 4294901760
  %1882 = vmatpush.msra.mxu0 %v1881
  %v1883 = vand.u32 %v1024, 4294901760
  %v1884 = vsub.f32 %v1024, %v1883
  %v1885 = vand.u32 %v1884, 4294901760
  %v1886 = vsub.f32 %v1884, %v1885
  %v1887 = vand.u32 %v1886, 4294901760
  %1888 = vmatpush.msra.mxu0 %v1887
  %v1889 = vand.u32 %v1022, 4294901760
  %v1890 = vsub.f32 %v1022, %v1889
  %v1891 = vand.u32 %v1890, 4294901760
  %v1892 = vsub.f32 %v1890, %v1891
  %v1893 = vand.u32 %v1892, 4294901760
  %1894 = vmatpush.msra.mxu0 %v1893
  %v1895 = vand.u32 %v1020, 4294901760
  %v1896 = vsub.f32 %v1020, %v1895
  %v1897 = vand.u32 %v1896, 4294901760
  %v1898 = vsub.f32 %v1896, %v1897
  %v1899 = vand.u32 %v1898, 4294901760
  %1900 = vmatpush.msra.mxu0 %v1899
  %v1901 = vand.u32 %v1018, 4294901760
  %v1902 = vsub.f32 %v1018, %v1901
  %v1903 = vand.u32 %v1902, 4294901760
  %v1904 = vsub.f32 %v1902, %v1903
  %v1905 = vand.u32 %v1904, 4294901760
  %1906 = vmatpush.msra.mxu0 %v1905
  %v1907 = vand.u32 %v1016, 4294901760
  %v1908 = vsub.f32 %v1016, %v1907
  %v1909 = vand.u32 %v1908, 4294901760
  %v1910 = vsub.f32 %v1908, %v1909
  %v1911 = vand.u32 %v1910, 4294901760
  %1912 = vmatpush.msra.mxu0 %v1911
  %v1913 = vand.u32 %v1014, 4294901760
  %v1914 = vsub.f32 %v1014, %v1913
  %v1915 = vand.u32 %v1914, 4294901760
  %v1916 = vsub.f32 %v1914, %v1915
  %v1917 = vand.u32 %v1916, 4294901760
  %1918 = vmatpush.msra.mxu0 %v1917
  %v1919 = vand.u32 %v1012, 4294901760
  %v1920 = vsub.f32 %v1012, %v1919
  %v1921 = vand.u32 %v1920, 4294901760
  %v1922 = vsub.f32 %v1920, %v1921
  %v1923 = vand.u32 %v1922, 4294901760
  %1924 = vmatpush.msra.mxu0 %v1923
  %v1925 = vand.u32 %v1095, 4294901760
  %1926 = vmatmul.f32.gmra.mxu0 %v1925
  %v1927 = vpop.f32.mrf.mxu0
  %v1928 = vadd.f32 %v1827, %v1927
  %1929 = vdwg.mxu0
  %v1930 = vand.u32 %v1042, 4294901760
  %v1931 = vsub.f32 %v1042, %v1930
  %1932 = vmatpush.msra.mxu0 %v1931
  %v1933 = vand.u32 %v1040, 4294901760
  %v1934 = vsub.f32 %v1040, %v1933
  %1935 = vmatpush.msra.mxu0 %v1934
  %v1936 = vand.u32 %v1038, 4294901760
  %v1937 = vsub.f32 %v1038, %v1936
  %1938 = vmatpush.msra.mxu0 %v1937
  %v1939 = vand.u32 %v1036, 4294901760
  %v1940 = vsub.f32 %v1036, %v1939
  %1941 = vmatpush.msra.mxu0 %v1940
  %v1942 = vand.u32 %v1034, 4294901760
  %v1943 = vsub.f32 %v1034, %v1942
  %1944 = vmatpush.msra.mxu0 %v1943
  %v1945 = vand.u32 %v1032, 4294901760
  %v1946 = vsub.f32 %v1032, %v1945
  %1947 = vmatpush.msra.mxu0 %v1946
  %v1948 = vand.u32 %v1030, 4294901760
  %v1949 = vsub.f32 %v1030, %v1948
  %1950 = vmatpush.msra.mxu0 %v1949
  %v1951 = vand.u32 %v1028, 4294901760
  %v1952 = vsub.f32 %v1028, %v1951
  %1953 = vmatpush.msra.mxu0 %v1952
  %v1954 = vand.u32 %v1026, 4294901760
  %v1955 = vsub.f32 %v1026, %v1954
  %1956 = vmatpush.msra.mxu0 %v1955
  %v1957 = vand.u32 %v1024, 4294901760
  %v1958 = vsub.f32 %v1024, %v1957
  %1959 = vmatpush.msra.mxu0 %v1958
  %v1960 = vand.u32 %v1022, 4294901760
  %v1961 = vsub.f32 %v1022, %v1960
  %1962 = vmatpush.msra.mxu0 %v1961
  %v1963 = vand.u32 %v1020, 4294901760
  %v1964 = vsub.f32 %v1020, %v1963
  %1965 = vmatpush.msra.mxu0 %v1964
  %v1966 = vand.u32 %v1018, 4294901760
  %v1967 = vsub.f32 %v1018, %v1966
  %1968 = vmatpush.msra.mxu0 %v1967
  %v1969 = vand.u32 %v1016, 4294901760
  %v1970 = vsub.f32 %v1016, %v1969
  %1971 = vmatpush.msra.mxu0 %v1970
  %v1972 = vand.u32 %v1014, 4294901760
  %v1973 = vsub.f32 %v1014, %v1972
  %1974 = vmatpush.msra.mxu0 %v1973
  %v1975 = vand.u32 %v1012, 4294901760
  %v1976 = vsub.f32 %v1012, %v1975
  %1977 = vmatpush.msra.mxu0 %v1976
  %v1978 = vand.u32 %v1095, 4294901760
  %v1979 = vsub.f32 %v1095, %v1978
  %1980 = vmatmul.f32.gmra.mxu0 %v1979
  %v1981 = vpop.f32.mrf.mxu0
  %v1982 = vadd.f32 %v1928, %v1981
  %1983 = vdwg.mxu0
  %v1984 = vand.u32 %v1042, 4294901760
  %1985 = vmatpush.msra.mxu0 %v1984
  %v1986 = vand.u32 %v1040, 4294901760
  %1987 = vmatpush.msra.mxu0 %v1986
  %v1988 = vand.u32 %v1038, 4294901760
  %1989 = vmatpush.msra.mxu0 %v1988
  %v1990 = vand.u32 %v1036, 4294901760
  %1991 = vmatpush.msra.mxu0 %v1990
  %v1992 = vand.u32 %v1034, 4294901760
  %1993 = vmatpush.msra.mxu0 %v1992
  %v1994 = vand.u32 %v1032, 4294901760
  %1995 = vmatpush.msra.mxu0 %v1994
  %v1996 = vand.u32 %v1030, 4294901760
  %1997 = vmatpush.msra.mxu0 %v1996
  %v1998 = vand.u32 %v1028, 4294901760
  %1999 = vmatpush.msra.mxu0 %v1998
  %v2000 = vand.u32 %v1026, 4294901760
  %2001 = vmatpush.msra.mxu0 %v2000
  %v2002 = vand.u32 %v1024, 4294901760
  %2003 = vmatpush.msra.mxu0 %v2002
  %v2004 = vand.u32 %v1022, 4294901760
  %2005 = vmatpush.msra.mxu0 %v2004
  %v2006 = vand.u32 %v1020, 4294901760
  %2007 = vmatpush.msra.mxu0 %v2006
  %v2008 = vand.u32 %v1018, 4294901760
  %2009 = vmatpush.msra.mxu0 %v2008
  %v2010 = vand.u32 %v1016, 4294901760
  %2011 = vmatpush.msra.mxu0 %v2010
  %v2012 = vand.u32 %v1014, 4294901760
  %2013 = vmatpush.msra.mxu0 %v2012
  %v2014 = vand.u32 %v1012, 4294901760
  %2015 = vmatpush.msra.mxu0 %v2014
  %v2016 = vand.u32 %v1095, 4294901760
  %v2017 = vsub.f32 %v1095, %v2016
  %v2018 = vand.u32 %v2017, 4294901760
  %2019 = vmatmul.f32.gmra.mxu0 %v2018
  %v2020 = vpop.f32.mrf.mxu0
  %v2021 = vadd.f32 %v1982, %v2020
  %2022 = vdwg.mxu0
  %v2023 = vand.u32 %v1042, 4294901760
  %v2024 = vsub.f32 %v1042, %v2023
  %v2025 = vand.u32 %v2024, 4294901760
  %2026 = vmatpush.msra.mxu0 %v2025
  %v2027 = vand.u32 %v1040, 4294901760
  %v2028 = vsub.f32 %v1040, %v2027
  %v2029 = vand.u32 %v2028, 4294901760
  %2030 = vmatpush.msra.mxu0 %v2029
  %v2031 = vand.u32 %v1038, 4294901760
  %v2032 = vsub.f32 %v1038, %v2031
  %v2033 = vand.u32 %v2032, 4294901760
  %2034 = vmatpush.msra.mxu0 %v2033
  %v2035 = vand.u32 %v1036, 4294901760
  %v2036 = vsub.f32 %v1036, %v2035
  %v2037 = vand.u32 %v2036, 4294901760
  %2038 = vmatpush.msra.mxu0 %v2037
  %v2039 = vand.u32 %v1034, 4294901760
  %v2040 = vsub.f32 %v1034, %v2039
  %v2041 = vand.u32 %v2040, 4294901760
  %2042 = vmatpush.msra.mxu0 %v2041
  %v2043 = vand.u32 %v1032, 4294901760
  %v2044 = vsub.f32 %v1032, %v2043
  %v2045 = vand.u32 %v2044, 4294901760
  %2046 = vmatpush.msra.mxu0 %v2045
  %v2047 = vand.u32 %v1030, 4294901760
  %v2048 = vsub.f32 %v1030, %v2047
  %v2049 = vand.u32 %v2048, 4294901760
  %2050 = vmatpush.msra.mxu0 %v2049
  %v2051 = vand.u32 %v1028, 4294901760
  %v2052 = vsub.f32 %v1028, %v2051
  %v2053 = vand.u32 %v2052, 4294901760
  %2054 = vmatpush.msra.mxu0 %v2053
  %v2055 = vand.u32 %v1026, 4294901760
  %v2056 = vsub.f32 %v1026, %v2055
  %v2057 = vand.u32 %v2056, 4294901760
  %2058 = vmatpush.msra.mxu0 %v2057
  %v2059 = vand.u32 %v1024, 4294901760
  %v2060 = vsub.f32 %v1024, %v2059
  %v2061 = vand.u32 %v2060, 4294901760
  %2062 = vmatpush.msra.mxu0 %v2061
  %v2063 = vand.u32 %v1022, 4294901760
  %v2064 = vsub.f32 %v1022, %v2063
  %v2065 = vand.u32 %v2064, 4294901760
  %2066 = vmatpush.msra.mxu0 %v2065
  %v2067 = vand.u32 %v1020, 4294901760
  %v2068 = vsub.f32 %v1020, %v2067
  %v2069 = vand.u32 %v2068, 4294901760
  %2070 = vmatpush.msra.mxu0 %v2069
  %v2071 = vand.u32 %v1018, 4294901760
  %v2072 = vsub.f32 %v1018, %v2071
  %v2073 = vand.u32 %v2072, 4294901760
  %2074 = vmatpush.msra.mxu0 %v2073
  %v2075 = vand.u32 %v1016, 4294901760
  %v2076 = vsub.f32 %v1016, %v2075
  %v2077 = vand.u32 %v2076, 4294901760
  %2078 = vmatpush.msra.mxu0 %v2077
  %v2079 = vand.u32 %v1014, 4294901760
  %v2080 = vsub.f32 %v1014, %v2079
  %v2081 = vand.u32 %v2080, 4294901760
  %2082 = vmatpush.msra.mxu0 %v2081
  %v2083 = vand.u32 %v1012, 4294901760
  %v2084 = vsub.f32 %v1012, %v2083
  %v2085 = vand.u32 %v2084, 4294901760
  %2086 = vmatpush.msra.mxu0 %v2085
  %v2087 = vand.u32 %v1095, 4294901760
  %2088 = vmatmul.f32.gmra.mxu0 %v2087
  %v2089 = vpop.f32.mrf.mxu0
  %v2090 = vadd.f32 %v2021, %v2089
  %2091 = vdwg.mxu0
  %v2092 = vand.u32 %v1042, 4294901760
  %2093 = vmatpush.msra.mxu0 %v2092
  %v2094 = vand.u32 %v1040, 4294901760
  %2095 = vmatpush.msra.mxu0 %v2094
  %v2096 = vand.u32 %v1038, 4294901760
  %2097 = vmatpush.msra.mxu0 %v2096
  %v2098 = vand.u32 %v1036, 4294901760
  %2099 = vmatpush.msra.mxu0 %v2098
  %v2100 = vand.u32 %v1034, 4294901760
  %2101 = vmatpush.msra.mxu0 %v2100
  %v2102 = vand.u32 %v1032, 4294901760
  %2103 = vmatpush.msra.mxu0 %v2102
  %v2104 = vand.u32 %v1030, 4294901760
  %2105 = vmatpush.msra.mxu0 %v2104
  %v2106 = vand.u32 %v1028, 4294901760
  %2107 = vmatpush.msra.mxu0 %v2106
  %v2108 = vand.u32 %v1026, 4294901760
  %2109 = vmatpush.msra.mxu0 %v2108
  %v2110 = vand.u32 %v1024, 4294901760
  %2111 = vmatpush.msra.mxu0 %v2110
  %v2112 = vand.u32 %v1022, 4294901760
  %2113 = vmatpush.msra.mxu0 %v2112
  %v2114 = vand.u32 %v1020, 4294901760
  %2115 = vmatpush.msra.mxu0 %v2114
  %v2116 = vand.u32 %v1018, 4294901760
  %2117 = vmatpush.msra.mxu0 %v2116
  %v2118 = vand.u32 %v1016, 4294901760
  %2119 = vmatpush.msra.mxu0 %v2118
  %v2120 = vand.u32 %v1014, 4294901760
  %2121 = vmatpush.msra.mxu0 %v2120
  %v2122 = vand.u32 %v1012, 4294901760
  %2123 = vmatpush.msra.mxu0 %v2122
  %v2124 = vand.u32 %v1095, 4294901760
  %2125 = vmatmul.f32.gmra.mxu0 %v2124
  %v2126 = vpop.f32.mrf.mxu0
  %v2127 = vadd.f32 %v2090, %v2126
  %2128 = vdwg.mxu0
  %2129 = vmatpush.msra.mxu0 0.0
  %v2130 = vand.u32 %v1101, 4294901760
  %2131 = vmatpush.msra.mxu0 %v2130
  %v2132 = vand.u32 %v1070, 4294901760
  %2133 = vmatpush.msra.mxu0 %v2132
  %v2134 = vand.u32 %v1068, 4294901760
  %2135 = vmatpush.msra.mxu0 %v2134
  %v2136 = vand.u32 %v1066, 4294901760
  %2137 = vmatpush.msra.mxu0 %v2136
  %v2138 = vand.u32 %v1064, 4294901760
  %2139 = vmatpush.msra.mxu0 %v2138
  %v2140 = vand.u32 %v1062, 4294901760
  %2141 = vmatpush.msra.mxu0 %v2140
  %v2142 = vand.u32 %v1060, 4294901760
  %2143 = vmatpush.msra.mxu0 %v2142
  %v2144 = vand.u32 %v1058, 4294901760
  %2145 = vmatpush.msra.mxu0 %v2144
  %v2146 = vand.u32 %v1056, 4294901760
  %2147 = vmatpush.msra.mxu0 %v2146
  %v2148 = vand.u32 %v1054, 4294901760
  %2149 = vmatpush.msra.mxu0 %v2148
  %v2150 = vand.u32 %v1052, 4294901760
  %2151 = vmatpush.msra.mxu0 %v2150
  %v2152 = vand.u32 %v1050, 4294901760
  %2153 = vmatpush.msra.mxu0 %v2152
  %v2154 = vand.u32 %v1048, 4294901760
  %2155 = vmatpush.msra.mxu0 %v2154
  %v2156 = vand.u32 %v1046, 4294901760
  %2157 = vmatpush.msra.mxu0 %v2156
  %v2158 = vand.u32 %v1044, 4294901760
  %2159 = vmatpush.msra.mxu0 %v2158
  %v2160 = vand.u32 %v1098, 4294901760
  %v2161 = vsub.f32 %v1098, %v2160
  %v2162 = vand.u32 %v2161, 4294901760
  %v2163 = vsub.f32 %v2161, %v2162
  %v2164 = vand.u32 %v2163, 4294901760
  %2165 = vmatmul.f32.gmra.mxu0 %v2164
  %v2166 = vpop.f32.mrf.mxu0
  %v2167 = vadd.f32 %v2127, %v2166
  %2168 = vdwg.mxu0
  %2169 = vmatpush.msra.mxu0 0.0
  %v2170 = vand.u32 %v1101, 4294901760
  %v2171 = vsub.f32 %v1101, %v2170
  %v2172 = vand.u32 %v2171, 4294901760
  %v2173 = vsub.f32 %v2171, %v2172
  %v2174 = vand.u32 %v2173, 4294901760
  %2175 = vmatpush.msra.mxu0 %v2174
  %v2176 = vand.u32 %v1070, 4294901760
  %v2177 = vsub.f32 %v1070, %v2176
  %v2178 = vand.u32 %v2177, 4294901760
  %v2179 = vsub.f32 %v2177, %v2178
  %v2180 = vand.u32 %v2179, 4294901760
  %2181 = vmatpush.msra.mxu0 %v2180
  %v2182 = vand.u32 %v1068, 4294901760
  %v2183 = vsub.f32 %v1068, %v2182
  %v2184 = vand.u32 %v2183, 4294901760
  %v2185 = vsub.f32 %v2183, %v2184
  %v2186 = vand.u32 %v2185, 4294901760
  %2187 = vmatpush.msra.mxu0 %v2186
  %v2188 = vand.u32 %v1066, 4294901760
  %v2189 = vsub.f32 %v1066, %v2188
  %v2190 = vand.u32 %v2189, 4294901760
  %v2191 = vsub.f32 %v2189, %v2190
  %v2192 = vand.u32 %v2191, 4294901760
  %2193 = vmatpush.msra.mxu0 %v2192
  %v2194 = vand.u32 %v1064, 4294901760
  %v2195 = vsub.f32 %v1064, %v2194
  %v2196 = vand.u32 %v2195, 4294901760
  %v2197 = vsub.f32 %v2195, %v2196
  %v2198 = vand.u32 %v2197, 4294901760
  %2199 = vmatpush.msra.mxu0 %v2198
  %v2200 = vand.u32 %v1062, 4294901760
  %v2201 = vsub.f32 %v1062, %v2200
  %v2202 = vand.u32 %v2201, 4294901760
  %v2203 = vsub.f32 %v2201, %v2202
  %v2204 = vand.u32 %v2203, 4294901760
  %2205 = vmatpush.msra.mxu0 %v2204
  %v2206 = vand.u32 %v1060, 4294901760
  %v2207 = vsub.f32 %v1060, %v2206
  %v2208 = vand.u32 %v2207, 4294901760
  %v2209 = vsub.f32 %v2207, %v2208
  %v2210 = vand.u32 %v2209, 4294901760
  %2211 = vmatpush.msra.mxu0 %v2210
  %v2212 = vand.u32 %v1058, 4294901760
  %v2213 = vsub.f32 %v1058, %v2212
  %v2214 = vand.u32 %v2213, 4294901760
  %v2215 = vsub.f32 %v2213, %v2214
  %v2216 = vand.u32 %v2215, 4294901760
  %2217 = vmatpush.msra.mxu0 %v2216
  %v2218 = vand.u32 %v1056, 4294901760
  %v2219 = vsub.f32 %v1056, %v2218
  %v2220 = vand.u32 %v2219, 4294901760
  %v2221 = vsub.f32 %v2219, %v2220
  %v2222 = vand.u32 %v2221, 4294901760
  %2223 = vmatpush.msra.mxu0 %v2222
  %v2224 = vand.u32 %v1054, 4294901760
  %v2225 = vsub.f32 %v1054, %v2224
  %v2226 = vand.u32 %v2225, 4294901760
  %v2227 = vsub.f32 %v2225, %v2226
  %v2228 = vand.u32 %v2227, 4294901760
  %2229 = vmatpush.msra.mxu0 %v2228
  %v2230 = vand.u32 %v1052, 4294901760
  %v2231 = vsub.f32 %v1052, %v2230
  %v2232 = vand.u32 %v2231, 4294901760
  %v2233 = vsub.f32 %v2231, %v2232
  %v2234 = vand.u32 %v2233, 4294901760
  %2235 = vmatpush.msra.mxu0 %v2234
  %v2236 = vand.u32 %v1050, 4294901760
  %v2237 = vsub.f32 %v1050, %v2236
  %v2238 = vand.u32 %v2237, 4294901760
  %v2239 = vsub.f32 %v2237, %v2238
  %v2240 = vand.u32 %v2239, 4294901760
  %2241 = vmatpush.msra.mxu0 %v2240
  %v2242 = vand.u32 %v1048, 4294901760
  %v2243 = vsub.f32 %v1048, %v2242
  %v2244 = vand.u32 %v2243, 4294901760
  %v2245 = vsub.f32 %v2243, %v2244
  %v2246 = vand.u32 %v2245, 4294901760
  %2247 = vmatpush.msra.mxu0 %v2246
  %v2248 = vand.u32 %v1046, 4294901760
  %v2249 = vsub.f32 %v1046, %v2248
  %v2250 = vand.u32 %v2249, 4294901760
  %v2251 = vsub.f32 %v2249, %v2250
  %v2252 = vand.u32 %v2251, 4294901760
  %2253 = vmatpush.msra.mxu0 %v2252
  %v2254 = vand.u32 %v1044, 4294901760
  %v2255 = vsub.f32 %v1044, %v2254
  %v2256 = vand.u32 %v2255, 4294901760
  %v2257 = vsub.f32 %v2255, %v2256
  %v2258 = vand.u32 %v2257, 4294901760
  %2259 = vmatpush.msra.mxu0 %v2258
  %v2260 = vand.u32 %v1098, 4294901760
  %2261 = vmatmul.f32.gmra.mxu0 %v2260
  %v2262 = vpop.f32.mrf.mxu0
  %v2263 = vadd.f32 %v2167, %v2262
  %2264 = vdwg.mxu0
  %2265 = vmatpush.msra.mxu0 0.0
  %v2266 = vand.u32 %v1101, 4294901760
  %v2267 = vsub.f32 %v1101, %v2266
  %2268 = vmatpush.msra.mxu0 %v2267
  %v2269 = vand.u32 %v1070, 4294901760
  %v2270 = vsub.f32 %v1070, %v2269
  %2271 = vmatpush.msra.mxu0 %v2270
  %v2272 = vand.u32 %v1068, 4294901760
  %v2273 = vsub.f32 %v1068, %v2272
  %2274 = vmatpush.msra.mxu0 %v2273
  %v2275 = vand.u32 %v1066, 4294901760
  %v2276 = vsub.f32 %v1066, %v2275
  %2277 = vmatpush.msra.mxu0 %v2276
  %v2278 = vand.u32 %v1064, 4294901760
  %v2279 = vsub.f32 %v1064, %v2278
  %2280 = vmatpush.msra.mxu0 %v2279
  %v2281 = vand.u32 %v1062, 4294901760
  %v2282 = vsub.f32 %v1062, %v2281
  %2283 = vmatpush.msra.mxu0 %v2282
  %v2284 = vand.u32 %v1060, 4294901760
  %v2285 = vsub.f32 %v1060, %v2284
  %2286 = vmatpush.msra.mxu0 %v2285
  %v2287 = vand.u32 %v1058, 4294901760
  %v2288 = vsub.f32 %v1058, %v2287
  %2289 = vmatpush.msra.mxu0 %v2288
  %v2290 = vand.u32 %v1056, 4294901760
  %v2291 = vsub.f32 %v1056, %v2290
  %2292 = vmatpush.msra.mxu0 %v2291
  %v2293 = vand.u32 %v1054, 4294901760
  %v2294 = vsub.f32 %v1054, %v2293
  %2295 = vmatpush.msra.mxu0 %v2294
  %v2296 = vand.u32 %v1052, 4294901760
  %v2297 = vsub.f32 %v1052, %v2296
  %2298 = vmatpush.msra.mxu0 %v2297
  %v2299 = vand.u32 %v1050, 4294901760
  %v2300 = vsub.f32 %v1050, %v2299
  %2301 = vmatpush.msra.mxu0 %v2300
  %v2302 = vand.u32 %v1048, 4294901760
  %v2303 = vsub.f32 %v1048, %v2302
  %2304 = vmatpush.msra.mxu0 %v2303
  %v2305 = vand.u32 %v1046, 4294901760
  %v2306 = vsub.f32 %v1046, %v2305
  %2307 = vmatpush.msra.mxu0 %v2306
  %v2308 = vand.u32 %v1044, 4294901760
  %v2309 = vsub.f32 %v1044, %v2308
  %2310 = vmatpush.msra.mxu0 %v2309
  %v2311 = vand.u32 %v1098, 4294901760
  %v2312 = vsub.f32 %v1098, %v2311
  %2313 = vmatmul.f32.gmra.mxu0 %v2312
  %v2314 = vpop.f32.mrf.mxu0
  %v2315 = vadd.f32 %v2263, %v2314
  %2316 = vdwg.mxu0
  %2317 = vmatpush.msra.mxu0 0.0
  %v2318 = vand.u32 %v1101, 4294901760
  %2319 = vmatpush.msra.mxu0 %v2318
  %v2320 = vand.u32 %v1070, 4294901760
  %2321 = vmatpush.msra.mxu0 %v2320
  %v2322 = vand.u32 %v1068, 4294901760
  %2323 = vmatpush.msra.mxu0 %v2322
  %v2324 = vand.u32 %v1066, 4294901760
  %2325 = vmatpush.msra.mxu0 %v2324
  %v2326 = vand.u32 %v1064, 4294901760
  %2327 = vmatpush.msra.mxu0 %v2326
  %v2328 = vand.u32 %v1062, 4294901760
  %2329 = vmatpush.msra.mxu0 %v2328
  %v2330 = vand.u32 %v1060, 4294901760
  %2331 = vmatpush.msra.mxu0 %v2330
  %v2332 = vand.u32 %v1058, 4294901760
  %2333 = vmatpush.msra.mxu0 %v2332
  %v2334 = vand.u32 %v1056, 4294901760
  %2335 = vmatpush.msra.mxu0 %v2334
  %v2336 = vand.u32 %v1054, 4294901760
  %2337 = vmatpush.msra.mxu0 %v2336
  %v2338 = vand.u32 %v1052, 4294901760
  %2339 = vmatpush.msra.mxu0 %v2338
  %v2340 = vand.u32 %v1050, 4294901760
  %2341 = vmatpush.msra.mxu0 %v2340
  %v2342 = vand.u32 %v1048, 4294901760
  %2343 = vmatpush.msra.mxu0 %v2342
  %v2344 = vand.u32 %v1046, 4294901760
  %2345 = vmatpush.msra.mxu0 %v2344
  %v2346 = vand.u32 %v1044, 4294901760
  %2347 = vmatpush.msra.mxu0 %v2346
  %v2348 = vand.u32 %v1098, 4294901760
  %v2349 = vsub.f32 %v1098, %v2348
  %v2350 = vand.u32 %v2349, 4294901760
  %2351 = vmatmul.f32.gmra.mxu0 %v2350
  %v2352 = vpop.f32.mrf.mxu0
  %v2353 = vadd.f32 %v2315, %v2352
  %2354 = vdwg.mxu0
  %2355 = vmatpush.msra.mxu0 0.0
  %v2356 = vand.u32 %v1101, 4294901760
  %v2357 = vsub.f32 %v1101, %v2356
  %v2358 = vand.u32 %v2357, 4294901760
  %2359 = vmatpush.msra.mxu0 %v2358
  %v2360 = vand.u32 %v1070, 4294901760
  %v2361 = vsub.f32 %v1070, %v2360
  %v2362 = vand.u32 %v2361, 4294901760
  %2363 = vmatpush.msra.mxu0 %v2362
  %v2364 = vand.u32 %v1068, 4294901760
  %v2365 = vsub.f32 %v1068, %v2364
  %v2366 = vand.u32 %v2365, 4294901760
  %2367 = vmatpush.msra.mxu0 %v2366
  %v2368 = vand.u32 %v1066, 4294901760
  %v2369 = vsub.f32 %v1066, %v2368
  %v2370 = vand.u32 %v2369, 4294901760
  %2371 = vmatpush.msra.mxu0 %v2370
  %v2372 = vand.u32 %v1064, 4294901760
  %v2373 = vsub.f32 %v1064, %v2372
  %v2374 = vand.u32 %v2373, 4294901760
  %2375 = vmatpush.msra.mxu0 %v2374
  %v2376 = vand.u32 %v1062, 4294901760
  %v2377 = vsub.f32 %v1062, %v2376
  %v2378 = vand.u32 %v2377, 4294901760
  %2379 = vmatpush.msra.mxu0 %v2378
  %v2380 = vand.u32 %v1060, 4294901760
  %v2381 = vsub.f32 %v1060, %v2380
  %v2382 = vand.u32 %v2381, 4294901760
  %2383 = vmatpush.msra.mxu0 %v2382
  %v2384 = vand.u32 %v1058, 4294901760
  %v2385 = vsub.f32 %v1058, %v2384
  %v2386 = vand.u32 %v2385, 4294901760
  %2387 = vmatpush.msra.mxu0 %v2386
  %v2388 = vand.u32 %v1056, 4294901760
  %v2389 = vsub.f32 %v1056, %v2388
  %v2390 = vand.u32 %v2389, 4294901760
  %2391 = vmatpush.msra.mxu0 %v2390
  %v2392 = vand.u32 %v1054, 4294901760
  %v2393 = vsub.f32 %v1054, %v2392
  %v2394 = vand.u32 %v2393, 4294901760
  %2395 = vmatpush.msra.mxu0 %v2394
  %v2396 = vand.u32 %v1052, 4294901760
  %v2397 = vsub.f32 %v1052, %v2396
  %v2398 = vand.u32 %v2397, 4294901760
  %2399 = vmatpush.msra.mxu0 %v2398
  %v2400 = vand.u32 %v1050, 4294901760
  %v2401 = vsub.f32 %v1050, %v2400
  %v2402 = vand.u32 %v2401, 4294901760
  %2403 = vmatpush.msra.mxu0 %v2402
  %v2404 = vand.u32 %v1048, 4294901760
  %v2405 = vsub.f32 %v1048, %v2404
  %v2406 = vand.u32 %v2405, 4294901760
  %2407 = vmatpush.msra.mxu0 %v2406
  %v2408 = vand.u32 %v1046, 4294901760
  %v2409 = vsub.f32 %v1046, %v2408
  %v2410 = vand.u32 %v2409, 4294901760
  %2411 = vmatpush.msra.mxu0 %v2410
  %v2412 = vand.u32 %v1044, 4294901760
  %v2413 = vsub.f32 %v1044, %v2412
  %v2414 = vand.u32 %v2413, 4294901760
  %2415 = vmatpush.msra.mxu0 %v2414
  %v2416 = vand.u32 %v1098, 4294901760
  %2417 = vmatmul.f32.gmra.mxu0 %v2416
  %v2418 = vpop.f32.mrf.mxu0
  %v2419 = vadd.f32 %v2353, %v2418
  %2420 = vdwg.mxu0
  %2421 = vmatpush.msra.mxu0 0.0
  %v2422 = vand.u32 %v1101, 4294901760
  %2423 = vmatpush.msra.mxu0 %v2422
  %v2424 = vand.u32 %v1070, 4294901760
  %2425 = vmatpush.msra.mxu0 %v2424
  %v2426 = vand.u32 %v1068, 4294901760
  %2427 = vmatpush.msra.mxu0 %v2426
  %v2428 = vand.u32 %v1066, 4294901760
  %2429 = vmatpush.msra.mxu0 %v2428
  %v2430 = vand.u32 %v1064, 4294901760
  %2431 = vmatpush.msra.mxu0 %v2430
  %v2432 = vand.u32 %v1062, 4294901760
  %2433 = vmatpush.msra.mxu0 %v2432
  %v2434 = vand.u32 %v1060, 4294901760
  %2435 = vmatpush.msra.mxu0 %v2434
  %v2436 = vand.u32 %v1058, 4294901760
  %2437 = vmatpush.msra.mxu0 %v2436
  %v2438 = vand.u32 %v1056, 4294901760
  %2439 = vmatpush.msra.mxu0 %v2438
  %v2440 = vand.u32 %v1054, 4294901760
  %2441 = vmatpush.msra.mxu0 %v2440
  %v2442 = vand.u32 %v1052, 4294901760
  %2443 = vmatpush.msra.mxu0 %v2442
  %v2444 = vand.u32 %v1050, 4294901760
  %2445 = vmatpush.msra.mxu0 %v2444
  %v2446 = vand.u32 %v1048, 4294901760
  %2447 = vmatpush.msra.mxu0 %v2446
  %v2448 = vand.u32 %v1046, 4294901760
  %2449 = vmatpush.msra.mxu0 %v2448
  %v2450 = vand.u32 %v1044, 4294901760
  %2451 = vmatpush.msra.mxu0 %v2450
  %v2452 = vand.u32 %v1098, 4294901760
  %2453 = vmatmul.f32.gmra.mxu0 %v2452
  %v2454 = vpop.f32.mrf.mxu0
  %v2455 = vadd.f32 %v2419, %v2454
  %2456 = vdwg.mxu0
  %v2457 = vand.u32 %v979, 4294901760
  %2458 = vmatpush.msra.mxu0 %v2457
  %v2459 = vand.u32 %v977, 4294901760
  %2460 = vmatpush.msra.mxu0 %v2459
  %v2461 = vand.u32 %v975, 4294901760
  %2462 = vmatpush.msra.mxu0 %v2461
  %v2463 = vand.u32 %v973, 4294901760
  %2464 = vmatpush.msra.mxu0 %v2463
  %v2465 = vand.u32 %v971, 4294901760
  %2466 = vmatpush.msra.mxu0 %v2465
  %v2467 = vand.u32 %v969, 4294901760
  %2468 = vmatpush.msra.mxu0 %v2467
  %v2469 = vand.u32 %v967, 4294901760
  %2470 = vmatpush.msra.mxu0 %v2469
  %v2471 = vand.u32 %v965, 4294901760
  %2472 = vmatpush.msra.mxu0 %v2471
  %v2473 = vand.u32 %v963, 4294901760
  %2474 = vmatpush.msra.mxu0 %v2473
  %v2475 = vand.u32 %v961, 4294901760
  %2476 = vmatpush.msra.mxu0 %v2475
  %v2477 = vand.u32 %v959, 4294901760
  %2478 = vmatpush.msra.mxu0 %v2477
  %v2479 = vand.u32 %v957, 4294901760
  %2480 = vmatpush.msra.mxu0 %v2479
  %v2481 = vand.u32 %v955, 4294901760
  %2482 = vmatpush.msra.mxu0 %v2481
  %v2483 = vand.u32 %v953, 4294901760
  %2484 = vmatpush.msra.mxu0 %v2483
  %v2485 = vand.u32 %v951, 4294901760
  %2486 = vmatpush.msra.mxu0 %v2485
  %v2487 = vand.u32 %v949, 4294901760
  %2488 = vmatpush.msra.mxu0 %v2487
  %v2489 = vand.u32 %v1093, 4294901760
  %v2490 = vsub.f32 %v1093, %v2489
  %v2491 = vand.u32 %v2490, 4294901760
  %v2492 = vsub.f32 %v2490, %v2491
  %v2493 = vand.u32 %v2492, 4294901760
  %2494 = vmatmul.f32.gmra.mxu0 %v2493
  %v2495 = vpop.f32.mrf.mxu0
  %v2496 = vadd.f32 0.0, %v2495
  %2497 = vdwg.mxu0
  %v2498 = vand.u32 %v979, 4294901760
  %v2499 = vsub.f32 %v979, %v2498
  %v2500 = vand.u32 %v2499, 4294901760
  %v2501 = vsub.f32 %v2499, %v2500
  %v2502 = vand.u32 %v2501, 4294901760
  %2503 = vmatpush.msra.mxu0 %v2502
  %v2504 = vand.u32 %v977, 4294901760
  %v2505 = vsub.f32 %v977, %v2504
  %v2506 = vand.u32 %v2505, 4294901760
  %v2507 = vsub.f32 %v2505, %v2506
  %v2508 = vand.u32 %v2507, 4294901760
  %2509 = vmatpush.msra.mxu0 %v2508
  %v2510 = vand.u32 %v975, 4294901760
  %v2511 = vsub.f32 %v975, %v2510
  %v2512 = vand.u32 %v2511, 4294901760
  %v2513 = vsub.f32 %v2511, %v2512
  %v2514 = vand.u32 %v2513, 4294901760
  %2515 = vmatpush.msra.mxu0 %v2514
  %v2516 = vand.u32 %v973, 4294901760
  %v2517 = vsub.f32 %v973, %v2516
  %v2518 = vand.u32 %v2517, 4294901760
  %v2519 = vsub.f32 %v2517, %v2518
  %v2520 = vand.u32 %v2519, 4294901760
  %2521 = vmatpush.msra.mxu0 %v2520
  %v2522 = vand.u32 %v971, 4294901760
  %v2523 = vsub.f32 %v971, %v2522
  %v2524 = vand.u32 %v2523, 4294901760
  %v2525 = vsub.f32 %v2523, %v2524
  %v2526 = vand.u32 %v2525, 4294901760
  %2527 = vmatpush.msra.mxu0 %v2526
  %v2528 = vand.u32 %v969, 4294901760
  %v2529 = vsub.f32 %v969, %v2528
  %v2530 = vand.u32 %v2529, 4294901760
  %v2531 = vsub.f32 %v2529, %v2530
  %v2532 = vand.u32 %v2531, 4294901760
  %2533 = vmatpush.msra.mxu0 %v2532
  %v2534 = vand.u32 %v967, 4294901760
  %v2535 = vsub.f32 %v967, %v2534
  %v2536 = vand.u32 %v2535, 4294901760
  %v2537 = vsub.f32 %v2535, %v2536
  %v2538 = vand.u32 %v2537, 4294901760
  %2539 = vmatpush.msra.mxu0 %v2538
  %v2540 = vand.u32 %v965, 4294901760
  %v2541 = vsub.f32 %v965, %v2540
  %v2542 = vand.u32 %v2541, 4294901760
  %v2543 = vsub.f32 %v2541, %v2542
  %v2544 = vand.u32 %v2543, 4294901760
  %2545 = vmatpush.msra.mxu0 %v2544
  %v2546 = vand.u32 %v963, 4294901760
  %v2547 = vsub.f32 %v963, %v2546
  %v2548 = vand.u32 %v2547, 4294901760
  %v2549 = vsub.f32 %v2547, %v2548
  %v2550 = vand.u32 %v2549, 4294901760
  %2551 = vmatpush.msra.mxu0 %v2550
  %v2552 = vand.u32 %v961, 4294901760
  %v2553 = vsub.f32 %v961, %v2552
  %v2554 = vand.u32 %v2553, 4294901760
  %v2555 = vsub.f32 %v2553, %v2554
  %v2556 = vand.u32 %v2555, 4294901760
  %2557 = vmatpush.msra.mxu0 %v2556
  %v2558 = vand.u32 %v959, 4294901760
  %v2559 = vsub.f32 %v959, %v2558
  %v2560 = vand.u32 %v2559, 4294901760
  %v2561 = vsub.f32 %v2559, %v2560
  %v2562 = vand.u32 %v2561, 4294901760
  %2563 = vmatpush.msra.mxu0 %v2562
  %v2564 = vand.u32 %v957, 4294901760
  %v2565 = vsub.f32 %v957, %v2564
  %v2566 = vand.u32 %v2565, 4294901760
  %v2567 = vsub.f32 %v2565, %v2566
  %v2568 = vand.u32 %v2567, 4294901760
  %2569 = vmatpush.msra.mxu0 %v2568
  %v2570 = vand.u32 %v955, 4294901760
  %v2571 = vsub.f32 %v955, %v2570
  %v2572 = vand.u32 %v2571, 4294901760
  %v2573 = vsub.f32 %v2571, %v2572
  %v2574 = vand.u32 %v2573, 4294901760
  %2575 = vmatpush.msra.mxu0 %v2574
  %v2576 = vand.u32 %v953, 4294901760
  %v2577 = vsub.f32 %v953, %v2576
  %v2578 = vand.u32 %v2577, 4294901760
  %v2579 = vsub.f32 %v2577, %v2578
  %v2580 = vand.u32 %v2579, 4294901760
  %2581 = vmatpush.msra.mxu0 %v2580
  %v2582 = vand.u32 %v951, 4294901760
  %v2583 = vsub.f32 %v951, %v2582
  %v2584 = vand.u32 %v2583, 4294901760
  %v2585 = vsub.f32 %v2583, %v2584
  %v2586 = vand.u32 %v2585, 4294901760
  %2587 = vmatpush.msra.mxu0 %v2586
  %v2588 = vand.u32 %v949, 4294901760
  %v2589 = vsub.f32 %v949, %v2588
  %v2590 = vand.u32 %v2589, 4294901760
  %v2591 = vsub.f32 %v2589, %v2590
  %v2592 = vand.u32 %v2591, 4294901760
  %2593 = vmatpush.msra.mxu0 %v2592
  %v2594 = vand.u32 %v1093, 4294901760
  %2595 = vmatmul.f32.gmra.mxu0 %v2594
  %v2596 = vpop.f32.mrf.mxu0
  %v2597 = vadd.f32 %v2496, %v2596
  %2598 = vdwg.mxu0
  %v2599 = vand.u32 %v979, 4294901760
  %v2600 = vsub.f32 %v979, %v2599
  %2601 = vmatpush.msra.mxu0 %v2600
  %v2602 = vand.u32 %v977, 4294901760
  %v2603 = vsub.f32 %v977, %v2602
  %2604 = vmatpush.msra.mxu0 %v2603
  %v2605 = vand.u32 %v975, 4294901760
  %v2606 = vsub.f32 %v975, %v2605
  %2607 = vmatpush.msra.mxu0 %v2606
  %v2608 = vand.u32 %v973, 4294901760
  %v2609 = vsub.f32 %v973, %v2608
  %2610 = vmatpush.msra.mxu0 %v2609
  %v2611 = vand.u32 %v971, 4294901760
  %v2612 = vsub.f32 %v971, %v2611
  %2613 = vmatpush.msra.mxu0 %v2612
  %v2614 = vand.u32 %v969, 4294901760
  %v2615 = vsub.f32 %v969, %v2614
  %2616 = vmatpush.msra.mxu0 %v2615
  %v2617 = vand.u32 %v967, 4294901760
  %v2618 = vsub.f32 %v967, %v2617
  %2619 = vmatpush.msra.mxu0 %v2618
  %v2620 = vand.u32 %v965, 4294901760
  %v2621 = vsub.f32 %v965, %v2620
  %2622 = vmatpush.msra.mxu0 %v2621
  %v2623 = vand.u32 %v963, 4294901760
  %v2624 = vsub.f32 %v963, %v2623
  %2625 = vmatpush.msra.mxu0 %v2624
  %v2626 = vand.u32 %v961, 4294901760
  %v2627 = vsub.f32 %v961, %v2626
  %2628 = vmatpush.msra.mxu0 %v2627
  %v2629 = vand.u32 %v959, 4294901760
  %v2630 = vsub.f32 %v959, %v2629
  %2631 = vmatpush.msra.mxu0 %v2630
  %v2632 = vand.u32 %v957, 4294901760
  %v2633 = vsub.f32 %v957, %v2632
  %2634 = vmatpush.msra.mxu0 %v2633
  %v2635 = vand.u32 %v955, 4294901760
  %v2636 = vsub.f32 %v955, %v2635
  %2637 = vmatpush.msra.mxu0 %v2636
  %v2638 = vand.u32 %v953, 4294901760
  %v2639 = vsub.f32 %v953, %v2638
  %2640 = vmatpush.msra.mxu0 %v2639
  %v2641 = vand.u32 %v951, 4294901760
  %v2642 = vsub.f32 %v951, %v2641
  %2643 = vmatpush.msra.mxu0 %v2642
  %v2644 = vand.u32 %v949, 4294901760
  %v2645 = vsub.f32 %v949, %v2644
  %2646 = vmatpush.msra.mxu0 %v2645
  %v2647 = vand.u32 %v1093, 4294901760
  %v2648 = vsub.f32 %v1093, %v2647
  %2649 = vmatmul.f32.gmra.mxu0 %v2648
  %v2650 = vpop.f32.mrf.mxu0
  %v2651 = vadd.f32 %v2597, %v2650
  %2652 = vdwg.mxu0
  %v2653 = vand.u32 %v979, 4294901760
  %2654 = vmatpush.msra.mxu0 %v2653
  %v2655 = vand.u32 %v977, 4294901760
  %2656 = vmatpush.msra.mxu0 %v2655
  %v2657 = vand.u32 %v975, 4294901760
  %2658 = vmatpush.msra.mxu0 %v2657
  %v2659 = vand.u32 %v973, 4294901760
  %2660 = vmatpush.msra.mxu0 %v2659
  %v2661 = vand.u32 %v971, 4294901760
  %2662 = vmatpush.msra.mxu0 %v2661
  %v2663 = vand.u32 %v969, 4294901760
  %2664 = vmatpush.msra.mxu0 %v2663
  %v2665 = vand.u32 %v967, 4294901760
  %2666 = vmatpush.msra.mxu0 %v2665
  %v2667 = vand.u32 %v965, 4294901760
  %2668 = vmatpush.msra.mxu0 %v2667
  %v2669 = vand.u32 %v963, 4294901760
  %2670 = vmatpush.msra.mxu0 %v2669
  %v2671 = vand.u32 %v961, 4294901760
  %2672 = vmatpush.msra.mxu0 %v2671
  %v2673 = vand.u32 %v959, 4294901760
  %2674 = vmatpush.msra.mxu0 %v2673
  %v2675 = vand.u32 %v957, 4294901760
  %2676 = vmatpush.msra.mxu0 %v2675
  %v2677 = vand.u32 %v955, 4294901760
  %2678 = vmatpush.msra.mxu0 %v2677
  %v2679 = vand.u32 %v953, 4294901760
  %2680 = vmatpush.msra.mxu0 %v2679
  %v2681 = vand.u32 %v951, 4294901760
  %2682 = vmatpush.msra.mxu0 %v2681
  %v2683 = vand.u32 %v949, 4294901760
  %2684 = vmatpush.msra.mxu0 %v2683
  %v2685 = vand.u32 %v1093, 4294901760
  %v2686 = vsub.f32 %v1093, %v2685
  %v2687 = vand.u32 %v2686, 4294901760
  %2688 = vmatmul.f32.gmra.mxu0 %v2687
  %v2689 = vpop.f32.mrf.mxu0
  %v2690 = vadd.f32 %v2651, %v2689
  %2691 = vdwg.mxu0
  %v2692 = vand.u32 %v979, 4294901760
  %v2693 = vsub.f32 %v979, %v2692
  %v2694 = vand.u32 %v2693, 4294901760
  %2695 = vmatpush.msra.mxu0 %v2694
  %v2696 = vand.u32 %v977, 4294901760
  %v2697 = vsub.f32 %v977, %v2696
  %v2698 = vand.u32 %v2697, 4294901760
  %2699 = vmatpush.msra.mxu0 %v2698
  %v2700 = vand.u32 %v975, 4294901760
  %v2701 = vsub.f32 %v975, %v2700
  %v2702 = vand.u32 %v2701, 4294901760
  %2703 = vmatpush.msra.mxu0 %v2702
  %v2704 = vand.u32 %v973, 4294901760
  %v2705 = vsub.f32 %v973, %v2704
  %v2706 = vand.u32 %v2705, 4294901760
  %2707 = vmatpush.msra.mxu0 %v2706
  %v2708 = vand.u32 %v971, 4294901760
  %v2709 = vsub.f32 %v971, %v2708
  %v2710 = vand.u32 %v2709, 4294901760
  %2711 = vmatpush.msra.mxu0 %v2710
  %v2712 = vand.u32 %v969, 4294901760
  %v2713 = vsub.f32 %v969, %v2712
  %v2714 = vand.u32 %v2713, 4294901760
  %2715 = vmatpush.msra.mxu0 %v2714
  %v2716 = vand.u32 %v967, 4294901760
  %v2717 = vsub.f32 %v967, %v2716
  %v2718 = vand.u32 %v2717, 4294901760
  %2719 = vmatpush.msra.mxu0 %v2718
  %v2720 = vand.u32 %v965, 4294901760
  %v2721 = vsub.f32 %v965, %v2720
  %v2722 = vand.u32 %v2721, 4294901760
  %2723 = vmatpush.msra.mxu0 %v2722
  %v2724 = vand.u32 %v963, 4294901760
  %v2725 = vsub.f32 %v963, %v2724
  %v2726 = vand.u32 %v2725, 4294901760
  %2727 = vmatpush.msra.mxu0 %v2726
  %v2728 = vand.u32 %v961, 4294901760
  %v2729 = vsub.f32 %v961, %v2728
  %v2730 = vand.u32 %v2729, 4294901760
  %2731 = vmatpush.msra.mxu0 %v2730
  %v2732 = vand.u32 %v959, 4294901760
  %v2733 = vsub.f32 %v959, %v2732
  %v2734 = vand.u32 %v2733, 4294901760
  %2735 = vmatpush.msra.mxu0 %v2734
  %v2736 = vand.u32 %v957, 4294901760
  %v2737 = vsub.f32 %v957, %v2736
  %v2738 = vand.u32 %v2737, 4294901760
  %2739 = vmatpush.msra.mxu0 %v2738
  %v2740 = vand.u32 %v955, 4294901760
  %v2741 = vsub.f32 %v955, %v2740
  %v2742 = vand.u32 %v2741, 4294901760
  %2743 = vmatpush.msra.mxu0 %v2742
  %v2744 = vand.u32 %v953, 4294901760
  %v2745 = vsub.f32 %v953, %v2744
  %v2746 = vand.u32 %v2745, 4294901760
  %2747 = vmatpush.msra.mxu0 %v2746
  %v2748 = vand.u32 %v951, 4294901760
  %v2749 = vsub.f32 %v951, %v2748
  %v2750 = vand.u32 %v2749, 4294901760
  %2751 = vmatpush.msra.mxu0 %v2750
  %v2752 = vand.u32 %v949, 4294901760
  %v2753 = vsub.f32 %v949, %v2752
  %v2754 = vand.u32 %v2753, 4294901760
  %2755 = vmatpush.msra.mxu0 %v2754
  %v2756 = vand.u32 %v1093, 4294901760
  %2757 = vmatmul.f32.gmra.mxu0 %v2756
  %v2758 = vpop.f32.mrf.mxu0
  %v2759 = vadd.f32 %v2690, %v2758
  %2760 = vdwg.mxu0
  %v2761 = vand.u32 %v979, 4294901760
  %2762 = vmatpush.msra.mxu0 %v2761
  %v2763 = vand.u32 %v977, 4294901760
  %2764 = vmatpush.msra.mxu0 %v2763
  %v2765 = vand.u32 %v975, 4294901760
  %2766 = vmatpush.msra.mxu0 %v2765
  %v2767 = vand.u32 %v973, 4294901760
  %2768 = vmatpush.msra.mxu0 %v2767
  %v2769 = vand.u32 %v971, 4294901760
  %2770 = vmatpush.msra.mxu0 %v2769
  %v2771 = vand.u32 %v969, 4294901760
  %2772 = vmatpush.msra.mxu0 %v2771
  %v2773 = vand.u32 %v967, 4294901760
  %2774 = vmatpush.msra.mxu0 %v2773
  %v2775 = vand.u32 %v965, 4294901760
  %2776 = vmatpush.msra.mxu0 %v2775
  %v2777 = vand.u32 %v963, 4294901760
  %2778 = vmatpush.msra.mxu0 %v2777
  %v2779 = vand.u32 %v961, 4294901760
  %2780 = vmatpush.msra.mxu0 %v2779
  %v2781 = vand.u32 %v959, 4294901760
  %2782 = vmatpush.msra.mxu0 %v2781
  %v2783 = vand.u32 %v957, 4294901760
  %2784 = vmatpush.msra.mxu0 %v2783
  %v2785 = vand.u32 %v955, 4294901760
  %2786 = vmatpush.msra.mxu0 %v2785
  %v2787 = vand.u32 %v953, 4294901760
  %2788 = vmatpush.msra.mxu0 %v2787
  %v2789 = vand.u32 %v951, 4294901760
  %2790 = vmatpush.msra.mxu0 %v2789
  %v2791 = vand.u32 %v949, 4294901760
  %2792 = vmatpush.msra.mxu0 %v2791
  %v2793 = vand.u32 %v1093, 4294901760
  %2794 = vmatmul.f32.gmra.mxu0 %v2793
  %v2795 = vpop.f32.mrf.mxu0
  %v2796 = vadd.f32 %v2759, %v2795
  %2797 = vdwg.mxu0
  %v2798 = vand.u32 %v1011, 4294901760
  %2799 = vmatpush.msra.mxu0 %v2798
  %v2800 = vand.u32 %v1009, 4294901760
  %2801 = vmatpush.msra.mxu0 %v2800
  %v2802 = vand.u32 %v1007, 4294901760
  %2803 = vmatpush.msra.mxu0 %v2802
  %v2804 = vand.u32 %v1005, 4294901760
  %2805 = vmatpush.msra.mxu0 %v2804
  %v2806 = vand.u32 %v1003, 4294901760
  %2807 = vmatpush.msra.mxu0 %v2806
  %v2808 = vand.u32 %v1001, 4294901760
  %2809 = vmatpush.msra.mxu0 %v2808
  %v2810 = vand.u32 %v999, 4294901760
  %2811 = vmatpush.msra.mxu0 %v2810
  %v2812 = vand.u32 %v997, 4294901760
  %2813 = vmatpush.msra.mxu0 %v2812
  %v2814 = vand.u32 %v995, 4294901760
  %2815 = vmatpush.msra.mxu0 %v2814
  %v2816 = vand.u32 %v993, 4294901760
  %2817 = vmatpush.msra.mxu0 %v2816
  %v2818 = vand.u32 %v991, 4294901760
  %2819 = vmatpush.msra.mxu0 %v2818
  %v2820 = vand.u32 %v989, 4294901760
  %2821 = vmatpush.msra.mxu0 %v2820
  %v2822 = vand.u32 %v987, 4294901760
  %2823 = vmatpush.msra.mxu0 %v2822
  %v2824 = vand.u32 %v985, 4294901760
  %2825 = vmatpush.msra.mxu0 %v2824
  %v2826 = vand.u32 %v983, 4294901760
  %2827 = vmatpush.msra.mxu0 %v2826
  %v2828 = vand.u32 %v981, 4294901760
  %2829 = vmatpush.msra.mxu0 %v2828
  %v2830 = vand.u32 %v1094, 4294901760
  %v2831 = vsub.f32 %v1094, %v2830
  %v2832 = vand.u32 %v2831, 4294901760
  %v2833 = vsub.f32 %v2831, %v2832
  %v2834 = vand.u32 %v2833, 4294901760
  %2835 = vmatmul.f32.gmra.mxu0 %v2834
  %v2836 = vpop.f32.mrf.mxu0
  %v2837 = vadd.f32 %v2796, %v2836
  %2838 = vdwg.mxu0
  %v2839 = vand.u32 %v1011, 4294901760
  %v2840 = vsub.f32 %v1011, %v2839
  %v2841 = vand.u32 %v2840, 4294901760
  %v2842 = vsub.f32 %v2840, %v2841
  %v2843 = vand.u32 %v2842, 4294901760
  %2844 = vmatpush.msra.mxu0 %v2843
  %v2845 = vand.u32 %v1009, 4294901760
  %v2846 = vsub.f32 %v1009, %v2845
  %v2847 = vand.u32 %v2846, 4294901760
  %v2848 = vsub.f32 %v2846, %v2847
  %v2849 = vand.u32 %v2848, 4294901760
  %2850 = vmatpush.msra.mxu0 %v2849
  %v2851 = vand.u32 %v1007, 4294901760
  %v2852 = vsub.f32 %v1007, %v2851
  %v2853 = vand.u32 %v2852, 4294901760
  %v2854 = vsub.f32 %v2852, %v2853
  %v2855 = vand.u32 %v2854, 4294901760
  %2856 = vmatpush.msra.mxu0 %v2855
  %v2857 = vand.u32 %v1005, 4294901760
  %v2858 = vsub.f32 %v1005, %v2857
  %v2859 = vand.u32 %v2858, 4294901760
  %v2860 = vsub.f32 %v2858, %v2859
  %v2861 = vand.u32 %v2860, 4294901760
  %2862 = vmatpush.msra.mxu0 %v2861
  %v2863 = vand.u32 %v1003, 4294901760
  %v2864 = vsub.f32 %v1003, %v2863
  %v2865 = vand.u32 %v2864, 4294901760
  %v2866 = vsub.f32 %v2864, %v2865
  %v2867 = vand.u32 %v2866, 4294901760
  %2868 = vmatpush.msra.mxu0 %v2867
  %v2869 = vand.u32 %v1001, 4294901760
  %v2870 = vsub.f32 %v1001, %v2869
  %v2871 = vand.u32 %v2870, 4294901760
  %v2872 = vsub.f32 %v2870, %v2871
  %v2873 = vand.u32 %v2872, 4294901760
  %2874 = vmatpush.msra.mxu0 %v2873
  %v2875 = vand.u32 %v999, 4294901760
  %v2876 = vsub.f32 %v999, %v2875
  %v2877 = vand.u32 %v2876, 4294901760
  %v2878 = vsub.f32 %v2876, %v2877
  %v2879 = vand.u32 %v2878, 4294901760
  %2880 = vmatpush.msra.mxu0 %v2879
  %v2881 = vand.u32 %v997, 4294901760
  %v2882 = vsub.f32 %v997, %v2881
  %v2883 = vand.u32 %v2882, 4294901760
  %v2884 = vsub.f32 %v2882, %v2883
  %v2885 = vand.u32 %v2884, 4294901760
  %2886 = vmatpush.msra.mxu0 %v2885
  %v2887 = vand.u32 %v995, 4294901760
  %v2888 = vsub.f32 %v995, %v2887
  %v2889 = vand.u32 %v2888, 4294901760
  %v2890 = vsub.f32 %v2888, %v2889
  %v2891 = vand.u32 %v2890, 4294901760
  %2892 = vmatpush.msra.mxu0 %v2891
  %v2893 = vand.u32 %v993, 4294901760
  %v2894 = vsub.f32 %v993, %v2893
  %v2895 = vand.u32 %v2894, 4294901760
  %v2896 = vsub.f32 %v2894, %v2895
  %v2897 = vand.u32 %v2896, 4294901760
  %2898 = vmatpush.msra.mxu0 %v2897
  %v2899 = vand.u32 %v991, 4294901760
  %v2900 = vsub.f32 %v991, %v2899
  %v2901 = vand.u32 %v2900, 4294901760
  %v2902 = vsub.f32 %v2900, %v2901
  %v2903 = vand.u32 %v2902, 4294901760
  %2904 = vmatpush.msra.mxu0 %v2903
  %v2905 = vand.u32 %v989, 4294901760
  %v2906 = vsub.f32 %v989, %v2905
  %v2907 = vand.u32 %v2906, 4294901760
  %v2908 = vsub.f32 %v2906, %v2907
  %v2909 = vand.u32 %v2908, 4294901760
  %2910 = vmatpush.msra.mxu0 %v2909
  %v2911 = vand.u32 %v987, 4294901760
  %v2912 = vsub.f32 %v987, %v2911
  %v2913 = vand.u32 %v2912, 4294901760
  %v2914 = vsub.f32 %v2912, %v2913
  %v2915 = vand.u32 %v2914, 4294901760
  %2916 = vmatpush.msra.mxu0 %v2915
  %v2917 = vand.u32 %v985, 4294901760
  %v2918 = vsub.f32 %v985, %v2917
  %v2919 = vand.u32 %v2918, 4294901760
  %v2920 = vsub.f32 %v2918, %v2919
  %v2921 = vand.u32 %v2920, 4294901760
  %2922 = vmatpush.msra.mxu0 %v2921
  %v2923 = vand.u32 %v983, 4294901760
  %v2924 = vsub.f32 %v983, %v2923
  %v2925 = vand.u32 %v2924, 4294901760
  %v2926 = vsub.f32 %v2924, %v2925
  %v2927 = vand.u32 %v2926, 4294901760
  %2928 = vmatpush.msra.mxu0 %v2927
  %v2929 = vand.u32 %v981, 4294901760
  %v2930 = vsub.f32 %v981, %v2929
  %v2931 = vand.u32 %v2930, 4294901760
  %v2932 = vsub.f32 %v2930, %v2931
  %v2933 = vand.u32 %v2932, 4294901760
  %2934 = vmatpush.msra.mxu0 %v2933
  %v2935 = vand.u32 %v1094, 4294901760
  %2936 = vmatmul.f32.gmra.mxu0 %v2935
  %v2937 = vpop.f32.mrf.mxu0
  %v2938 = vadd.f32 %v2837, %v2937
  %2939 = vdwg.mxu0
  %v2940 = vand.u32 %v1011, 4294901760
  %v2941 = vsub.f32 %v1011, %v2940
  %2942 = vmatpush.msra.mxu0 %v2941
  %v2943 = vand.u32 %v1009, 4294901760
  %v2944 = vsub.f32 %v1009, %v2943
  %2945 = vmatpush.msra.mxu0 %v2944
  %v2946 = vand.u32 %v1007, 4294901760
  %v2947 = vsub.f32 %v1007, %v2946
  %2948 = vmatpush.msra.mxu0 %v2947
  %v2949 = vand.u32 %v1005, 4294901760
  %v2950 = vsub.f32 %v1005, %v2949
  %2951 = vmatpush.msra.mxu0 %v2950
  %v2952 = vand.u32 %v1003, 4294901760
  %v2953 = vsub.f32 %v1003, %v2952
  %2954 = vmatpush.msra.mxu0 %v2953
  %v2955 = vand.u32 %v1001, 4294901760
  %v2956 = vsub.f32 %v1001, %v2955
  %2957 = vmatpush.msra.mxu0 %v2956
  %v2958 = vand.u32 %v999, 4294901760
  %v2959 = vsub.f32 %v999, %v2958
  %2960 = vmatpush.msra.mxu0 %v2959
  %v2961 = vand.u32 %v997, 4294901760
  %v2962 = vsub.f32 %v997, %v2961
  %2963 = vmatpush.msra.mxu0 %v2962
  %v2964 = vand.u32 %v995, 4294901760
  %v2965 = vsub.f32 %v995, %v2964
  %2966 = vmatpush.msra.mxu0 %v2965
  %v2967 = vand.u32 %v993, 4294901760
  %v2968 = vsub.f32 %v993, %v2967
  %2969 = vmatpush.msra.mxu0 %v2968
  %v2970 = vand.u32 %v991, 4294901760
  %v2971 = vsub.f32 %v991, %v2970
  %2972 = vmatpush.msra.mxu0 %v2971
  %v2973 = vand.u32 %v989, 4294901760
  %v2974 = vsub.f32 %v989, %v2973
  %2975 = vmatpush.msra.mxu0 %v2974
  %v2976 = vand.u32 %v987, 4294901760
  %v2977 = vsub.f32 %v987, %v2976
  %2978 = vmatpush.msra.mxu0 %v2977
  %v2979 = vand.u32 %v985, 4294901760
  %v2980 = vsub.f32 %v985, %v2979
  %2981 = vmatpush.msra.mxu0 %v2980
  %v2982 = vand.u32 %v983, 4294901760
  %v2983 = vsub.f32 %v983, %v2982
  %2984 = vmatpush.msra.mxu0 %v2983
  %v2985 = vand.u32 %v981, 4294901760
  %v2986 = vsub.f32 %v981, %v2985
  %2987 = vmatpush.msra.mxu0 %v2986
  %v2988 = vand.u32 %v1094, 4294901760
  %v2989 = vsub.f32 %v1094, %v2988
  %2990 = vmatmul.f32.gmra.mxu0 %v2989
  %v2991 = vpop.f32.mrf.mxu0
  %v2992 = vadd.f32 %v2938, %v2991
  %2993 = vdwg.mxu0
  %v2994 = vand.u32 %v1011, 4294901760
  %2995 = vmatpush.msra.mxu0 %v2994
  %v2996 = vand.u32 %v1009, 4294901760
  %2997 = vmatpush.msra.mxu0 %v2996
  %v2998 = vand.u32 %v1007, 4294901760
  %2999 = vmatpush.msra.mxu0 %v2998
  %v3000 = vand.u32 %v1005, 4294901760
  %3001 = vmatpush.msra.mxu0 %v3000
  %v3002 = vand.u32 %v1003, 4294901760
  %3003 = vmatpush.msra.mxu0 %v3002
  %v3004 = vand.u32 %v1001, 4294901760
  %3005 = vmatpush.msra.mxu0 %v3004
  %v3006 = vand.u32 %v999, 4294901760
  %3007 = vmatpush.msra.mxu0 %v3006
  %v3008 = vand.u32 %v997, 4294901760
  %3009 = vmatpush.msra.mxu0 %v3008
  %v3010 = vand.u32 %v995, 4294901760
  %3011 = vmatpush.msra.mxu0 %v3010
  %v3012 = vand.u32 %v993, 4294901760
  %3013 = vmatpush.msra.mxu0 %v3012
  %v3014 = vand.u32 %v991, 4294901760
  %3015 = vmatpush.msra.mxu0 %v3014
  %v3016 = vand.u32 %v989, 4294901760
  %3017 = vmatpush.msra.mxu0 %v3016
  %v3018 = vand.u32 %v987, 4294901760
  %3019 = vmatpush.msra.mxu0 %v3018
  %v3020 = vand.u32 %v985, 4294901760
  %3021 = vmatpush.msra.mxu0 %v3020
  %v3022 = vand.u32 %v983, 4294901760
  %3023 = vmatpush.msra.mxu0 %v3022
  %v3024 = vand.u32 %v981, 4294901760
  %3025 = vmatpush.msra.mxu0 %v3024
  %v3026 = vand.u32 %v1094, 4294901760
  %v3027 = vsub.f32 %v1094, %v3026
  %v3028 = vand.u32 %v3027, 4294901760
  %3029 = vmatmul.f32.gmra.mxu0 %v3028
  %v3030 = vpop.f32.mrf.mxu0
  %v3031 = vadd.f32 %v2992, %v3030
  %3032 = vdwg.mxu0
  %v3033 = vand.u32 %v1011, 4294901760
  %v3034 = vsub.f32 %v1011, %v3033
  %v3035 = vand.u32 %v3034, 4294901760
  %3036 = vmatpush.msra.mxu0 %v3035
  %v3037 = vand.u32 %v1009, 4294901760
  %v3038 = vsub.f32 %v1009, %v3037
  %v3039 = vand.u32 %v3038, 4294901760
  %3040 = vmatpush.msra.mxu0 %v3039
  %v3041 = vand.u32 %v1007, 4294901760
  %v3042 = vsub.f32 %v1007, %v3041
  %v3043 = vand.u32 %v3042, 4294901760
  %3044 = vmatpush.msra.mxu0 %v3043
  %v3045 = vand.u32 %v1005, 4294901760
  %v3046 = vsub.f32 %v1005, %v3045
  %v3047 = vand.u32 %v3046, 4294901760
  %3048 = vmatpush.msra.mxu0 %v3047
  %v3049 = vand.u32 %v1003, 4294901760
  %v3050 = vsub.f32 %v1003, %v3049
  %v3051 = vand.u32 %v3050, 4294901760
  %3052 = vmatpush.msra.mxu0 %v3051
  %v3053 = vand.u32 %v1001, 4294901760
  %v3054 = vsub.f32 %v1001, %v3053
  %v3055 = vand.u32 %v3054, 4294901760
  %3056 = vmatpush.msra.mxu0 %v3055
  %v3057 = vand.u32 %v999, 4294901760
  %v3058 = vsub.f32 %v999, %v3057
  %v3059 = vand.u32 %v3058, 4294901760
  %3060 = vmatpush.msra.mxu0 %v3059
  %v3061 = vand.u32 %v997, 4294901760
  %v3062 = vsub.f32 %v997, %v3061
  %v3063 = vand.u32 %v3062, 4294901760
  %3064 = vmatpush.msra.mxu0 %v3063
  %v3065 = vand.u32 %v995, 4294901760
  %v3066 = vsub.f32 %v995, %v3065
  %v3067 = vand.u32 %v3066, 4294901760
  %3068 = vmatpush.msra.mxu0 %v3067
  %v3069 = vand.u32 %v993, 4294901760
  %v3070 = vsub.f32 %v993, %v3069
  %v3071 = vand.u32 %v3070, 4294901760
  %3072 = vmatpush.msra.mxu0 %v3071
  %v3073 = vand.u32 %v991, 4294901760
  %v3074 = vsub.f32 %v991, %v3073
  %v3075 = vand.u32 %v3074, 4294901760
  %3076 = vmatpush.msra.mxu0 %v3075
  %v3077 = vand.u32 %v989, 4294901760
  %v3078 = vsub.f32 %v989, %v3077
  %v3079 = vand.u32 %v3078, 4294901760
  %3080 = vmatpush.msra.mxu0 %v3079
  %v3081 = vand.u32 %v987, 4294901760
  %v3082 = vsub.f32 %v987, %v3081
  %v3083 = vand.u32 %v3082, 4294901760
  %3084 = vmatpush.msra.mxu0 %v3083
  %v3085 = vand.u32 %v985, 4294901760
  %v3086 = vsub.f32 %v985, %v3085
  %v3087 = vand.u32 %v3086, 4294901760
  %3088 = vmatpush.msra.mxu0 %v3087
  %v3089 = vand.u32 %v983, 4294901760
  %v3090 = vsub.f32 %v983, %v3089
  %v3091 = vand.u32 %v3090, 4294901760
  %3092 = vmatpush.msra.mxu0 %v3091
  %v3093 = vand.u32 %v981, 4294901760
  %v3094 = vsub.f32 %v981, %v3093
  %v3095 = vand.u32 %v3094, 4294901760
  %3096 = vmatpush.msra.mxu0 %v3095
  %v3097 = vand.u32 %v1094, 4294901760
  %3098 = vmatmul.f32.gmra.mxu0 %v3097
  %v3099 = vpop.f32.mrf.mxu0
  %v3100 = vadd.f32 %v3031, %v3099
  %3101 = vdwg.mxu0
  %v3102 = vand.u32 %v1011, 4294901760
  %3103 = vmatpush.msra.mxu0 %v3102
  %v3104 = vand.u32 %v1009, 4294901760
  %3105 = vmatpush.msra.mxu0 %v3104
  %v3106 = vand.u32 %v1007, 4294901760
  %3107 = vmatpush.msra.mxu0 %v3106
  %v3108 = vand.u32 %v1005, 4294901760
  %3109 = vmatpush.msra.mxu0 %v3108
  %v3110 = vand.u32 %v1003, 4294901760
  %3111 = vmatpush.msra.mxu0 %v3110
  %v3112 = vand.u32 %v1001, 4294901760
  %3113 = vmatpush.msra.mxu0 %v3112
  %v3114 = vand.u32 %v999, 4294901760
  %3115 = vmatpush.msra.mxu0 %v3114
  %v3116 = vand.u32 %v997, 4294901760
  %3117 = vmatpush.msra.mxu0 %v3116
  %v3118 = vand.u32 %v995, 4294901760
  %3119 = vmatpush.msra.mxu0 %v3118
  %v3120 = vand.u32 %v993, 4294901760
  %3121 = vmatpush.msra.mxu0 %v3120
  %v3122 = vand.u32 %v991, 4294901760
  %3123 = vmatpush.msra.mxu0 %v3122
  %v3124 = vand.u32 %v989, 4294901760
  %3125 = vmatpush.msra.mxu0 %v3124
  %v3126 = vand.u32 %v987, 4294901760
  %3127 = vmatpush.msra.mxu0 %v3126
  %v3128 = vand.u32 %v985, 4294901760
  %3129 = vmatpush.msra.mxu0 %v3128
  %v3130 = vand.u32 %v983, 4294901760
  %3131 = vmatpush.msra.mxu0 %v3130
  %v3132 = vand.u32 %v981, 4294901760
  %3133 = vmatpush.msra.mxu0 %v3132
  %v3134 = vand.u32 %v1094, 4294901760
  %3135 = vmatmul.f32.gmra.mxu0 %v3134
  %v3136 = vpop.f32.mrf.mxu0
  %v3137 = vadd.f32 %v3100, %v3136
  %3138 = vdwg.mxu0
  %v3139 = vand.u32 %v1043, 4294901760
  %3140 = vmatpush.msra.mxu0 %v3139
  %v3141 = vand.u32 %v1041, 4294901760
  %3142 = vmatpush.msra.mxu0 %v3141
  %v3143 = vand.u32 %v1039, 4294901760
  %3144 = vmatpush.msra.mxu0 %v3143
  %v3145 = vand.u32 %v1037, 4294901760
  %3146 = vmatpush.msra.mxu0 %v3145
  %v3147 = vand.u32 %v1035, 4294901760
  %3148 = vmatpush.msra.mxu0 %v3147
  %v3149 = vand.u32 %v1033, 4294901760
  %3150 = vmatpush.msra.mxu0 %v3149
  %v3151 = vand.u32 %v1031, 4294901760
  %3152 = vmatpush.msra.mxu0 %v3151
  %v3153 = vand.u32 %v1029, 4294901760
  %3154 = vmatpush.msra.mxu0 %v3153
  %v3155 = vand.u32 %v1027, 4294901760
  %3156 = vmatpush.msra.mxu0 %v3155
  %v3157 = vand.u32 %v1025, 4294901760
  %3158 = vmatpush.msra.mxu0 %v3157
  %v3159 = vand.u32 %v1023, 4294901760
  %3160 = vmatpush.msra.mxu0 %v3159
  %v3161 = vand.u32 %v1021, 4294901760
  %3162 = vmatpush.msra.mxu0 %v3161
  %v3163 = vand.u32 %v1019, 4294901760
  %3164 = vmatpush.msra.mxu0 %v3163
  %v3165 = vand.u32 %v1017, 4294901760
  %3166 = vmatpush.msra.mxu0 %v3165
  %v3167 = vand.u32 %v1015, 4294901760
  %3168 = vmatpush.msra.mxu0 %v3167
  %v3169 = vand.u32 %v1013, 4294901760
  %3170 = vmatpush.msra.mxu0 %v3169
  %v3171 = vand.u32 %v1095, 4294901760
  %v3172 = vsub.f32 %v1095, %v3171
  %v3173 = vand.u32 %v3172, 4294901760
  %v3174 = vsub.f32 %v3172, %v3173
  %v3175 = vand.u32 %v3174, 4294901760
  %3176 = vmatmul.f32.gmra.mxu0 %v3175
  %v3177 = vpop.f32.mrf.mxu0
  %v3178 = vadd.f32 %v3137, %v3177
  %3179 = vdwg.mxu0
  %v3180 = vand.u32 %v1043, 4294901760
  %v3181 = vsub.f32 %v1043, %v3180
  %v3182 = vand.u32 %v3181, 4294901760
  %v3183 = vsub.f32 %v3181, %v3182
  %v3184 = vand.u32 %v3183, 4294901760
  %3185 = vmatpush.msra.mxu0 %v3184
  %v3186 = vand.u32 %v1041, 4294901760
  %v3187 = vsub.f32 %v1041, %v3186
  %v3188 = vand.u32 %v3187, 4294901760
  %v3189 = vsub.f32 %v3187, %v3188
  %v3190 = vand.u32 %v3189, 4294901760
  %3191 = vmatpush.msra.mxu0 %v3190
  %v3192 = vand.u32 %v1039, 4294901760
  %v3193 = vsub.f32 %v1039, %v3192
  %v3194 = vand.u32 %v3193, 4294901760
  %v3195 = vsub.f32 %v3193, %v3194
  %v3196 = vand.u32 %v3195, 4294901760
  %3197 = vmatpush.msra.mxu0 %v3196
  %v3198 = vand.u32 %v1037, 4294901760
  %v3199 = vsub.f32 %v1037, %v3198
  %v3200 = vand.u32 %v3199, 4294901760
  %v3201 = vsub.f32 %v3199, %v3200
  %v3202 = vand.u32 %v3201, 4294901760
  %3203 = vmatpush.msra.mxu0 %v3202
  %v3204 = vand.u32 %v1035, 4294901760
  %v3205 = vsub.f32 %v1035, %v3204
  %v3206 = vand.u32 %v3205, 4294901760
  %v3207 = vsub.f32 %v3205, %v3206
  %v3208 = vand.u32 %v3207, 4294901760
  %3209 = vmatpush.msra.mxu0 %v3208
  %v3210 = vand.u32 %v1033, 4294901760
  %v3211 = vsub.f32 %v1033, %v3210
  %v3212 = vand.u32 %v3211, 4294901760
  %v3213 = vsub.f32 %v3211, %v3212
  %v3214 = vand.u32 %v3213, 4294901760
  %3215 = vmatpush.msra.mxu0 %v3214
  %v3216 = vand.u32 %v1031, 4294901760
  %v3217 = vsub.f32 %v1031, %v3216
  %v3218 = vand.u32 %v3217, 4294901760
  %v3219 = vsub.f32 %v3217, %v3218
  %v3220 = vand.u32 %v3219, 4294901760
  %3221 = vmatpush.msra.mxu0 %v3220
  %v3222 = vand.u32 %v1029, 4294901760
  %v3223 = vsub.f32 %v1029, %v3222
  %v3224 = vand.u32 %v3223, 4294901760
  %v3225 = vsub.f32 %v3223, %v3224
  %v3226 = vand.u32 %v3225, 4294901760
  %3227 = vmatpush.msra.mxu0 %v3226
  %v3228 = vand.u32 %v1027, 4294901760
  %v3229 = vsub.f32 %v1027, %v3228
  %v3230 = vand.u32 %v3229, 4294901760
  %v3231 = vsub.f32 %v3229, %v3230
  %v3232 = vand.u32 %v3231, 4294901760
  %3233 = vmatpush.msra.mxu0 %v3232
  %v3234 = vand.u32 %v1025, 4294901760
  %v3235 = vsub.f32 %v1025, %v3234
  %v3236 = vand.u32 %v3235, 4294901760
  %v3237 = vsub.f32 %v3235, %v3236
  %v3238 = vand.u32 %v3237, 4294901760
  %3239 = vmatpush.msra.mxu0 %v3238
  %v3240 = vand.u32 %v1023, 4294901760
  %v3241 = vsub.f32 %v1023, %v3240
  %v3242 = vand.u32 %v3241, 4294901760
  %v3243 = vsub.f32 %v3241, %v3242
  %v3244 = vand.u32 %v3243, 4294901760
  %3245 = vmatpush.msra.mxu0 %v3244
  %v3246 = vand.u32 %v1021, 4294901760
  %v3247 = vsub.f32 %v1021, %v3246
  %v3248 = vand.u32 %v3247, 4294901760
  %v3249 = vsub.f32 %v3247, %v3248
  %v3250 = vand.u32 %v3249, 4294901760
  %3251 = vmatpush.msra.mxu0 %v3250
  %v3252 = vand.u32 %v1019, 4294901760
  %v3253 = vsub.f32 %v1019, %v3252
  %v3254 = vand.u32 %v3253, 4294901760
  %v3255 = vsub.f32 %v3253, %v3254
  %v3256 = vand.u32 %v3255, 4294901760
  %3257 = vmatpush.msra.mxu0 %v3256
  %v3258 = vand.u32 %v1017, 4294901760
  %v3259 = vsub.f32 %v1017, %v3258
  %v3260 = vand.u32 %v3259, 4294901760
  %v3261 = vsub.f32 %v3259, %v3260
  %v3262 = vand.u32 %v3261, 4294901760
  %3263 = vmatpush.msra.mxu0 %v3262
  %v3264 = vand.u32 %v1015, 4294901760
  %v3265 = vsub.f32 %v1015, %v3264
  %v3266 = vand.u32 %v3265, 4294901760
  %v3267 = vsub.f32 %v3265, %v3266
  %v3268 = vand.u32 %v3267, 4294901760
  %3269 = vmatpush.msra.mxu0 %v3268
  %v3270 = vand.u32 %v1013, 4294901760
  %v3271 = vsub.f32 %v1013, %v3270
  %v3272 = vand.u32 %v3271, 4294901760
  %v3273 = vsub.f32 %v3271, %v3272
  %v3274 = vand.u32 %v3273, 4294901760
  %3275 = vmatpush.msra.mxu0 %v3274
  %v3276 = vand.u32 %v1095, 4294901760
  %3277 = vmatmul.f32.gmra.mxu0 %v3276
  %v3278 = vpop.f32.mrf.mxu0
  %v3279 = vadd.f32 %v3178, %v3278
  %3280 = vdwg.mxu0
  %v3281 = vand.u32 %v1043, 4294901760
  %v3282 = vsub.f32 %v1043, %v3281
  %3283 = vmatpush.msra.mxu0 %v3282
  %v3284 = vand.u32 %v1041, 4294901760
  %v3285 = vsub.f32 %v1041, %v3284
  %3286 = vmatpush.msra.mxu0 %v3285
  %v3287 = vand.u32 %v1039, 4294901760
  %v3288 = vsub.f32 %v1039, %v3287
  %3289 = vmatpush.msra.mxu0 %v3288
  %v3290 = vand.u32 %v1037, 4294901760
  %v3291 = vsub.f32 %v1037, %v3290
  %3292 = vmatpush.msra.mxu0 %v3291
  %v3293 = vand.u32 %v1035, 4294901760
  %v3294 = vsub.f32 %v1035, %v3293
  %3295 = vmatpush.msra.mxu0 %v3294
  %v3296 = vand.u32 %v1033, 4294901760
  %v3297 = vsub.f32 %v1033, %v3296
  %3298 = vmatpush.msra.mxu0 %v3297
  %v3299 = vand.u32 %v1031, 4294901760
  %v3300 = vsub.f32 %v1031, %v3299
  %3301 = vmatpush.msra.mxu0 %v3300
  %v3302 = vand.u32 %v1029, 4294901760
  %v3303 = vsub.f32 %v1029, %v3302
  %3304 = vmatpush.msra.mxu0 %v3303
  %v3305 = vand.u32 %v1027, 4294901760
  %v3306 = vsub.f32 %v1027, %v3305
  %3307 = vmatpush.msra.mxu0 %v3306
  %v3308 = vand.u32 %v1025, 4294901760
  %v3309 = vsub.f32 %v1025, %v3308
  %3310 = vmatpush.msra.mxu0 %v3309
  %v3311 = vand.u32 %v1023, 4294901760
  %v3312 = vsub.f32 %v1023, %v3311
  %3313 = vmatpush.msra.mxu0 %v3312
  %v3314 = vand.u32 %v1021, 4294901760
  %v3315 = vsub.f32 %v1021, %v3314
  %3316 = vmatpush.msra.mxu0 %v3315
  %v3317 = vand.u32 %v1019, 4294901760
  %v3318 = vsub.f32 %v1019, %v3317
  %3319 = vmatpush.msra.mxu0 %v3318
  %v3320 = vand.u32 %v1017, 4294901760
  %v3321 = vsub.f32 %v1017, %v3320
  %3322 = vmatpush.msra.mxu0 %v3321
  %v3323 = vand.u32 %v1015, 4294901760
  %v3324 = vsub.f32 %v1015, %v3323
  %3325 = vmatpush.msra.mxu0 %v3324
  %v3326 = vand.u32 %v1013, 4294901760
  %v3327 = vsub.f32 %v1013, %v3326
  %3328 = vmatpush.msra.mxu0 %v3327
  %v3329 = vand.u32 %v1095, 4294901760
  %v3330 = vsub.f32 %v1095, %v3329
  %3331 = vmatmul.f32.gmra.mxu0 %v3330
  %v3332 = vpop.f32.mrf.mxu0
  %v3333 = vadd.f32 %v3279, %v3332
  %3334 = vdwg.mxu0
  %v3335 = vand.u32 %v1043, 4294901760
  %3336 = vmatpush.msra.mxu0 %v3335
  %v3337 = vand.u32 %v1041, 4294901760
  %3338 = vmatpush.msra.mxu0 %v3337
  %v3339 = vand.u32 %v1039, 4294901760
  %3340 = vmatpush.msra.mxu0 %v3339
  %v3341 = vand.u32 %v1037, 4294901760
  %3342 = vmatpush.msra.mxu0 %v3341
  %v3343 = vand.u32 %v1035, 4294901760
  %3344 = vmatpush.msra.mxu0 %v3343
  %v3345 = vand.u32 %v1033, 4294901760
  %3346 = vmatpush.msra.mxu0 %v3345
  %v3347 = vand.u32 %v1031, 4294901760
  %3348 = vmatpush.msra.mxu0 %v3347
  %v3349 = vand.u32 %v1029, 4294901760
  %3350 = vmatpush.msra.mxu0 %v3349
  %v3351 = vand.u32 %v1027, 4294901760
  %3352 = vmatpush.msra.mxu0 %v3351
  %v3353 = vand.u32 %v1025, 4294901760
  %3354 = vmatpush.msra.mxu0 %v3353
  %v3355 = vand.u32 %v1023, 4294901760
  %3356 = vmatpush.msra.mxu0 %v3355
  %v3357 = vand.u32 %v1021, 4294901760
  %3358 = vmatpush.msra.mxu0 %v3357
  %v3359 = vand.u32 %v1019, 4294901760
  %3360 = vmatpush.msra.mxu0 %v3359
  %v3361 = vand.u32 %v1017, 4294901760
  %3362 = vmatpush.msra.mxu0 %v3361
  %v3363 = vand.u32 %v1015, 4294901760
  %3364 = vmatpush.msra.mxu0 %v3363
  %v3365 = vand.u32 %v1013, 4294901760
  %3366 = vmatpush.msra.mxu0 %v3365
  %v3367 = vand.u32 %v1095, 4294901760
  %v3368 = vsub.f32 %v1095, %v3367
  %v3369 = vand.u32 %v3368, 4294901760
  %3370 = vmatmul.f32.gmra.mxu0 %v3369
  %v3371 = vpop.f32.mrf.mxu0
  %v3372 = vadd.f32 %v3333, %v3371
  %3373 = vdwg.mxu0
  %v3374 = vand.u32 %v1043, 4294901760
  %v3375 = vsub.f32 %v1043, %v3374
  %v3376 = vand.u32 %v3375, 4294901760
  %3377 = vmatpush.msra.mxu0 %v3376
  %v3378 = vand.u32 %v1041, 4294901760
  %v3379 = vsub.f32 %v1041, %v3378
  %v3380 = vand.u32 %v3379, 4294901760
  %3381 = vmatpush.msra.mxu0 %v3380
  %v3382 = vand.u32 %v1039, 4294901760
  %v3383 = vsub.f32 %v1039, %v3382
  %v3384 = vand.u32 %v3383, 4294901760
  %3385 = vmatpush.msra.mxu0 %v3384
  %v3386 = vand.u32 %v1037, 4294901760
  %v3387 = vsub.f32 %v1037, %v3386
  %v3388 = vand.u32 %v3387, 4294901760
  %3389 = vmatpush.msra.mxu0 %v3388
  %v3390 = vand.u32 %v1035, 4294901760
  %v3391 = vsub.f32 %v1035, %v3390
  %v3392 = vand.u32 %v3391, 4294901760
  %3393 = vmatpush.msra.mxu0 %v3392
  %v3394 = vand.u32 %v1033, 4294901760
  %v3395 = vsub.f32 %v1033, %v3394
  %v3396 = vand.u32 %v3395, 4294901760
  %3397 = vmatpush.msra.mxu0 %v3396
  %v3398 = vand.u32 %v1031, 4294901760
  %v3399 = vsub.f32 %v1031, %v3398
  %v3400 = vand.u32 %v3399, 4294901760
  %3401 = vmatpush.msra.mxu0 %v3400
  %v3402 = vand.u32 %v1029, 4294901760
  %v3403 = vsub.f32 %v1029, %v3402
  %v3404 = vand.u32 %v3403, 4294901760
  %3405 = vmatpush.msra.mxu0 %v3404
  %v3406 = vand.u32 %v1027, 4294901760
  %v3407 = vsub.f32 %v1027, %v3406
  %v3408 = vand.u32 %v3407, 4294901760
  %3409 = vmatpush.msra.mxu0 %v3408
  %v3410 = vand.u32 %v1025, 4294901760
  %v3411 = vsub.f32 %v1025, %v3410
  %v3412 = vand.u32 %v3411, 4294901760
  %3413 = vmatpush.msra.mxu0 %v3412
  %v3414 = vand.u32 %v1023, 4294901760
  %v3415 = vsub.f32 %v1023, %v3414
  %v3416 = vand.u32 %v3415, 4294901760
  %3417 = vmatpush.msra.mxu0 %v3416
  %v3418 = vand.u32 %v1021, 4294901760
  %v3419 = vsub.f32 %v1021, %v3418
  %v3420 = vand.u32 %v3419, 4294901760
  %3421 = vmatpush.msra.mxu0 %v3420
  %v3422 = vand.u32 %v1019, 4294901760
  %v3423 = vsub.f32 %v1019, %v3422
  %v3424 = vand.u32 %v3423, 4294901760
  %3425 = vmatpush.msra.mxu0 %v3424
  %v3426 = vand.u32 %v1017, 4294901760
  %v3427 = vsub.f32 %v1017, %v3426
  %v3428 = vand.u32 %v3427, 4294901760
  %3429 = vmatpush.msra.mxu0 %v3428
  %v3430 = vand.u32 %v1015, 4294901760
  %v3431 = vsub.f32 %v1015, %v3430
  %v3432 = vand.u32 %v3431, 4294901760
  %3433 = vmatpush.msra.mxu0 %v3432
  %v3434 = vand.u32 %v1013, 4294901760
  %v3435 = vsub.f32 %v1013, %v3434
  %v3436 = vand.u32 %v3435, 4294901760
  %3437 = vmatpush.msra.mxu0 %v3436
  %v3438 = vand.u32 %v1095, 4294901760
  %3439 = vmatmul.f32.gmra.mxu0 %v3438
  %v3440 = vpop.f32.mrf.mxu0
  %v3441 = vadd.f32 %v3372, %v3440
  %3442 = vdwg.mxu0
  %v3443 = vand.u32 %v1043, 4294901760
  %3444 = vmatpush.msra.mxu0 %v3443
  %v3445 = vand.u32 %v1041, 4294901760
  %3446 = vmatpush.msra.mxu0 %v3445
  %v3447 = vand.u32 %v1039, 4294901760
  %3448 = vmatpush.msra.mxu0 %v3447
  %v3449 = vand.u32 %v1037, 4294901760
  %3450 = vmatpush.msra.mxu0 %v3449
  %v3451 = vand.u32 %v1035, 4294901760
  %3452 = vmatpush.msra.mxu0 %v3451
  %v3453 = vand.u32 %v1033, 4294901760
  %3454 = vmatpush.msra.mxu0 %v3453
  %v3455 = vand.u32 %v1031, 4294901760
  %3456 = vmatpush.msra.mxu0 %v3455
  %v3457 = vand.u32 %v1029, 4294901760
  %3458 = vmatpush.msra.mxu0 %v3457
  %v3459 = vand.u32 %v1027, 4294901760
  %3460 = vmatpush.msra.mxu0 %v3459
  %v3461 = vand.u32 %v1025, 4294901760
  %3462 = vmatpush.msra.mxu0 %v3461
  %v3463 = vand.u32 %v1023, 4294901760
  %3464 = vmatpush.msra.mxu0 %v3463
  %v3465 = vand.u32 %v1021, 4294901760
  %3466 = vmatpush.msra.mxu0 %v3465
  %v3467 = vand.u32 %v1019, 4294901760
  %3468 = vmatpush.msra.mxu0 %v3467
  %v3469 = vand.u32 %v1017, 4294901760
  %3470 = vmatpush.msra.mxu0 %v3469
  %v3471 = vand.u32 %v1015, 4294901760
  %3472 = vmatpush.msra.mxu0 %v3471
  %v3473 = vand.u32 %v1013, 4294901760
  %3474 = vmatpush.msra.mxu0 %v3473
  %v3475 = vand.u32 %v1095, 4294901760
  %3476 = vmatmul.f32.gmra.mxu0 %v3475
  %v3477 = vpop.f32.mrf.mxu0
  %v3478 = vadd.f32 %v3441, %v3477
  %3479 = vdwg.mxu0
  %3480 = vmatpush.msra.mxu0 0.0
  %v3481 = vand.u32 %v1104, 4294901760
  %3482 = vmatpush.msra.mxu0 %v3481
  %v3483 = vand.u32 %v1071, 4294901760
  %3484 = vmatpush.msra.mxu0 %v3483
  %v3485 = vand.u32 %v1069, 4294901760
  %3486 = vmatpush.msra.mxu0 %v3485
  %v3487 = vand.u32 %v1067, 4294901760
  %3488 = vmatpush.msra.mxu0 %v3487
  %v3489 = vand.u32 %v1065, 4294901760
  %3490 = vmatpush.msra.mxu0 %v3489
  %v3491 = vand.u32 %v1063, 4294901760
  %3492 = vmatpush.msra.mxu0 %v3491
  %v3493 = vand.u32 %v1061, 4294901760
  %3494 = vmatpush.msra.mxu0 %v3493
  %v3495 = vand.u32 %v1059, 4294901760
  %3496 = vmatpush.msra.mxu0 %v3495
  %v3497 = vand.u32 %v1057, 4294901760
  %3498 = vmatpush.msra.mxu0 %v3497
  %v3499 = vand.u32 %v1055, 4294901760
  %3500 = vmatpush.msra.mxu0 %v3499
  %v3501 = vand.u32 %v1053, 4294901760
  %3502 = vmatpush.msra.mxu0 %v3501
  %v3503 = vand.u32 %v1051, 4294901760
  %3504 = vmatpush.msra.mxu0 %v3503
  %v3505 = vand.u32 %v1049, 4294901760
  %3506 = vmatpush.msra.mxu0 %v3505
  %v3507 = vand.u32 %v1047, 4294901760
  %3508 = vmatpush.msra.mxu0 %v3507
  %v3509 = vand.u32 %v1045, 4294901760
  %3510 = vmatpush.msra.mxu0 %v3509
  %v3511 = vand.u32 %v1098, 4294901760
  %v3512 = vsub.f32 %v1098, %v3511
  %v3513 = vand.u32 %v3512, 4294901760
  %v3514 = vsub.f32 %v3512, %v3513
  %v3515 = vand.u32 %v3514, 4294901760
  %3516 = vmatmul.f32.gmra.mxu0 %v3515
  %v3517 = vpop.f32.mrf.mxu0
  %v3518 = vadd.f32 %v3478, %v3517
  %3519 = vdwg.mxu0
  %3520 = vmatpush.msra.mxu0 0.0
  %v3521 = vand.u32 %v1104, 4294901760
  %v3522 = vsub.f32 %v1104, %v3521
  %v3523 = vand.u32 %v3522, 4294901760
  %v3524 = vsub.f32 %v3522, %v3523
  %v3525 = vand.u32 %v3524, 4294901760
  %3526 = vmatpush.msra.mxu0 %v3525
  %v3527 = vand.u32 %v1071, 4294901760
  %v3528 = vsub.f32 %v1071, %v3527
  %v3529 = vand.u32 %v3528, 4294901760
  %v3530 = vsub.f32 %v3528, %v3529
  %v3531 = vand.u32 %v3530, 4294901760
  %3532 = vmatpush.msra.mxu0 %v3531
  %v3533 = vand.u32 %v1069, 4294901760
  %v3534 = vsub.f32 %v1069, %v3533
  %v3535 = vand.u32 %v3534, 4294901760
  %v3536 = vsub.f32 %v3534, %v3535
  %v3537 = vand.u32 %v3536, 4294901760
  %3538 = vmatpush.msra.mxu0 %v3537
  %v3539 = vand.u32 %v1067, 4294901760
  %v3540 = vsub.f32 %v1067, %v3539
  %v3541 = vand.u32 %v3540, 4294901760
  %v3542 = vsub.f32 %v3540, %v3541
  %v3543 = vand.u32 %v3542, 4294901760
  %3544 = vmatpush.msra.mxu0 %v3543
  %v3545 = vand.u32 %v1065, 4294901760
  %v3546 = vsub.f32 %v1065, %v3545
  %v3547 = vand.u32 %v3546, 4294901760
  %v3548 = vsub.f32 %v3546, %v3547
  %v3549 = vand.u32 %v3548, 4294901760
  %3550 = vmatpush.msra.mxu0 %v3549
  %v3551 = vand.u32 %v1063, 4294901760
  %v3552 = vsub.f32 %v1063, %v3551
  %v3553 = vand.u32 %v3552, 4294901760
  %v3554 = vsub.f32 %v3552, %v3553
  %v3555 = vand.u32 %v3554, 4294901760
  %3556 = vmatpush.msra.mxu0 %v3555
  %v3557 = vand.u32 %v1061, 4294901760
  %v3558 = vsub.f32 %v1061, %v3557
  %v3559 = vand.u32 %v3558, 4294901760
  %v3560 = vsub.f32 %v3558, %v3559
  %v3561 = vand.u32 %v3560, 4294901760
  %3562 = vmatpush.msra.mxu0 %v3561
  %v3563 = vand.u32 %v1059, 4294901760
  %v3564 = vsub.f32 %v1059, %v3563
  %v3565 = vand.u32 %v3564, 4294901760
  %v3566 = vsub.f32 %v3564, %v3565
  %v3567 = vand.u32 %v3566, 4294901760
  %3568 = vmatpush.msra.mxu0 %v3567
  %v3569 = vand.u32 %v1057, 4294901760
  %v3570 = vsub.f32 %v1057, %v3569
  %v3571 = vand.u32 %v3570, 4294901760
  %v3572 = vsub.f32 %v3570, %v3571
  %v3573 = vand.u32 %v3572, 4294901760
  %3574 = vmatpush.msra.mxu0 %v3573
  %v3575 = vand.u32 %v1055, 4294901760
  %v3576 = vsub.f32 %v1055, %v3575
  %v3577 = vand.u32 %v3576, 4294901760
  %v3578 = vsub.f32 %v3576, %v3577
  %v3579 = vand.u32 %v3578, 4294901760
  %3580 = vmatpush.msra.mxu0 %v3579
  %v3581 = vand.u32 %v1053, 4294901760
  %v3582 = vsub.f32 %v1053, %v3581
  %v3583 = vand.u32 %v3582, 4294901760
  %v3584 = vsub.f32 %v3582, %v3583
  %v3585 = vand.u32 %v3584, 4294901760
  %3586 = vmatpush.msra.mxu0 %v3585
  %v3587 = vand.u32 %v1051, 4294901760
  %v3588 = vsub.f32 %v1051, %v3587
  %v3589 = vand.u32 %v3588, 4294901760
  %v3590 = vsub.f32 %v3588, %v3589
  %v3591 = vand.u32 %v3590, 4294901760
  %3592 = vmatpush.msra.mxu0 %v3591
  %v3593 = vand.u32 %v1049, 4294901760
  %v3594 = vsub.f32 %v1049, %v3593
  %v3595 = vand.u32 %v3594, 4294901760
  %v3596 = vsub.f32 %v3594, %v3595
  %v3597 = vand.u32 %v3596, 4294901760
  %3598 = vmatpush.msra.mxu0 %v3597
  %v3599 = vand.u32 %v1047, 4294901760
  %v3600 = vsub.f32 %v1047, %v3599
  %v3601 = vand.u32 %v3600, 4294901760
  %v3602 = vsub.f32 %v3600, %v3601
  %v3603 = vand.u32 %v3602, 4294901760
  %3604 = vmatpush.msra.mxu0 %v3603
  %v3605 = vand.u32 %v1045, 4294901760
  %v3606 = vsub.f32 %v1045, %v3605
  %v3607 = vand.u32 %v3606, 4294901760
  %v3608 = vsub.f32 %v3606, %v3607
  %v3609 = vand.u32 %v3608, 4294901760
  %3610 = vmatpush.msra.mxu0 %v3609
  %v3611 = vand.u32 %v1098, 4294901760
  %3612 = vmatmul.f32.gmra.mxu0 %v3611
  %v3613 = vpop.f32.mrf.mxu0
  %v3614 = vadd.f32 %v3518, %v3613
  %3615 = vdwg.mxu0
  %3616 = vmatpush.msra.mxu0 0.0
  %v3617 = vand.u32 %v1104, 4294901760
  %v3618 = vsub.f32 %v1104, %v3617
  %3619 = vmatpush.msra.mxu0 %v3618
  %v3620 = vand.u32 %v1071, 4294901760
  %v3621 = vsub.f32 %v1071, %v3620
  %3622 = vmatpush.msra.mxu0 %v3621
  %v3623 = vand.u32 %v1069, 4294901760
  %v3624 = vsub.f32 %v1069, %v3623
  %3625 = vmatpush.msra.mxu0 %v3624
  %v3626 = vand.u32 %v1067, 4294901760
  %v3627 = vsub.f32 %v1067, %v3626
  %3628 = vmatpush.msra.mxu0 %v3627
  %v3629 = vand.u32 %v1065, 4294901760
  %v3630 = vsub.f32 %v1065, %v3629
  %3631 = vmatpush.msra.mxu0 %v3630
  %v3632 = vand.u32 %v1063, 4294901760
  %v3633 = vsub.f32 %v1063, %v3632
  %3634 = vmatpush.msra.mxu0 %v3633
  %v3635 = vand.u32 %v1061, 4294901760
  %v3636 = vsub.f32 %v1061, %v3635
  %3637 = vmatpush.msra.mxu0 %v3636
  %v3638 = vand.u32 %v1059, 4294901760
  %v3639 = vsub.f32 %v1059, %v3638
  %3640 = vmatpush.msra.mxu0 %v3639
  %v3641 = vand.u32 %v1057, 4294901760
  %v3642 = vsub.f32 %v1057, %v3641
  %3643 = vmatpush.msra.mxu0 %v3642
  %v3644 = vand.u32 %v1055, 4294901760
  %v3645 = vsub.f32 %v1055, %v3644
  %3646 = vmatpush.msra.mxu0 %v3645
  %v3647 = vand.u32 %v1053, 4294901760
  %v3648 = vsub.f32 %v1053, %v3647
  %3649 = vmatpush.msra.mxu0 %v3648
  %v3650 = vand.u32 %v1051, 4294901760
  %v3651 = vsub.f32 %v1051, %v3650
  %3652 = vmatpush.msra.mxu0 %v3651
  %v3653 = vand.u32 %v1049, 4294901760
  %v3654 = vsub.f32 %v1049, %v3653
  %3655 = vmatpush.msra.mxu0 %v3654
  %v3656 = vand.u32 %v1047, 4294901760
  %v3657 = vsub.f32 %v1047, %v3656
  %3658 = vmatpush.msra.mxu0 %v3657
  %v3659 = vand.u32 %v1045, 4294901760
  %v3660 = vsub.f32 %v1045, %v3659
  %3661 = vmatpush.msra.mxu0 %v3660
  %v3662 = vand.u32 %v1098, 4294901760
  %v3663 = vsub.f32 %v1098, %v3662
  %3664 = vmatmul.f32.gmra.mxu0 %v3663
  %v3665 = vpop.f32.mrf.mxu0
  %v3666 = vadd.f32 %v3614, %v3665
  %3667 = vdwg.mxu0
  %3668 = vmatpush.msra.mxu0 0.0
  %v3669 = vand.u32 %v1104, 4294901760
  %3670 = vmatpush.msra.mxu0 %v3669
  %v3671 = vand.u32 %v1071, 4294901760
  %3672 = vmatpush.msra.mxu0 %v3671
  %v3673 = vand.u32 %v1069, 4294901760
  %3674 = vmatpush.msra.mxu0 %v3673
  %v3675 = vand.u32 %v1067, 4294901760
  %3676 = vmatpush.msra.mxu0 %v3675
  %v3677 = vand.u32 %v1065, 4294901760
  %3678 = vmatpush.msra.mxu0 %v3677
  %v3679 = vand.u32 %v1063, 4294901760
  %3680 = vmatpush.msra.mxu0 %v3679
  %v3681 = vand.u32 %v1061, 4294901760
  %3682 = vmatpush.msra.mxu0 %v3681
  %v3683 = vand.u32 %v1059, 4294901760
  %3684 = vmatpush.msra.mxu0 %v3683
  %v3685 = vand.u32 %v1057, 4294901760
  %3686 = vmatpush.msra.mxu0 %v3685
  %v3687 = vand.u32 %v1055, 4294901760
  %3688 = vmatpush.msra.mxu0 %v3687
  %v3689 = vand.u32 %v1053, 4294901760
  %3690 = vmatpush.msra.mxu0 %v3689
  %v3691 = vand.u32 %v1051, 4294901760
  %3692 = vmatpush.msra.mxu0 %v3691
  %v3693 = vand.u32 %v1049, 4294901760
  %3694 = vmatpush.msra.mxu0 %v3693
  %v3695 = vand.u32 %v1047, 4294901760
  %3696 = vmatpush.msra.mxu0 %v3695
  %v3697 = vand.u32 %v1045, 4294901760
  %3698 = vmatpush.msra.mxu0 %v3697
  %v3699 = vand.u32 %v1098, 4294901760
  %v3700 = vsub.f32 %v1098, %v3699
  %v3701 = vand.u32 %v3700, 4294901760
  %3702 = vmatmul.f32.gmra.mxu0 %v3701
  %v3703 = vpop.f32.mrf.mxu0
  %v3704 = vadd.f32 %v3666, %v3703
  %3705 = vdwg.mxu0
  %3706 = vmatpush.msra.mxu0 0.0
  %v3707 = vand.u32 %v1104, 4294901760
  %v3708 = vsub.f32 %v1104, %v3707
  %v3709 = vand.u32 %v3708, 4294901760
  %3710 = vmatpush.msra.mxu0 %v3709
  %v3711 = vand.u32 %v1071, 4294901760
  %v3712 = vsub.f32 %v1071, %v3711
  %v3713 = vand.u32 %v3712, 4294901760
  %3714 = vmatpush.msra.mxu0 %v3713
  %v3715 = vand.u32 %v1069, 4294901760
  %v3716 = vsub.f32 %v1069, %v3715
  %v3717 = vand.u32 %v3716, 4294901760
  %3718 = vmatpush.msra.mxu0 %v3717
  %v3719 = vand.u32 %v1067, 4294901760
  %v3720 = vsub.f32 %v1067, %v3719
  %v3721 = vand.u32 %v3720, 4294901760
  %3722 = vmatpush.msra.mxu0 %v3721
  %v3723 = vand.u32 %v1065, 4294901760
  %v3724 = vsub.f32 %v1065, %v3723
  %v3725 = vand.u32 %v3724, 4294901760
  %3726 = vmatpush.msra.mxu0 %v3725
  %v3727 = vand.u32 %v1063, 4294901760
  %v3728 = vsub.f32 %v1063, %v3727
  %v3729 = vand.u32 %v3728, 4294901760
  %3730 = vmatpush.msra.mxu0 %v3729
  %v3731 = vand.u32 %v1061, 4294901760
  %v3732 = vsub.f32 %v1061, %v3731
  %v3733 = vand.u32 %v3732, 4294901760
  %3734 = vmatpush.msra.mxu0 %v3733
  %v3735 = vand.u32 %v1059, 4294901760
  %v3736 = vsub.f32 %v1059, %v3735
  %v3737 = vand.u32 %v3736, 4294901760
  %3738 = vmatpush.msra.mxu0 %v3737
  %v3739 = vand.u32 %v1057, 4294901760
  %v3740 = vsub.f32 %v1057, %v3739
  %v3741 = vand.u32 %v3740, 4294901760
  %3742 = vmatpush.msra.mxu0 %v3741
  %v3743 = vand.u32 %v1055, 4294901760
  %v3744 = vsub.f32 %v1055, %v3743
  %v3745 = vand.u32 %v3744, 4294901760
  %3746 = vmatpush.msra.mxu0 %v3745
  %v3747 = vand.u32 %v1053, 4294901760
  %v3748 = vsub.f32 %v1053, %v3747
  %v3749 = vand.u32 %v3748, 4294901760
  %3750 = vmatpush.msra.mxu0 %v3749
  %v3751 = vand.u32 %v1051, 4294901760
  %v3752 = vsub.f32 %v1051, %v3751
  %v3753 = vand.u32 %v3752, 4294901760
  %3754 = vmatpush.msra.mxu0 %v3753
  %v3755 = vand.u32 %v1049, 4294901760
  %v3756 = vsub.f32 %v1049, %v3755
  %v3757 = vand.u32 %v3756, 4294901760
  %3758 = vmatpush.msra.mxu0 %v3757
  %v3759 = vand.u32 %v1047, 4294901760
  %v3760 = vsub.f32 %v1047, %v3759
  %v3761 = vand.u32 %v3760, 4294901760
  %3762 = vmatpush.msra.mxu0 %v3761
  %v3763 = vand.u32 %v1045, 4294901760
  %v3764 = vsub.f32 %v1045, %v3763
  %v3765 = vand.u32 %v3764, 4294901760
  %3766 = vmatpush.msra.mxu0 %v3765
  %v3767 = vand.u32 %v1098, 4294901760
  %3768 = vmatmul.f32.gmra.mxu0 %v3767
  %v3769 = vpop.f32.mrf.mxu0
  %v3770 = vadd.f32 %v3704, %v3769
  %3771 = vdwg.mxu0
  %3772 = vmatpush.msra.mxu0 0.0
  %v3773 = vand.u32 %v1104, 4294901760
  %3774 = vmatpush.msra.mxu0 %v3773
  %v3775 = vand.u32 %v1071, 4294901760
  %3776 = vmatpush.msra.mxu0 %v3775
  %v3777 = vand.u32 %v1069, 4294901760
  %3778 = vmatpush.msra.mxu0 %v3777
  %v3779 = vand.u32 %v1067, 4294901760
  %3780 = vmatpush.msra.mxu0 %v3779
  %v3781 = vand.u32 %v1065, 4294901760
  %3782 = vmatpush.msra.mxu0 %v3781
  %v3783 = vand.u32 %v1063, 4294901760
  %3784 = vmatpush.msra.mxu0 %v3783
  %v3785 = vand.u32 %v1061, 4294901760
  %3786 = vmatpush.msra.mxu0 %v3785
  %v3787 = vand.u32 %v1059, 4294901760
  %3788 = vmatpush.msra.mxu0 %v3787
  %v3789 = vand.u32 %v1057, 4294901760
  %3790 = vmatpush.msra.mxu0 %v3789
  %v3791 = vand.u32 %v1055, 4294901760
  %3792 = vmatpush.msra.mxu0 %v3791
  %v3793 = vand.u32 %v1053, 4294901760
  %3794 = vmatpush.msra.mxu0 %v3793
  %v3795 = vand.u32 %v1051, 4294901760
  %3796 = vmatpush.msra.mxu0 %v3795
  %v3797 = vand.u32 %v1049, 4294901760
  %3798 = vmatpush.msra.mxu0 %v3797
  %v3799 = vand.u32 %v1047, 4294901760
  %3800 = vmatpush.msra.mxu0 %v3799
  %v3801 = vand.u32 %v1045, 4294901760
  %3802 = vmatpush.msra.mxu0 %v3801
  %v3803 = vand.u32 %v1098, 4294901760
  %3804 = vmatmul.f32.gmra.mxu0 %v3803
  %v3805 = vpop.f32.mrf.mxu0
  %v3806 = vadd.f32 %v3770, %v3805
  %3807 = vdwg.mxu0
  %v3808 = vld [vmem:[%s5] sm:$0xff]
  %v3809 = vld [vmem:[%s5 + $0x8] sm:$0x3]
  %v3810 = vld [vmem:[%s6] sm:$0xff]
  %v3811 = vld [vmem:[%s6 + $0x8] sm:$0x3]
  %v3812 = vld [vmem:[%s7] sm:$0xff]
  %v3813 = vld [vmem:[%s7 + $0x8] sm:$0x3]
  %v3814 = vld [vmem:[%s8] sm:$0xff]
  %v3815 = vld [vmem:[%s8 + $0x8] sm:$0x3]
  %3817 = vrot.lane.b32.xlu0 %v2455, 2
  %v3818 = vpop.permute.xlu0 %3817
  %vm3820 = vcmask 15360
  %v3821 = vsel %vm3820, 0.0, %v3818
  %v3822 = vsel %vm80, %v3821, 0.0
  %v3824 = vrot.slane %v3822, 3
  %3825 = vrot.lane.b32.xlu0 %v3824, 127
  %v3826 = vpop.permute.xlu0 %3825
  %v3828 = vrot.slane %v3822, 6
  %3829 = vrot.lane.b32.xlu0 %v3828, 126
  %v3830 = vpop.permute.xlu0 %3829
  %v3832 = vrot.slane %v3822, 1
  %3833 = vrot.lane.b32.xlu0 %v3832, 125
  %v3834 = vpop.permute.xlu0 %3833
  %v3837 = vrot.slane %v3822, 4
  %v3838 = vrot.slane 0.0, 4
  %3839 = vrot.lane.b32.xlu0 %v3837, 124
  %v3840 = vpop.permute.xlu0 %3839
  %3841 = vrot.lane.b32.xlu0 %v3838, 124
  %v3842 = vpop.permute.xlu0 %3841
  %v3843 = vsel %vm110, %v3840, %v3842
  %v3845 = vsel %vm255, %v3822, %v3826
  %v3846 = vsel %vm246, %v3826, %v3830
  %v3847 = vsel %vm261, %v3846, %v3834
  %v3848 = vsel %vm252, %v3834, %v3843
  %3850 = vrot.lane.b32.xlu0 %v2455, 5
  %v3851 = vpop.permute.xlu0 %3850
  %3852 = vrot.lane.b32.xlu0 %v3806, 5
  %v3853 = vpop.permute.xlu0 %3852
  %vm3854 = vcmask 39936
  %v3855 = vsel %vm3854, %v3851, %v3853
  %v3857 = vsel %vm3820, 0.0, %v3855
  %v3858 = vsel %vm80, %v3857, 0.0
  %v3860 = vrot.slane %v3858, 3
  %3861 = vrot.lane.b32.xlu0 %v3860, 127
  %v3862 = vpop.permute.xlu0 %3861
  %v3864 = vrot.slane %v3858, 6
  %3865 = vrot.lane.b32.xlu0 %v3864, 126
  %v3866 = vpop.permute.xlu0 %3865
  %v3868 = vrot.slane %v3858, 1
  %3869 = vrot.lane.b32.xlu0 %v3868, 125
  %v3870 = vpop.permute.xlu0 %3869
  %v3872 = vrot.slane %v3858, 4
  %3873 = vrot.lane.b32.xlu0 %v3872, 124
  %v3874 = vpop.permute.xlu0 %3873
  %v3875 = vsel %vm110, %v3874, %v3842
  %v3877 = vsel %vm255, %v3858, %v3862
  %v3878 = vsel %vm246, %v3862, %v3866
  %v3879 = vsel %vm261, %v3878, %v3870
  %v3880 = vsel %vm252, %v3870, %v3875
  %3884 = vrot.lane.b32.xlu0 %v3877, 125
  %v3885 = vpop.permute.xlu0 %3884
  %3886 = vrot.lane.b32.xlu0 %v3879, 125
  %v3887 = vpop.permute.xlu0 %3886
  %3888 = vrot.lane.b32.xlu0 %v3880, 125
  %v3889 = vpop.permute.xlu0 %3888
  %3890 = vrot.lane.b32.xlu0 %v3875, 125
  %v3891 = vpop.permute.xlu0 %3890
  %v3896 = vsel %vm100, %v3845, %v3885
  %v3897 = vsel %vm100, %v3847, %v3887
  %v3898 = vsel %vm100, %v3848, %v3889
  %v3899 = vsel %vm100, %v3843, %v3891
  %3901 = vset.pattern.permute.xlu0 0
  %3902 = vperm.xlu0 %3901, %v3810
  %v3903 = vpop.permute.xlu0 %3902
  %3906 = vset.pattern.permute.xlu0 0
  %3907 = vperm.xlu0 %3906, %v3811
  %v3908 = vpop.permute.xlu0 %3907
  %v3911 = vsel %vm65, %v3808, 0
  %v3914 = vsel %vm65, %v3809, 0
  %v3917 = vsel %vm243, %v3899, 0
  %v3919 = vsel %vm243, %v3891, 0
  %3921 = vmatpush.msra.mxu0 0.0
  %3922 = vmatpush.msra.mxu0 0.0
  %3923 = vmatpush.msra.mxu0 0.0
  %3924 = vmatpush.msra.mxu0 0.0
  %3925 = vmatpush.msra.mxu0 0.0
  %3926 = vmatpush.msra.mxu0 0.0
  %3927 = vmatpush.msra.mxu0 0.0
  %3928 = vmatpush.msra.mxu0 0.0
  %3929 = vmatpush.msra.mxu0 0.0
  %3930 = vmatpush.msra.mxu0 0.0
  %3931 = vmatpush.msra.mxu0 0.0
  %3932 = vmatpush.msra.mxu0 0.0
  %3933 = vmatpush.msra.mxu0 %v3917
  %3934 = vmatpush.msra.mxu0 %v3898
  %3935 = vmatpush.msra.mxu0 %v3897
  %3936 = vmatpush.msra.mxu0 %v3896
  %3937 = vmatmul.f32.gmra.mxu0 %v3911
  %v3938 = vpop.f32.mrf.mxu0
  %v3939 = vadd.f32 %v3903, %v3938
  %3940 = vmatmul.f32.gmra.mxu0 %v3914
  %v3941 = vpop.f32.mrf.mxu0
  %v3942 = vadd.f32 %v3908, %v3941
  %3943 = vdwg.mxu0
  %3944 = vmatpush.msra.mxu0 0.0
  %3945 = vmatpush.msra.mxu0 0.0
  %3946 = vmatpush.msra.mxu0 0.0
  %3947 = vmatpush.msra.mxu0 0.0
  %3948 = vmatpush.msra.mxu0 0.0
  %3949 = vmatpush.msra.mxu0 0.0
  %3950 = vmatpush.msra.mxu0 0.0
  %3951 = vmatpush.msra.mxu0 0.0
  %3952 = vmatpush.msra.mxu0 0.0
  %3953 = vmatpush.msra.mxu0 0.0
  %3954 = vmatpush.msra.mxu0 0.0
  %3955 = vmatpush.msra.mxu0 0.0
  %3956 = vmatpush.msra.mxu0 %v3919
  %3957 = vmatpush.msra.mxu0 %v3889
  %3958 = vmatpush.msra.mxu0 %v3887
  %3959 = vmatpush.msra.mxu0 %v3885
  %3960 = vmatmul.f32.gmra.mxu0 %v3911
  %v3961 = vpop.f32.mrf.mxu0
  %v3962 = vadd.f32 %v3903, %v3961
  %3963 = vmatmul.f32.gmra.mxu0 %v3914
  %v3964 = vpop.f32.mrf.mxu0
  %v3965 = vadd.f32 %v3908, %v3964
  %3966 = vdwg.mxu0
  %v3967 = vsel %vm130, %v3962, 0.0
  %v3968 = vadd.f32 %v3939, %v3967
  %3969 = vadd.xlane.f32.xlu0 %v3968
  %v3970 = vpop.xlane.xlu0 %3969
  %v3971 = vsel %vm246, %v3942, 0.0
  %vm3972 = vcmask 992256
  %v3973 = vsel %vm3972, %v3965, 0.0
  %v3974 = vadd.f32 %v3971, %v3973
  %3975 = vadd.xlane.f32.xlu0 %v3974
  %v3976 = vpop.xlane.xlu0 %3975
  %v3977 = vrcp.pop 250.0
  %v3978 = vmul.f32 250.0, %v3977
  %v3979 = vsub.f32 1.0, %v3978
  %v3980 = vmul.f32 %v3977, %v3979
  %v3981 = vadd.f32 %v3977, %v3980
  %vm3982 = vweird.f32 %v3977
  %v3983 = vsel %vm3982, %v3977, %v3981
  %v3984 = vmul.f32 %v3970, %v3983
  %v3985 = vmul.f32 %v3976, %v3983
  %v3986 = vsub.f32 %v3939, %v3984
  %v3987 = vsub.f32 %v3962, %v3984
  %v3988 = vsub.f32 %v3942, %v3985
  %v3989 = vsub.f32 %v3965, %v3985
  %v3990 = vmul.f32 %v3986, %v3986
  %v3991 = vmul.f32 %v3987, %v3987
  %v3992 = vmul.f32 %v3988, %v3988
  %v3993 = vmul.f32 %v3989, %v3989
  %v3994 = vsel %vm130, %v3991, 0.0
  %v3995 = vadd.f32 %v3990, %v3994
  %3996 = vadd.xlane.f32.xlu0 %v3995
  %v3997 = vpop.xlane.xlu0 %3996
  %v3998 = vsel %vm246, %v3992, 0.0
  %v3999 = vsel %vm3972, %v3993, 0.0
  %v4000 = vadd.f32 %v3998, %v3999
  %4001 = vadd.xlane.f32.xlu0 %v4000
  %v4002 = vpop.xlane.xlu0 %4001
  %v4003 = vmul.f32 %v3997, %v3983
  %v4004 = vmul.f32 %v4002, %v3983
  %v4005 = vadd.f32 %v4003, 1e-05
  %v4006 = vadd.f32 %v4004, 1e-05
  %v4007 = vrsqrt.pop %v4005
  %v4008 = vmul.f32 %v4007, %v4005
  %v4009 = vmul.f32 %v4008, %v4007
  %v4010 = vmul.f32 0.5, %v4009
  %v4011 = vsub.f32 1.5, %v4010
  %v4012 = vmul.f32 %v4007, %v4011
  %vm4013 = vweird.f32 %v4005
  %vm4014 = vweird.f32 %v4007
  %vm4015 = vmor %vm4013, %vm4014
  %v4016 = vsel %vm4015, %v4007, %v4012
  %v4017 = vrsqrt.pop %v4006
  %v4018 = vmul.f32 %v4017, %v4006
  %v4019 = vmul.f32 %v4018, %v4017
  %v4020 = vmul.f32 0.5, %v4019
  %v4021 = vsub.f32 1.5, %v4020
  %v4022 = vmul.f32 %v4017, %v4021
  %vm4023 = vweird.f32 %v4006
  %vm4024 = vweird.f32 %v4017
  %vm4025 = vmor %vm4023, %vm4024
  %v4026 = vsel %vm4025, %v4017, %v4022
  %v4027 = vmul.f32 %v3986, %v4016
  %v4028 = vmul.f32 %v3987, %v4016
  %v4029 = vmul.f32 %v3988, %v4026
  %v4030 = vmul.f32 %v3989, %v4026
  %4032 = vset.pattern.permute.xlu0 0
  %4033 = vperm.xlu0 %4032, %v3812
  %v4034 = vpop.permute.xlu0 %4033
  %4037 = vset.pattern.permute.xlu0 0
  %4038 = vperm.xlu0 %4037, %v3813
  %v4039 = vpop.permute.xlu0 %4038
  %v4041 = vmul.f32 %v4027, %v4034
  %v4042 = vmul.f32 %v4028, %v4034
  %v4043 = vmul.f32 %v4029, %v4039
  %v4044 = vmul.f32 %v4030, %v4039
  %4046 = vset.pattern.permute.xlu0 0
  %4047 = vperm.xlu0 %4046, %v3814
  %v4048 = vpop.permute.xlu0 %4047
  %4051 = vset.pattern.permute.xlu0 0
  %4052 = vperm.xlu0 %4051, %v3815
  %v4053 = vpop.permute.xlu0 %4052
  %v4055 = vadd.f32 %v4041, %v4048
  %v4056 = vadd.f32 %v4042, %v4048
  %v4057 = vadd.f32 %v4043, %v4053
  %v4058 = vadd.f32 %v4044, %v4053
  %vm4059 = vcmp.ge.f32.partialorder %v4055, 0.0
  %vm4060 = vcmp.ge.f32.partialorder %v4056, 0.0
  %vm4061 = vcmp.ge.f32.partialorder %v4057, 0.0
  %vm4062 = vcmp.ge.f32.partialorder %v4058, 0.0
  %v4063 = vmul.f32 %v4055, 0.01
  %v4064 = vmul.f32 %v4056, 0.01
  %v4065 = vmul.f32 %v4057, 0.01
  %v4066 = vmul.f32 %v4058, 0.01
  %v4067 = vsel %vm4059, %v4055, %v4063
  %v4068 = vsel %vm4060, %v4056, %v4064
  %v4069 = vsel %vm4061, %v4057, %v4065
  %v4070 = vsel %vm4062, %v4058, %v4066
  %v4071 = vld [vmem:[%s14] sm:$0xff]
  %v4072 = vld [vmem:[%s14 + $0x8] sm:$0xff]
  %v4073 = vld [vmem:[%s14 + $0x10] sm:$0xff]
  %v4074 = vld [vmem:[%s14 + $0x18] sm:$0xff]
  %v4075 = vld [vmem:[%s14 + $0x20] sm:$0xff]
  %v4076 = vld [vmem:[%s14 + $0x28] sm:$0xff]
  %v4077 = vld [vmem:[%s14 + $0x30] sm:$0xff]
  %v4078 = vld [vmem:[%s14 + $0x38] sm:$0xff]
  %v4079 = vld [vmem:[%s14 + $0x40] sm:$0xff]
  %v4080 = vld [vmem:[%s14 + $0x48] sm:$0xff]
  %v4081 = vld [vmem:[%s14 + $0x50] sm:$0xff]
  %v4082 = vld [vmem:[%s14 + $0x58] sm:$0xff]
  %v4083 = vld [vmem:[%s14 + $0x60] sm:$0xff]
  %v4084 = vld [vmem:[%s14 + $0x68] sm:$0xff]
  %v4085 = vld [vmem:[%s14 + $0x70] sm:$0xff]
  %v4086 = vld [vmem:[%s14 + $0x78] sm:$0xff]
  %v4087 = vld [vmem:[%s14 + $0x80] sm:$0xff]
  %v4088 = vld [vmem:[%s14 + $0x88] sm:$0xff]
  %v4089 = vld [vmem:[%s14 + $0x90] sm:$0xff]
  %v4090 = vld [vmem:[%s14 + $0x98] sm:$0xff]
  %v4091 = vld [vmem:[%s14 + $0xa0] sm:$0xff]
  %v4092 = vld [vmem:[%s14 + $0xa8] sm:$0xff]
  %v4093 = vld [vmem:[%s14 + $0xb0] sm:$0xff]
  %v4094 = vld [vmem:[%s14 + $0xb8] sm:$0xff]
  %v4095 = vld [vmem:[%s14 + $0xc0] sm:$0xff]
  %v4096 = vld [vmem:[%s14 + $0xc8] sm:$0xff]
  %v4097 = vld [vmem:[%s14 + $0xd0] sm:$0xff]
  %v4098 = vld [vmem:[%s14 + $0xd8] sm:$0xff]
  %v4099 = vld [vmem:[%s14 + $0xe0] sm:$0xff]
  %v4100 = vld [vmem:[%s14 + $0xe8] sm:$0xff]
  %v4101 = vld [vmem:[%s14 + $0xf0] sm:$0xff]
  %v4102 = vld [vmem:[%s14 + $0xf8] sm:$0x1]
  %4107 = vrot.lane.b32.xlu0 %v4067, 127
  %v4108 = vpop.permute.xlu0 %4107
  %4109 = vrot.lane.b32.xlu0 %v4068, 127
  %v4110 = vpop.permute.xlu0 %4109
  %4111 = vrot.lane.b32.xlu0 %v4069, 127
  %v4112 = vpop.permute.xlu0 %4111
  %4113 = vrot.lane.b32.xlu0 %v4070, 127
  %v4114 = vpop.permute.xlu0 %4113
  %v4115 = vsel %vm80, %v4108, %v4110
  %v4116 = vsel %vm80, %v4112, %v4114
  %v4121 = vmax.f32 %v4067, %v4115
  %v4122 = vmax.f32 %v4068, %v4110
  %v4123 = vmax.f32 %v4069, %v4116
  %v4124 = vmax.f32 %v4070, %v4114
  %v4126 = vsel %vm144, %v4122, 0
  %v4129 = vsel %vm144, %v4124, 0
  %v4132 = vsel %vm243, %v4102, 0
  %v4134 = vand.u32 %v4086, 4294901760
  %4135 = vmatpush.msra.mxu0 %v4134
  %v4136 = vand.u32 %v4085, 4294901760
  %4137 = vmatpush.msra.mxu0 %v4136
  %v4138 = vand.u32 %v4084, 4294901760
  %4139 = vmatpush.msra.mxu0 %v4138
  %v4140 = vand.u32 %v4083, 4294901760
  %4141 = vmatpush.msra.mxu0 %v4140
  %v4142 = vand.u32 %v4082, 4294901760
  %4143 = vmatpush.msra.mxu0 %v4142
  %v4144 = vand.u32 %v4081, 4294901760
  %4145 = vmatpush.msra.mxu0 %v4144
  %v4146 = vand.u32 %v4080, 4294901760
  %4147 = vmatpush.msra.mxu0 %v4146
  %v4148 = vand.u32 %v4079, 4294901760
  %4149 = vmatpush.msra.mxu0 %v4148
  %v4150 = vand.u32 %v4078, 4294901760
  %4151 = vmatpush.msra.mxu0 %v4150
  %v4152 = vand.u32 %v4077, 4294901760
  %4153 = vmatpush.msra.mxu0 %v4152
  %v4154 = vand.u32 %v4076, 4294901760
  %4155 = vmatpush.msra.mxu0 %v4154
  %v4156 = vand.u32 %v4075, 4294901760
  %4157 = vmatpush.msra.mxu0 %v4156
  %v4158 = vand.u32 %v4074, 4294901760
  %4159 = vmatpush.msra.mxu0 %v4158
  %v4160 = vand.u32 %v4073, 4294901760
  %4161 = vmatpush.msra.mxu0 %v4160
  %v4162 = vand.u32 %v4072, 4294901760
  %4163 = vmatpush.msra.mxu0 %v4162
  %v4164 = vand.u32 %v4071, 4294901760
  %4165 = vmatpush.msra.mxu0 %v4164
  %v4166 = vand.u32 %v4121, 4294901760
  %v4167 = vsub.f32 %v4121, %v4166
  %v4168 = vand.u32 %v4167, 4294901760
  %v4169 = vsub.f32 %v4167, %v4168
  %v4170 = vand.u32 %v4169, 4294901760
  %4171 = vmatmul.f32.gmra.mxu0 %v4170
  %v4172 = vpop.f32.mrf.mxu0
  %v4173 = vadd.f32 0.0, %v4172
  %v4174 = vand.u32 %v4123, 4294901760
  %v4175 = vsub.f32 %v4123, %v4174
  %v4176 = vand.u32 %v4175, 4294901760
  %v4177 = vsub.f32 %v4175, %v4176
  %v4178 = vand.u32 %v4177, 4294901760
  %4179 = vmatmul.f32.gmra.mxu0 %v4178
  %v4180 = vpop.f32.mrf.mxu0
  %v4181 = vadd.f32 0.0, %v4180
  %4182 = vdwg.mxu0
  %v4183 = vand.u32 %v4086, 4294901760
  %v4184 = vsub.f32 %v4086, %v4183
  %v4185 = vand.u32 %v4184, 4294901760
  %v4186 = vsub.f32 %v4184, %v4185
  %v4187 = vand.u32 %v4186, 4294901760
  %4188 = vmatpush.msra.mxu0 %v4187
  %v4189 = vand.u32 %v4085, 4294901760
  %v4190 = vsub.f32 %v4085, %v4189
  %v4191 = vand.u32 %v4190, 4294901760
  %v4192 = vsub.f32 %v4190, %v4191
  %v4193 = vand.u32 %v4192, 4294901760
  %4194 = vmatpush.msra.mxu0 %v4193
  %v4195 = vand.u32 %v4084, 4294901760
  %v4196 = vsub.f32 %v4084, %v4195
  %v4197 = vand.u32 %v4196, 4294901760
  %v4198 = vsub.f32 %v4196, %v4197
  %v4199 = vand.u32 %v4198, 4294901760
  %4200 = vmatpush.msra.mxu0 %v4199
  %v4201 = vand.u32 %v4083, 4294901760
  %v4202 = vsub.f32 %v4083, %v4201
  %v4203 = vand.u32 %v4202, 4294901760
  %v4204 = vsub.f32 %v4202, %v4203
  %v4205 = vand.u32 %v4204, 4294901760
  %4206 = vmatpush.msra.mxu0 %v4205
  %v4207 = vand.u32 %v4082, 4294901760
  %v4208 = vsub.f32 %v4082, %v4207
  %v4209 = vand.u32 %v4208, 4294901760
  %v4210 = vsub.f32 %v4208, %v4209
  %v4211 = vand.u32 %v4210, 4294901760
  %4212 = vmatpush.msra.mxu0 %v4211
  %v4213 = vand.u32 %v4081, 4294901760
  %v4214 = vsub.f32 %v4081, %v4213
  %v4215 = vand.u32 %v4214, 4294901760
  %v4216 = vsub.f32 %v4214, %v4215
  %v4217 = vand.u32 %v4216, 4294901760
  %4218 = vmatpush.msra.mxu0 %v4217
  %v4219 = vand.u32 %v4080, 4294901760
  %v4220 = vsub.f32 %v4080, %v4219
  %v4221 = vand.u32 %v4220, 4294901760
  %v4222 = vsub.f32 %v4220, %v4221
  %v4223 = vand.u32 %v4222, 4294901760
  %4224 = vmatpush.msra.mxu0 %v4223
  %v4225 = vand.u32 %v4079, 4294901760
  %v4226 = vsub.f32 %v4079, %v4225
  %v4227 = vand.u32 %v4226, 4294901760
  %v4228 = vsub.f32 %v4226, %v4227
  %v4229 = vand.u32 %v4228, 4294901760
  %4230 = vmatpush.msra.mxu0 %v4229
  %v4231 = vand.u32 %v4078, 4294901760
  %v4232 = vsub.f32 %v4078, %v4231
  %v4233 = vand.u32 %v4232, 4294901760
  %v4234 = vsub.f32 %v4232, %v4233
  %v4235 = vand.u32 %v4234, 4294901760
  %4236 = vmatpush.msra.mxu0 %v4235
  %v4237 = vand.u32 %v4077, 4294901760
  %v4238 = vsub.f32 %v4077, %v4237
  %v4239 = vand.u32 %v4238, 4294901760
  %v4240 = vsub.f32 %v4238, %v4239
  %v4241 = vand.u32 %v4240, 4294901760
  %4242 = vmatpush.msra.mxu0 %v4241
  %v4243 = vand.u32 %v4076, 4294901760
  %v4244 = vsub.f32 %v4076, %v4243
  %v4245 = vand.u32 %v4244, 4294901760
  %v4246 = vsub.f32 %v4244, %v4245
  %v4247 = vand.u32 %v4246, 4294901760
  %4248 = vmatpush.msra.mxu0 %v4247
  %v4249 = vand.u32 %v4075, 4294901760
  %v4250 = vsub.f32 %v4075, %v4249
  %v4251 = vand.u32 %v4250, 4294901760
  %v4252 = vsub.f32 %v4250, %v4251
  %v4253 = vand.u32 %v4252, 4294901760
  %4254 = vmatpush.msra.mxu0 %v4253
  %v4255 = vand.u32 %v4074, 4294901760
  %v4256 = vsub.f32 %v4074, %v4255
  %v4257 = vand.u32 %v4256, 4294901760
  %v4258 = vsub.f32 %v4256, %v4257
  %v4259 = vand.u32 %v4258, 4294901760
  %4260 = vmatpush.msra.mxu0 %v4259
  %v4261 = vand.u32 %v4073, 4294901760
  %v4262 = vsub.f32 %v4073, %v4261
  %v4263 = vand.u32 %v4262, 4294901760
  %v4264 = vsub.f32 %v4262, %v4263
  %v4265 = vand.u32 %v4264, 4294901760
  %4266 = vmatpush.msra.mxu0 %v4265
  %v4267 = vand.u32 %v4072, 4294901760
  %v4268 = vsub.f32 %v4072, %v4267
  %v4269 = vand.u32 %v4268, 4294901760
  %v4270 = vsub.f32 %v4268, %v4269
  %v4271 = vand.u32 %v4270, 4294901760
  %4272 = vmatpush.msra.mxu0 %v4271
  %v4273 = vand.u32 %v4071, 4294901760
  %v4274 = vsub.f32 %v4071, %v4273
  %v4275 = vand.u32 %v4274, 4294901760
  %v4276 = vsub.f32 %v4274, %v4275
  %v4277 = vand.u32 %v4276, 4294901760
  %4278 = vmatpush.msra.mxu0 %v4277
  %v4279 = vand.u32 %v4121, 4294901760
  %4280 = vmatmul.f32.gmra.mxu0 %v4279
  %v4281 = vpop.f32.mrf.mxu0
  %v4282 = vadd.f32 %v4173, %v4281
  %v4283 = vand.u32 %v4123, 4294901760
  %4284 = vmatmul.f32.gmra.mxu0 %v4283
  %v4285 = vpop.f32.mrf.mxu0
  %v4286 = vadd.f32 %v4181, %v4285
  %4287 = vdwg.mxu0
  %v4288 = vand.u32 %v4086, 4294901760
  %v4289 = vsub.f32 %v4086, %v4288
  %4290 = vmatpush.msra.mxu0 %v4289
  %v4291 = vand.u32 %v4085, 4294901760
  %v4292 = vsub.f32 %v4085, %v4291
  %4293 = vmatpush.msra.mxu0 %v4292
  %v4294 = vand.u32 %v4084, 4294901760
  %v4295 = vsub.f32 %v4084, %v4294
  %4296 = vmatpush.msra.mxu0 %v4295
  %v4297 = vand.u32 %v4083, 4294901760
  %v4298 = vsub.f32 %v4083, %v4297
  %4299 = vmatpush.msra.mxu0 %v4298
  %v4300 = vand.u32 %v4082, 4294901760
  %v4301 = vsub.f32 %v4082, %v4300
  %4302 = vmatpush.msra.mxu0 %v4301
  %v4303 = vand.u32 %v4081, 4294901760
  %v4304 = vsub.f32 %v4081, %v4303
  %4305 = vmatpush.msra.mxu0 %v4304
  %v4306 = vand.u32 %v4080, 4294901760
  %v4307 = vsub.f32 %v4080, %v4306
  %4308 = vmatpush.msra.mxu0 %v4307
  %v4309 = vand.u32 %v4079, 4294901760
  %v4310 = vsub.f32 %v4079, %v4309
  %4311 = vmatpush.msra.mxu0 %v4310
  %v4312 = vand.u32 %v4078, 4294901760
  %v4313 = vsub.f32 %v4078, %v4312
  %4314 = vmatpush.msra.mxu0 %v4313
  %v4315 = vand.u32 %v4077, 4294901760
  %v4316 = vsub.f32 %v4077, %v4315
  %4317 = vmatpush.msra.mxu0 %v4316
  %v4318 = vand.u32 %v4076, 4294901760
  %v4319 = vsub.f32 %v4076, %v4318
  %4320 = vmatpush.msra.mxu0 %v4319
  %v4321 = vand.u32 %v4075, 4294901760
  %v4322 = vsub.f32 %v4075, %v4321
  %4323 = vmatpush.msra.mxu0 %v4322
  %v4324 = vand.u32 %v4074, 4294901760
  %v4325 = vsub.f32 %v4074, %v4324
  %4326 = vmatpush.msra.mxu0 %v4325
  %v4327 = vand.u32 %v4073, 4294901760
  %v4328 = vsub.f32 %v4073, %v4327
  %4329 = vmatpush.msra.mxu0 %v4328
  %v4330 = vand.u32 %v4072, 4294901760
  %v4331 = vsub.f32 %v4072, %v4330
  %4332 = vmatpush.msra.mxu0 %v4331
  %v4333 = vand.u32 %v4071, 4294901760
  %v4334 = vsub.f32 %v4071, %v4333
  %4335 = vmatpush.msra.mxu0 %v4334
  %v4336 = vand.u32 %v4121, 4294901760
  %v4337 = vsub.f32 %v4121, %v4336
  %4338 = vmatmul.f32.gmra.mxu0 %v4337
  %v4339 = vpop.f32.mrf.mxu0
  %v4340 = vadd.f32 %v4282, %v4339
  %v4341 = vand.u32 %v4123, 4294901760
  %v4342 = vsub.f32 %v4123, %v4341
  %4343 = vmatmul.f32.gmra.mxu0 %v4342
  %v4344 = vpop.f32.mrf.mxu0
  %v4345 = vadd.f32 %v4286, %v4344
  %4346 = vdwg.mxu0
  %v4347 = vand.u32 %v4086, 4294901760
  %4348 = vmatpush.msra.mxu0 %v4347
  %v4349 = vand.u32 %v4085, 4294901760
  %4350 = vmatpush.msra.mxu0 %v4349
  %v4351 = vand.u32 %v4084, 4294901760
  %4352 = vmatpush.msra.mxu0 %v4351
  %v4353 = vand.u32 %v4083, 4294901760
  %4354 = vmatpush.msra.mxu0 %v4353
  %v4355 = vand.u32 %v4082, 4294901760
  %4356 = vmatpush.msra.mxu0 %v4355
  %v4357 = vand.u32 %v4081, 4294901760
  %4358 = vmatpush.msra.mxu0 %v4357
  %v4359 = vand.u32 %v4080, 4294901760
  %4360 = vmatpush.msra.mxu0 %v4359
  %v4361 = vand.u32 %v4079, 4294901760
  %4362 = vmatpush.msra.mxu0 %v4361
  %v4363 = vand.u32 %v4078, 4294901760
  %4364 = vmatpush.msra.mxu0 %v4363
  %v4365 = vand.u32 %v4077, 4294901760
  %4366 = vmatpush.msra.mxu0 %v4365
  %v4367 = vand.u32 %v4076, 4294901760
  %4368 = vmatpush.msra.mxu0 %v4367
  %v4369 = vand.u32 %v4075, 4294901760
  %4370 = vmatpush.msra.mxu0 %v4369
  %v4371 = vand.u32 %v4074, 4294901760
  %4372 = vmatpush.msra.mxu0 %v4371
  %v4373 = vand.u32 %v4073, 4294901760
  %4374 = vmatpush.msra.mxu0 %v4373
  %v4375 = vand.u32 %v4072, 4294901760
  %4376 = vmatpush.msra.mxu0 %v4375
  %v4377 = vand.u32 %v4071, 4294901760
  %4378 = vmatpush.msra.mxu0 %v4377
  %v4379 = vand.u32 %v4121, 4294901760
  %v4380 = vsub.f32 %v4121, %v4379
  %v4381 = vand.u32 %v4380, 4294901760
  %4382 = vmatmul.f32.gmra.mxu0 %v4381
  %v4383 = vpop.f32.mrf.mxu0
  %v4384 = vadd.f32 %v4340, %v4383
  %v4385 = vand.u32 %v4123, 4294901760
  %v4386 = vsub.f32 %v4123, %v4385
  %v4387 = vand.u32 %v4386, 4294901760
  %4388 = vmatmul.f32.gmra.mxu0 %v4387
  %v4389 = vpop.f32.mrf.mxu0
  %v4390 = vadd.f32 %v4345, %v4389
  %4391 = vdwg.mxu0
  %v4392 = vand.u32 %v4086, 4294901760
  %v4393 = vsub.f32 %v4086, %v4392
  %v4394 = vand.u32 %v4393, 4294901760
  %4395 = vmatpush.msra.mxu0 %v4394
  %v4396 = vand.u32 %v4085, 4294901760
  %v4397 = vsub.f32 %v4085, %v4396
  %v4398 = vand.u32 %v4397, 4294901760
  %4399 = vmatpush.msra.mxu0 %v4398
  %v4400 = vand.u32 %v4084, 4294901760
  %v4401 = vsub.f32 %v4084, %v4400
  %v4402 = vand.u32 %v4401, 4294901760
  %4403 = vmatpush.msra.mxu0 %v4402
  %v4404 = vand.u32 %v4083, 4294901760
  %v4405 = vsub.f32 %v4083, %v4404
  %v4406 = vand.u32 %v4405, 4294901760
  %4407 = vmatpush.msra.mxu0 %v4406
  %v4408 = vand.u32 %v4082, 4294901760
  %v4409 = vsub.f32 %v4082, %v4408
  %v4410 = vand.u32 %v4409, 4294901760
  %4411 = vmatpush.msra.mxu0 %v4410
  %v4412 = vand.u32 %v4081, 4294901760
  %v4413 = vsub.f32 %v4081, %v4412
  %v4414 = vand.u32 %v4413, 4294901760
  %4415 = vmatpush.msra.mxu0 %v4414
  %v4416 = vand.u32 %v4080, 4294901760
  %v4417 = vsub.f32 %v4080, %v4416
  %v4418 = vand.u32 %v4417, 4294901760
  %4419 = vmatpush.msra.mxu0 %v4418
  %v4420 = vand.u32 %v4079, 4294901760
  %v4421 = vsub.f32 %v4079, %v4420
  %v4422 = vand.u32 %v4421, 4294901760
  %4423 = vmatpush.msra.mxu0 %v4422
  %v4424 = vand.u32 %v4078, 4294901760
  %v4425 = vsub.f32 %v4078, %v4424
  %v4426 = vand.u32 %v4425, 4294901760
  %4427 = vmatpush.msra.mxu0 %v4426
  %v4428 = vand.u32 %v4077, 4294901760
  %v4429 = vsub.f32 %v4077, %v4428
  %v4430 = vand.u32 %v4429, 4294901760
  %4431 = vmatpush.msra.mxu0 %v4430
  %v4432 = vand.u32 %v4076, 4294901760
  %v4433 = vsub.f32 %v4076, %v4432
  %v4434 = vand.u32 %v4433, 4294901760
  %4435 = vmatpush.msra.mxu0 %v4434
  %v4436 = vand.u32 %v4075, 4294901760
  %v4437 = vsub.f32 %v4075, %v4436
  %v4438 = vand.u32 %v4437, 4294901760
  %4439 = vmatpush.msra.mxu0 %v4438
  %v4440 = vand.u32 %v4074, 4294901760
  %v4441 = vsub.f32 %v4074, %v4440
  %v4442 = vand.u32 %v4441, 4294901760
  %4443 = vmatpush.msra.mxu0 %v4442
  %v4444 = vand.u32 %v4073, 4294901760
  %v4445 = vsub.f32 %v4073, %v4444
  %v4446 = vand.u32 %v4445, 4294901760
  %4447 = vmatpush.msra.mxu0 %v4446
  %v4448 = vand.u32 %v4072, 4294901760
  %v4449 = vsub.f32 %v4072, %v4448
  %v4450 = vand.u32 %v4449, 4294901760
  %4451 = vmatpush.msra.mxu0 %v4450
  %v4452 = vand.u32 %v4071, 4294901760
  %v4453 = vsub.f32 %v4071, %v4452
  %v4454 = vand.u32 %v4453, 4294901760
  %4455 = vmatpush.msra.mxu0 %v4454
  %v4456 = vand.u32 %v4121, 4294901760
  %4457 = vmatmul.f32.gmra.mxu0 %v4456
  %v4458 = vpop.f32.mrf.mxu0
  %v4459 = vadd.f32 %v4384, %v4458
  %v4460 = vand.u32 %v4123, 4294901760
  %4461 = vmatmul.f32.gmra.mxu0 %v4460
  %v4462 = vpop.f32.mrf.mxu0
  %v4463 = vadd.f32 %v4390, %v4462
  %4464 = vdwg.mxu0
  %v4465 = vand.u32 %v4086, 4294901760
  %4466 = vmatpush.msra.mxu0 %v4465
  %v4467 = vand.u32 %v4085, 4294901760
  %4468 = vmatpush.msra.mxu0 %v4467
  %v4469 = vand.u32 %v4084, 4294901760
  %4470 = vmatpush.msra.mxu0 %v4469
  %v4471 = vand.u32 %v4083, 4294901760
  %4472 = vmatpush.msra.mxu0 %v4471
  %v4473 = vand.u32 %v4082, 4294901760
  %4474 = vmatpush.msra.mxu0 %v4473
  %v4475 = vand.u32 %v4081, 4294901760
  %4476 = vmatpush.msra.mxu0 %v4475
  %v4477 = vand.u32 %v4080, 4294901760
  %4478 = vmatpush.msra.mxu0 %v4477
  %v4479 = vand.u32 %v4079, 4294901760
  %4480 = vmatpush.msra.mxu0 %v4479
  %v4481 = vand.u32 %v4078, 4294901760
  %4482 = vmatpush.msra.mxu0 %v4481
  %v4483 = vand.u32 %v4077, 4294901760
  %4484 = vmatpush.msra.mxu0 %v4483
  %v4485 = vand.u32 %v4076, 4294901760
  %4486 = vmatpush.msra.mxu0 %v4485
  %v4487 = vand.u32 %v4075, 4294901760
  %4488 = vmatpush.msra.mxu0 %v4487
  %v4489 = vand.u32 %v4074, 4294901760
  %4490 = vmatpush.msra.mxu0 %v4489
  %v4491 = vand.u32 %v4073, 4294901760
  %4492 = vmatpush.msra.mxu0 %v4491
  %v4493 = vand.u32 %v4072, 4294901760
  %4494 = vmatpush.msra.mxu0 %v4493
  %v4495 = vand.u32 %v4071, 4294901760
  %4496 = vmatpush.msra.mxu0 %v4495
  %v4497 = vand.u32 %v4121, 4294901760
  %4498 = vmatmul.f32.gmra.mxu0 %v4497
  %v4499 = vpop.f32.mrf.mxu0
  %v4500 = vadd.f32 %v4459, %v4499
  %v4501 = vand.u32 %v4123, 4294901760
  %4502 = vmatmul.f32.gmra.mxu0 %v4501
  %v4503 = vpop.f32.mrf.mxu0
  %v4504 = vadd.f32 %v4463, %v4503
  %4505 = vdwg.mxu0
  %v4506 = vand.u32 %v4132, 4294901760
  %4507 = vmatpush.msra.mxu0 %v4506
  %v4508 = vand.u32 %v4101, 4294901760
  %4509 = vmatpush.msra.mxu0 %v4508
  %v4510 = vand.u32 %v4100, 4294901760
  %4511 = vmatpush.msra.mxu0 %v4510
  %v4512 = vand.u32 %v4099, 4294901760
  %4513 = vmatpush.msra.mxu0 %v4512
  %v4514 = vand.u32 %v4098, 4294901760
  %4515 = vmatpush.msra.mxu0 %v4514
  %v4516 = vand.u32 %v4097, 4294901760
  %4517 = vmatpush.msra.mxu0 %v4516
  %v4518 = vand.u32 %v4096, 4294901760
  %4519 = vmatpush.msra.mxu0 %v4518
  %v4520 = vand.u32 %v4095, 4294901760
  %4521 = vmatpush.msra.mxu0 %v4520
  %v4522 = vand.u32 %v4094, 4294901760
  %4523 = vmatpush.msra.mxu0 %v4522
  %v4524 = vand.u32 %v4093, 4294901760
  %4525 = vmatpush.msra.mxu0 %v4524
  %v4526 = vand.u32 %v4092, 4294901760
  %4527 = vmatpush.msra.mxu0 %v4526
  %v4528 = vand.u32 %v4091, 4294901760
  %4529 = vmatpush.msra.mxu0 %v4528
  %v4530 = vand.u32 %v4090, 4294901760
  %4531 = vmatpush.msra.mxu0 %v4530
  %v4532 = vand.u32 %v4089, 4294901760
  %4533 = vmatpush.msra.mxu0 %v4532
  %v4534 = vand.u32 %v4088, 4294901760
  %4535 = vmatpush.msra.mxu0 %v4534
  %v4536 = vand.u32 %v4087, 4294901760
  %4537 = vmatpush.msra.mxu0 %v4536
  %v4538 = vand.u32 %v4126, 4294901760
  %v4539 = vsub.f32 %v4126, %v4538
  %v4540 = vand.u32 %v4539, 4294901760
  %v4541 = vsub.f32 %v4539, %v4540
  %v4542 = vand.u32 %v4541, 4294901760
  %4543 = vmatmul.f32.gmra.mxu0 %v4542
  %v4544 = vpop.f32.mrf.mxu0
  %v4545 = vadd.f32 %v4500, %v4544
  %v4546 = vand.u32 %v4129, 4294901760
  %v4547 = vsub.f32 %v4129, %v4546
  %v4548 = vand.u32 %v4547, 4294901760
  %v4549 = vsub.f32 %v4547, %v4548
  %v4550 = vand.u32 %v4549, 4294901760
  %4551 = vmatmul.f32.gmra.mxu0 %v4550
  %v4552 = vpop.f32.mrf.mxu0
  %v4553 = vadd.f32 %v4504, %v4552
  %4554 = vdwg.mxu0
  %v4555 = vand.u32 %v4132, 4294901760
  %v4556 = vsub.f32 %v4132, %v4555
  %v4557 = vand.u32 %v4556, 4294901760
  %v4558 = vsub.f32 %v4556, %v4557
  %v4559 = vand.u32 %v4558, 4294901760
  %4560 = vmatpush.msra.mxu0 %v4559
  %v4561 = vand.u32 %v4101, 4294901760
  %v4562 = vsub.f32 %v4101, %v4561
  %v4563 = vand.u32 %v4562, 4294901760
  %v4564 = vsub.f32 %v4562, %v4563
  %v4565 = vand.u32 %v4564, 4294901760
  %4566 = vmatpush.msra.mxu0 %v4565
  %v4567 = vand.u32 %v4100, 4294901760
  %v4568 = vsub.f32 %v4100, %v4567
  %v4569 = vand.u32 %v4568, 4294901760
  %v4570 = vsub.f32 %v4568, %v4569
  %v4571 = vand.u32 %v4570, 4294901760
  %4572 = vmatpush.msra.mxu0 %v4571
  %v4573 = vand.u32 %v4099, 4294901760
  %v4574 = vsub.f32 %v4099, %v4573
  %v4575 = vand.u32 %v4574, 4294901760
  %v4576 = vsub.f32 %v4574, %v4575
  %v4577 = vand.u32 %v4576, 4294901760
  %4578 = vmatpush.msra.mxu0 %v4577
  %v4579 = vand.u32 %v4098, 4294901760
  %v4580 = vsub.f32 %v4098, %v4579
  %v4581 = vand.u32 %v4580, 4294901760
  %v4582 = vsub.f32 %v4580, %v4581
  %v4583 = vand.u32 %v4582, 4294901760
  %4584 = vmatpush.msra.mxu0 %v4583
  %v4585 = vand.u32 %v4097, 4294901760
  %v4586 = vsub.f32 %v4097, %v4585
  %v4587 = vand.u32 %v4586, 4294901760
  %v4588 = vsub.f32 %v4586, %v4587
  %v4589 = vand.u32 %v4588, 4294901760
  %4590 = vmatpush.msra.mxu0 %v4589
  %v4591 = vand.u32 %v4096, 4294901760
  %v4592 = vsub.f32 %v4096, %v4591
  %v4593 = vand.u32 %v4592, 4294901760
  %v4594 = vsub.f32 %v4592, %v4593
  %v4595 = vand.u32 %v4594, 4294901760
  %4596 = vmatpush.msra.mxu0 %v4595
  %v4597 = vand.u32 %v4095, 4294901760
  %v4598 = vsub.f32 %v4095, %v4597
  %v4599 = vand.u32 %v4598, 4294901760
  %v4600 = vsub.f32 %v4598, %v4599
  %v4601 = vand.u32 %v4600, 4294901760
  %4602 = vmatpush.msra.mxu0 %v4601
  %v4603 = vand.u32 %v4094, 4294901760
  %v4604 = vsub.f32 %v4094, %v4603
  %v4605 = vand.u32 %v4604, 4294901760
  %v4606 = vsub.f32 %v4604, %v4605
  %v4607 = vand.u32 %v4606, 4294901760
  %4608 = vmatpush.msra.mxu0 %v4607
  %v4609 = vand.u32 %v4093, 4294901760
  %v4610 = vsub.f32 %v4093, %v4609
  %v4611 = vand.u32 %v4610, 4294901760
  %v4612 = vsub.f32 %v4610, %v4611
  %v4613 = vand.u32 %v4612, 4294901760
  %4614 = vmatpush.msra.mxu0 %v4613
  %v4615 = vand.u32 %v4092, 4294901760
  %v4616 = vsub.f32 %v4092, %v4615
  %v4617 = vand.u32 %v4616, 4294901760
  %v4618 = vsub.f32 %v4616, %v4617
  %v4619 = vand.u32 %v4618, 4294901760
  %4620 = vmatpush.msra.mxu0 %v4619
  %v4621 = vand.u32 %v4091, 4294901760
  %v4622 = vsub.f32 %v4091, %v4621
  %v4623 = vand.u32 %v4622, 4294901760
  %v4624 = vsub.f32 %v4622, %v4623
  %v4625 = vand.u32 %v4624, 4294901760
  %4626 = vmatpush.msra.mxu0 %v4625
  %v4627 = vand.u32 %v4090, 4294901760
  %v4628 = vsub.f32 %v4090, %v4627
  %v4629 = vand.u32 %v4628, 4294901760
  %v4630 = vsub.f32 %v4628, %v4629
  %v4631 = vand.u32 %v4630, 4294901760
  %4632 = vmatpush.msra.mxu0 %v4631
  %v4633 = vand.u32 %v4089, 4294901760
  %v4634 = vsub.f32 %v4089, %v4633
  %v4635 = vand.u32 %v4634, 4294901760
  %v4636 = vsub.f32 %v4634, %v4635
  %v4637 = vand.u32 %v4636, 4294901760
  %4638 = vmatpush.msra.mxu0 %v4637
  %v4639 = vand.u32 %v4088, 4294901760
  %v4640 = vsub.f32 %v4088, %v4639
  %v4641 = vand.u32 %v4640, 4294901760
  %v4642 = vsub.f32 %v4640, %v4641
  %v4643 = vand.u32 %v4642, 4294901760
  %4644 = vmatpush.msra.mxu0 %v4643
  %v4645 = vand.u32 %v4087, 4294901760
  %v4646 = vsub.f32 %v4087, %v4645
  %v4647 = vand.u32 %v4646, 4294901760
  %v4648 = vsub.f32 %v4646, %v4647
  %v4649 = vand.u32 %v4648, 4294901760
  %4650 = vmatpush.msra.mxu0 %v4649
  %v4651 = vand.u32 %v4126, 4294901760
  %4652 = vmatmul.f32.gmra.mxu0 %v4651
  %v4653 = vpop.f32.mrf.mxu0
  %v4654 = vadd.f32 %v4545, %v4653
  %v4655 = vand.u32 %v4129, 4294901760
  %4656 = vmatmul.f32.gmra.mxu0 %v4655
  %v4657 = vpop.f32.mrf.mxu0
  %v4658 = vadd.f32 %v4553, %v4657
  %4659 = vdwg.mxu0
  %v4660 = vand.u32 %v4132, 4294901760
  %v4661 = vsub.f32 %v4132, %v4660
  %4662 = vmatpush.msra.mxu0 %v4661
  %v4663 = vand.u32 %v4101, 4294901760
  %v4664 = vsub.f32 %v4101, %v4663
  %4665 = vmatpush.msra.mxu0 %v4664
  %v4666 = vand.u32 %v4100, 4294901760
  %v4667 = vsub.f32 %v4100, %v4666
  %4668 = vmatpush.msra.mxu0 %v4667
  %v4669 = vand.u32 %v4099, 4294901760
  %v4670 = vsub.f32 %v4099, %v4669
  %4671 = vmatpush.msra.mxu0 %v4670
  %v4672 = vand.u32 %v4098, 4294901760
  %v4673 = vsub.f32 %v4098, %v4672
  %4674 = vmatpush.msra.mxu0 %v4673
  %v4675 = vand.u32 %v4097, 4294901760
  %v4676 = vsub.f32 %v4097, %v4675
  %4677 = vmatpush.msra.mxu0 %v4676
  %v4678 = vand.u32 %v4096, 4294901760
  %v4679 = vsub.f32 %v4096, %v4678
  %4680 = vmatpush.msra.mxu0 %v4679
  %v4681 = vand.u32 %v4095, 4294901760
  %v4682 = vsub.f32 %v4095, %v4681
  %4683 = vmatpush.msra.mxu0 %v4682
  %v4684 = vand.u32 %v4094, 4294901760
  %v4685 = vsub.f32 %v4094, %v4684
  %4686 = vmatpush.msra.mxu0 %v4685
  %v4687 = vand.u32 %v4093, 4294901760
  %v4688 = vsub.f32 %v4093, %v4687
  %4689 = vmatpush.msra.mxu0 %v4688
  %v4690 = vand.u32 %v4092, 4294901760
  %v4691 = vsub.f32 %v4092, %v4690
  %4692 = vmatpush.msra.mxu0 %v4691
  %v4693 = vand.u32 %v4091, 4294901760
  %v4694 = vsub.f32 %v4091, %v4693
  %4695 = vmatpush.msra.mxu0 %v4694
  %v4696 = vand.u32 %v4090, 4294901760
  %v4697 = vsub.f32 %v4090, %v4696
  %4698 = vmatpush.msra.mxu0 %v4697
  %v4699 = vand.u32 %v4089, 4294901760
  %v4700 = vsub.f32 %v4089, %v4699
  %4701 = vmatpush.msra.mxu0 %v4700
  %v4702 = vand.u32 %v4088, 4294901760
  %v4703 = vsub.f32 %v4088, %v4702
  %4704 = vmatpush.msra.mxu0 %v4703
  %v4705 = vand.u32 %v4087, 4294901760
  %v4706 = vsub.f32 %v4087, %v4705
  %4707 = vmatpush.msra.mxu0 %v4706
  %v4708 = vand.u32 %v4126, 4294901760
  %v4709 = vsub.f32 %v4126, %v4708
  %4710 = vmatmul.f32.gmra.mxu0 %v4709
  %v4711 = vpop.f32.mrf.mxu0
  %v4712 = vadd.f32 %v4654, %v4711
  %v4713 = vand.u32 %v4129, 4294901760
  %v4714 = vsub.f32 %v4129, %v4713
  %4715 = vmatmul.f32.gmra.mxu0 %v4714
  %v4716 = vpop.f32.mrf.mxu0
  %v4717 = vadd.f32 %v4658, %v4716
  %4718 = vdwg.mxu0
  %v4719 = vand.u32 %v4132, 4294901760
  %4720 = vmatpush.msra.mxu0 %v4719
  %v4721 = vand.u32 %v4101, 4294901760
  %4722 = vmatpush.msra.mxu0 %v4721
  %v4723 = vand.u32 %v4100, 4294901760
  %4724 = vmatpush.msra.mxu0 %v4723
  %v4725 = vand.u32 %v4099, 4294901760
  %4726 = vmatpush.msra.mxu0 %v4725
  %v4727 = vand.u32 %v4098, 4294901760
  %4728 = vmatpush.msra.mxu0 %v4727
  %v4729 = vand.u32 %v4097, 4294901760
  %4730 = vmatpush.msra.mxu0 %v4729
  %v4731 = vand.u32 %v4096, 4294901760
  %4732 = vmatpush.msra.mxu0 %v4731
  %v4733 = vand.u32 %v4095, 4294901760
  %4734 = vmatpush.msra.mxu0 %v4733
  %v4735 = vand.u32 %v4094, 4294901760
  %4736 = vmatpush.msra.mxu0 %v4735
  %v4737 = vand.u32 %v4093, 4294901760
  %4738 = vmatpush.msra.mxu0 %v4737
  %v4739 = vand.u32 %v4092, 4294901760
  %4740 = vmatpush.msra.mxu0 %v4739
  %v4741 = vand.u32 %v4091, 4294901760
  %4742 = vmatpush.msra.mxu0 %v4741
  %v4743 = vand.u32 %v4090, 4294901760
  %4744 = vmatpush.msra.mxu0 %v4743
  %v4745 = vand.u32 %v4089, 4294901760
  %4746 = vmatpush.msra.mxu0 %v4745
  %v4747 = vand.u32 %v4088, 4294901760
  %4748 = vmatpush.msra.mxu0 %v4747
  %v4749 = vand.u32 %v4087, 4294901760
  %4750 = vmatpush.msra.mxu0 %v4749
  %v4751 = vand.u32 %v4126, 4294901760
  %v4752 = vsub.f32 %v4126, %v4751
  %v4753 = vand.u32 %v4752, 4294901760
  %4754 = vmatmul.f32.gmra.mxu0 %v4753
  %v4755 = vpop.f32.mrf.mxu0
  %v4756 = vadd.f32 %v4712, %v4755
  %v4757 = vand.u32 %v4129, 4294901760
  %v4758 = vsub.f32 %v4129, %v4757
  %v4759 = vand.u32 %v4758, 4294901760
  %4760 = vmatmul.f32.gmra.mxu0 %v4759
  %v4761 = vpop.f32.mrf.mxu0
  %v4762 = vadd.f32 %v4717, %v4761
  %4763 = vdwg.mxu0
  %v4764 = vand.u32 %v4132, 4294901760
  %v4765 = vsub.f32 %v4132, %v4764
  %v4766 = vand.u32 %v4765, 4294901760
  %4767 = vmatpush.msra.mxu0 %v4766
  %v4768 = vand.u32 %v4101, 4294901760
  %v4769 = vsub.f32 %v4101, %v4768
  %v4770 = vand.u32 %v4769, 4294901760
  %4771 = vmatpush.msra.mxu0 %v4770
  %v4772 = vand.u32 %v4100, 4294901760
  %v4773 = vsub.f32 %v4100, %v4772
  %v4774 = vand.u32 %v4773, 4294901760
  %4775 = vmatpush.msra.mxu0 %v4774
  %v4776 = vand.u32 %v4099, 4294901760
  %v4777 = vsub.f32 %v4099, %v4776
  %v4778 = vand.u32 %v4777, 4294901760
  %4779 = vmatpush.msra.mxu0 %v4778
  %v4780 = vand.u32 %v4098, 4294901760
  %v4781 = vsub.f32 %v4098, %v4780
  %v4782 = vand.u32 %v4781, 4294901760
  %4783 = vmatpush.msra.mxu0 %v4782
  %v4784 = vand.u32 %v4097, 4294901760
  %v4785 = vsub.f32 %v4097, %v4784
  %v4786 = vand.u32 %v4785, 4294901760
  %4787 = vmatpush.msra.mxu0 %v4786
  %v4788 = vand.u32 %v4096, 4294901760
  %v4789 = vsub.f32 %v4096, %v4788
  %v4790 = vand.u32 %v4789, 4294901760
  %4791 = vmatpush.msra.mxu0 %v4790
  %v4792 = vand.u32 %v4095, 4294901760
  %v4793 = vsub.f32 %v4095, %v4792
  %v4794 = vand.u32 %v4793, 4294901760
  %4795 = vmatpush.msra.mxu0 %v4794
  %v4796 = vand.u32 %v4094, 4294901760
  %v4797 = vsub.f32 %v4094, %v4796
  %v4798 = vand.u32 %v4797, 4294901760
  %4799 = vmatpush.msra.mxu0 %v4798
  %v4800 = vand.u32 %v4093, 4294901760
  %v4801 = vsub.f32 %v4093, %v4800
  %v4802 = vand.u32 %v4801, 4294901760
  %4803 = vmatpush.msra.mxu0 %v4802
  %v4804 = vand.u32 %v4092, 4294901760
  %v4805 = vsub.f32 %v4092, %v4804
  %v4806 = vand.u32 %v4805, 4294901760
  %4807 = vmatpush.msra.mxu0 %v4806
  %v4808 = vand.u32 %v4091, 4294901760
  %v4809 = vsub.f32 %v4091, %v4808
  %v4810 = vand.u32 %v4809, 4294901760
  %4811 = vmatpush.msra.mxu0 %v4810
  %v4812 = vand.u32 %v4090, 4294901760
  %v4813 = vsub.f32 %v4090, %v4812
  %v4814 = vand.u32 %v4813, 4294901760
  %4815 = vmatpush.msra.mxu0 %v4814
  %v4816 = vand.u32 %v4089, 4294901760
  %v4817 = vsub.f32 %v4089, %v4816
  %v4818 = vand.u32 %v4817, 4294901760
  %4819 = vmatpush.msra.mxu0 %v4818
  %v4820 = vand.u32 %v4088, 4294901760
  %v4821 = vsub.f32 %v4088, %v4820
  %v4822 = vand.u32 %v4821, 4294901760
  %4823 = vmatpush.msra.mxu0 %v4822
  %v4824 = vand.u32 %v4087, 4294901760
  %v4825 = vsub.f32 %v4087, %v4824
  %v4826 = vand.u32 %v4825, 4294901760
  %4827 = vmatpush.msra.mxu0 %v4826
  %v4828 = vand.u32 %v4126, 4294901760
  %4829 = vmatmul.f32.gmra.mxu0 %v4828
  %v4830 = vpop.f32.mrf.mxu0
  %v4831 = vadd.f32 %v4756, %v4830
  %v4832 = vand.u32 %v4129, 4294901760
  %4833 = vmatmul.f32.gmra.mxu0 %v4832
  %v4834 = vpop.f32.mrf.mxu0
  %v4835 = vadd.f32 %v4762, %v4834
  %4836 = vdwg.mxu0
  %v4837 = vand.u32 %v4132, 4294901760
  %4838 = vmatpush.msra.mxu0 %v4837
  %v4839 = vand.u32 %v4101, 4294901760
  %4840 = vmatpush.msra.mxu0 %v4839
  %v4841 = vand.u32 %v4100, 4294901760
  %4842 = vmatpush.msra.mxu0 %v4841
  %v4843 = vand.u32 %v4099, 4294901760
  %4844 = vmatpush.msra.mxu0 %v4843
  %v4845 = vand.u32 %v4098, 4294901760
  %4846 = vmatpush.msra.mxu0 %v4845
  %v4847 = vand.u32 %v4097, 4294901760
  %4848 = vmatpush.msra.mxu0 %v4847
  %v4849 = vand.u32 %v4096, 4294901760
  %4850 = vmatpush.msra.mxu0 %v4849
  %v4851 = vand.u32 %v4095, 4294901760
  %4852 = vmatpush.msra.mxu0 %v4851
  %v4853 = vand.u32 %v4094, 4294901760
  %4854 = vmatpush.msra.mxu0 %v4853
  %v4855 = vand.u32 %v4093, 4294901760
  %4856 = vmatpush.msra.mxu0 %v4855
  %v4857 = vand.u32 %v4092, 4294901760
  %4858 = vmatpush.msra.mxu0 %v4857
  %v4859 = vand.u32 %v4091, 4294901760
  %4860 = vmatpush.msra.mxu0 %v4859
  %v4861 = vand.u32 %v4090, 4294901760
  %4862 = vmatpush.msra.mxu0 %v4861
  %v4863 = vand.u32 %v4089, 4294901760
  %4864 = vmatpush.msra.mxu0 %v4863
  %v4865 = vand.u32 %v4088, 4294901760
  %4866 = vmatpush.msra.mxu0 %v4865
  %v4867 = vand.u32 %v4087, 4294901760
  %4868 = vmatpush.msra.mxu0 %v4867
  %v4869 = vand.u32 %v4126, 4294901760
  %4870 = vmatmul.f32.gmra.mxu0 %v4869
  %v4871 = vpop.f32.mrf.mxu0
  %v4872 = vadd.f32 %v4831, %v4871
  %v4873 = vand.u32 %v4129, 4294901760
  %4874 = vmatmul.f32.gmra.mxu0 %v4873
  %v4875 = vpop.f32.mrf.mxu0
  %v4876 = vadd.f32 %v4835, %v4875
  %4877 = vdwg.mxu0
  %v4878 = vld [vmem:[%s9] sm:$0xff]
  %v4879 = vld [vmem:[%s9 + $0x8] sm:$0x7f]
  %v4880 = vld [vmem:[%s10] sm:$0xff]
  %v4881 = vld [vmem:[%s10 + $0x8] sm:$0x7f]
  %v4882 = vld [vmem:[%s11] sm:$0xff]
  %v4883 = vld [vmem:[%s11 + $0x8] sm:$0x7f]
  %v4884 = vld [vmem:[%s12] sm:$0xff]
  %v4885 = vld [vmem:[%s12 + $0x8] sm:$0x7f]
  %4888 = vrot.lane.b32.xlu0 %v4872, 5
  %v4889 = vpop.permute.xlu0 %4888
  %4890 = vrot.lane.b32.xlu0 %v4876, 5
  %v4891 = vpop.permute.xlu0 %4890
  %v4894 = vsel %vm3854, 0.0, %v4889
  %v4895 = vsel %vm3854, 0.0, %v4891
  %vm4896 = vcmask 547840
  %v4897 = vsel %vm4896, %v4894, 0.0
  %v4898 = vsel %vm4896, %v4895, 0.0
  %v4901 = vrot.slane %v4897, 6
  %v4902 = vrot.slane %v4898, 6
  %v4903 = vsel %vm246, %v4901, %v4902
  %4904 = vrot.lane.b32.xlu0 %v4901, 127
  %v4905 = vpop.permute.xlu0 %4904
  %4906 = vrot.lane.b32.xlu0 %v4903, 127
  %v4907 = vpop.permute.xlu0 %4906
  %v4910 = vrot.slane %v4897, 4
  %v4911 = vrot.slane %v4898, 4
  %v4912 = vsel %vm252, %v4910, %v4911
  %4913 = vrot.lane.b32.xlu0 %v4910, 126
  %v4914 = vpop.permute.xlu0 %4913
  %4915 = vrot.lane.b32.xlu0 %v4912, 126
  %v4916 = vpop.permute.xlu0 %4915
  %v4919 = vrot.slane %v4897, 2
  %v4920 = vrot.slane %v4898, 2
  %v4921 = vsel %vm258, %v4919, %v4920
  %4922 = vrot.lane.b32.xlu0 %v4919, 125
  %v4923 = vpop.permute.xlu0 %4922
  %4924 = vrot.lane.b32.xlu0 %v4921, 125
  %v4925 = vpop.permute.xlu0 %4924
  %4928 = vrot.lane.b32.xlu0 %v4897, 124
  %v4929 = vpop.permute.xlu0 %4928
  %4930 = vrot.lane.b32.xlu0 %v4898, 124
  %v4931 = vpop.permute.xlu0 %4930
  %4934 = vrot.lane.b32.xlu0 %v4901, 123
  %v4935 = vpop.permute.xlu0 %4934
  %4936 = vrot.lane.b32.xlu0 %v4903, 123
  %v4937 = vpop.permute.xlu0 %4936
  %4940 = vrot.lane.b32.xlu0 %v4910, 122
  %v4941 = vpop.permute.xlu0 %4940
  %4942 = vrot.lane.b32.xlu0 %v4912, 122
  %v4943 = vpop.permute.xlu0 %4942
  %4946 = vrot.lane.b32.xlu0 %v4919, 121
  %v4947 = vpop.permute.xlu0 %4946
  %4948 = vrot.lane.b32.xlu0 %v4921, 121
  %v4949 = vpop.permute.xlu0 %4948
  %4952 = vrot.lane.b32.xlu0 %v4897, 120
  %v4953 = vpop.permute.xlu0 %4952
  %4954 = vrot.lane.b32.xlu0 %v4898, 120
  %v4955 = vpop.permute.xlu0 %4954
  %4958 = vrot.lane.b32.xlu0 %v4901, 119
  %v4959 = vpop.permute.xlu0 %4958
  %4960 = vrot.lane.b32.xlu0 %v4903, 119
  %v4961 = vpop.permute.xlu0 %4960
  %4964 = vrot.lane.b32.xlu0 %v4910, 118
  %v4965 = vpop.permute.xlu0 %4964
  %4966 = vrot.lane.b32.xlu0 %v4912, 118
  %v4967 = vpop.permute.xlu0 %4966
  %v4970 = vsel %vm246, %v4898, %v4905
  %v4971 = vsel %vm252, %v4907, %v4914
  %v4972 = vsel %vm258, %v4916, %v4923
  %v4973 = vsel %vm246, %v4931, %v4935
  %v4974 = vsel %vm252, %v4937, %v4941
  %v4975 = vsel %vm258, %v4943, %v4947
  %v4976 = vsel %vm246, %v4955, %v4959
  %v4977 = vsel %vm252, %v4961, %v4965
  %4978 = vrot.lane.b32.xlu0 %v4872, 71
  %v4979 = vpop.permute.xlu0 %4978
  %4980 = vrot.lane.b32.xlu0 %v4876, 71
  %v4981 = vpop.permute.xlu0 %4980
  %v4984 = vsel %vm3854, 0.0, %v4979
  %v4985 = vsel %vm3854, 0.0, %v4981
  %v4986 = vsel %vm4896, %v4984, 0.0
  %v4987 = vsel %vm4896, %v4985, 0.0
  %v4990 = vrot.slane %v4986, 6
  %v4991 = vrot.slane %v4987, 6
  %v4992 = vsel %vm246, %v4990, %v4991
  %4993 = vrot.lane.b32.xlu0 %v4990, 127
  %v4994 = vpop.permute.xlu0 %4993
  %4995 = vrot.lane.b32.xlu0 %v4992, 127
  %v4996 = vpop.permute.xlu0 %4995
  %v4999 = vrot.slane %v4986, 4
  %v5000 = vrot.slane %v4987, 4
  %v5001 = vsel %vm252, %v4999, %v5000
  %5002 = vrot.lane.b32.xlu0 %v4999, 126
  %v5003 = vpop.permute.xlu0 %5002
  %5004 = vrot.lane.b32.xlu0 %v5001, 126
  %v5005 = vpop.permute.xlu0 %5004
  %v5008 = vrot.slane %v4986, 2
  %v5009 = vrot.slane %v4987, 2
  %v5010 = vsel %vm258, %v5008, %v5009
  %5011 = vrot.lane.b32.xlu0 %v5008, 125
  %v5012 = vpop.permute.xlu0 %5011
  %5013 = vrot.lane.b32.xlu0 %v5010, 125
  %v5014 = vpop.permute.xlu0 %5013
  %5016 = vrot.lane.b32.xlu0 %v4986, 124
  %v5017 = vpop.permute.xlu0 %5016
  %5018 = vrot.lane.b32.xlu0 %v4987, 124
  %v5019 = vpop.permute.xlu0 %5018
  %5021 = vrot.lane.b32.xlu0 %v4990, 123
  %v5022 = vpop.permute.xlu0 %5021
  %5023 = vrot.lane.b32.xlu0 %v4992, 123
  %v5024 = vpop.permute.xlu0 %5023
  %5027 = vrot.lane.b32.xlu0 %v4999, 122
  %v5028 = vpop.permute.xlu0 %5027
  %5029 = vrot.lane.b32.xlu0 %v5001, 122
  %v5030 = vpop.permute.xlu0 %5029
  %5033 = vrot.lane.b32.xlu0 %v5008, 121
  %v5034 = vpop.permute.xlu0 %5033
  %5035 = vrot.lane.b32.xlu0 %v5010, 121
  %v5036 = vpop.permute.xlu0 %5035
  %5038 = vrot.lane.b32.xlu0 %v4986, 120
  %v5039 = vpop.permute.xlu0 %5038
  %5040 = vrot.lane.b32.xlu0 %v4987, 120
  %v5041 = vpop.permute.xlu0 %5040
  %5043 = vrot.lane.b32.xlu0 %v4990, 119
  %v5044 = vpop.permute.xlu0 %5043
  %5045 = vrot.lane.b32.xlu0 %v4992, 119
  %v5046 = vpop.permute.xlu0 %5045
  %5049 = vrot.lane.b32.xlu0 %v4999, 118
  %v5050 = vpop.permute.xlu0 %5049
  %5051 = vrot.lane.b32.xlu0 %v5001, 118
  %v5052 = vpop.permute.xlu0 %5051
  %v5054 = vsel %vm246, %v4987, %v4994
  %v5055 = vsel %vm252, %v4996, %v5003
  %v5056 = vsel %vm258, %v5005, %v5012
  %v5057 = vsel %vm246, %v5019, %v5022
  %v5058 = vsel %vm252, %v5024, %v5028
  %v5059 = vsel %vm258, %v5030, %v5034
  %v5060 = vsel %vm246, %v5041, %v5044
  %v5061 = vsel %vm252, %v5046, %v5050
  %5070 = vrot.lane.b32.xlu0 %v4986, 62
  %v5071 = vpop.permute.xlu0 %5070
  %5072 = vrot.lane.b32.xlu0 %v5054, 62
  %v5073 = vpop.permute.xlu0 %5072
  %5074 = vrot.lane.b32.xlu0 %v5055, 62
  %v5075 = vpop.permute.xlu0 %5074
  %5076 = vrot.lane.b32.xlu0 %v5056, 62
  %v5077 = vpop.permute.xlu0 %5076
  %5078 = vrot.lane.b32.xlu0 %v5014, 62
  %v5079 = vpop.permute.xlu0 %5078
  %5080 = vrot.lane.b32.xlu0 %v5017, 62
  %v5081 = vpop.permute.xlu0 %5080
  %5082 = vrot.lane.b32.xlu0 %v5057, 62
  %v5083 = vpop.permute.xlu0 %5082
  %5084 = vrot.lane.b32.xlu0 %v5058, 62
  %v5085 = vpop.permute.xlu0 %5084
  %5086 = vrot.lane.b32.xlu0 %v5059, 62
  %v5087 = vpop.permute.xlu0 %5086
  %5088 = vrot.lane.b32.xlu0 %v5036, 62
  %v5089 = vpop.permute.xlu0 %5088
  %5090 = vrot.lane.b32.xlu0 %v5039, 62
  %v5091 = vpop.permute.xlu0 %5090
  %5092 = vrot.lane.b32.xlu0 %v5060, 62
  %v5093 = vpop.permute.xlu0 %5092
  %5094 = vrot.lane.b32.xlu0 %v5061, 62
  %v5095 = vpop.permute.xlu0 %5094
  %5096 = vrot.lane.b32.xlu0 %v5052, 62
  %v5097 = vpop.permute.xlu0 %5096
  %vm5112 = vcmask 506880
  %v5113 = vsel %vm5112, %v4897, %v5071
  %v5114 = vsel %vm5112, %v4970, %v5073
  %v5115 = vsel %vm5112, %v4971, %v5075
  %v5116 = vsel %vm5112, %v4972, %v5077
  %v5117 = vsel %vm5112, %v4925, %v5079
  %v5118 = vsel %vm5112, %v4929, %v5081
  %v5119 = vsel %vm5112, %v4973, %v5083
  %v5120 = vsel %vm5112, %v4974, %v5085
  %v5121 = vsel %vm5112, %v4975, %v5087
  %v5122 = vsel %vm5112, %v4949, %v5089
  %v5123 = vsel %vm5112, %v4953, %v5091
  %v5124 = vsel %vm5112, %v4976, %v5093
  %v5125 = vsel %vm5112, %v4977, %v5095
  %v5126 = vsel %vm5112, %v4967, %v5097
  %5128 = vset.pattern.permute.xlu0 0
  %5129 = vperm.xlu0 %5128, %v4880
  %v5130 = vpop.permute.xlu0 %5129
  %5133 = vset.pattern.permute.xlu0 0
  %5134 = vperm.xlu0 %5133, %v4881
  %v5135 = vpop.permute.xlu0 %5134
  %vm5137 = vcmask 900096
  %v5139 = vsel %vm5137, %v4878, 0
  %v5142 = vsel %vm5137, %v4879, 0
  %v5145 = vsel %vm258, %v5126, 0
  %5147 = vmatpush.msra.mxu0 0.0
  %5148 = vmatpush.msra.mxu0 0.0
  %5149 = vmatpush.msra.mxu0 %v5145
  %5150 = vmatpush.msra.mxu0 %v5125
  %5151 = vmatpush.msra.mxu0 %v5124
  %5152 = vmatpush.msra.mxu0 %v5123
  %5153 = vmatpush.msra.mxu0 %v5122
  %5154 = vmatpush.msra.mxu0 %v5121
  %5155 = vmatpush.msra.mxu0 %v5120
  %5156 = vmatpush.msra.mxu0 %v5119
  %5157 = vmatpush.msra.mxu0 %v5118
  %5158 = vmatpush.msra.mxu0 %v5117
  %5159 = vmatpush.msra.mxu0 %v5116
  %5160 = vmatpush.msra.mxu0 %v5115
  %5161 = vmatpush.msra.mxu0 %v5114
  %5162 = vmatpush.msra.mxu0 %v5113
  %5163 = vmatmul.f32.gmra.mxu0 %v5139
  %v5164 = vpop.f32.mrf.mxu0
  %v5165 = vadd.f32 %v5130, %v5164
  %5166 = vmatmul.f32.gmra.mxu0 %v5142
  %v5167 = vpop.f32.mrf.mxu0
  %v5168 = vadd.f32 %v5135, %v5167
  %5169 = vdwg.mxu0
  %v5170 = vsel %vm110, %v5165, 0.0
  %5171 = vadd.xlane.f32.xlu0 %v5170
  %v5172 = vpop.xlane.xlu0 %5171
  %vm5173 = vcmask 1013760
  %v5174 = vsel %vm5173, %v5168, 0.0
  %5175 = vadd.xlane.f32.xlu0 %v5174
  %v5176 = vpop.xlane.xlu0 %5175
  %v5177 = vrcp.pop 124.0
  %v5178 = vmul.f32 124.0, %v5177
  %v5179 = vsub.f32 1.0, %v5178
  %v5180 = vmul.f32 %v5177, %v5179
  %v5181 = vadd.f32 %v5177, %v5180
  %vm5182 = vweird.f32 %v5177
  %v5183 = vsel %vm5182, %v5177, %v5181
  %v5184 = vmul.f32 %v5172, %v5183
  %v5185 = vmul.f32 %v5176, %v5183
  %v5186 = vsub.f32 %v5165, %v5184
  %v5187 = vsub.f32 %v5168, %v5185
  %v5188 = vmul.f32 %v5186, %v5186
  %v5189 = vmul.f32 %v5187, %v5187
  %v5190 = vsel %vm110, %v5188, 0.0
  %5191 = vadd.xlane.f32.xlu0 %v5190
  %v5192 = vpop.xlane.xlu0 %5191
  %v5193 = vsel %vm5173, %v5189, 0.0
  %5194 = vadd.xlane.f32.xlu0 %v5193
  %v5195 = vpop.xlane.xlu0 %5194
  %v5196 = vmul.f32 %v5192, %v5183
  %v5197 = vmul.f32 %v5195, %v5183
  %v5198 = vadd.f32 %v5196, 1e-05
  %v5199 = vadd.f32 %v5197, 1e-05
  %v5200 = vrsqrt.pop %v5198
  %v5201 = vmul.f32 %v5200, %v5198
  %v5202 = vmul.f32 %v5201, %v5200
  %v5203 = vmul.f32 0.5, %v5202
  %v5204 = vsub.f32 1.5, %v5203
  %v5205 = vmul.f32 %v5200, %v5204
  %vm5206 = vweird.f32 %v5198
  %vm5207 = vweird.f32 %v5200
  %vm5208 = vmor %vm5206, %vm5207
  %v5209 = vsel %vm5208, %v5200, %v5205
  %v5210 = vrsqrt.pop %v5199
  %v5211 = vmul.f32 %v5210, %v5199
  %v5212 = vmul.f32 %v5211, %v5210
  %v5213 = vmul.f32 0.5, %v5212
  %v5214 = vsub.f32 1.5, %v5213
  %v5215 = vmul.f32 %v5210, %v5214
  %vm5216 = vweird.f32 %v5199
  %vm5217 = vweird.f32 %v5210
  %vm5218 = vmor %vm5216, %vm5217
  %v5219 = vsel %vm5218, %v5210, %v5215
  %v5220 = vmul.f32 %v5186, %v5209
  %v5221 = vmul.f32 %v5187, %v5219
  %5223 = vset.pattern.permute.xlu0 0
  %5224 = vperm.xlu0 %5223, %v4882
  %v5225 = vpop.permute.xlu0 %5224
  %5228 = vset.pattern.permute.xlu0 0
  %5229 = vperm.xlu0 %5228, %v4883
  %v5230 = vpop.permute.xlu0 %5229
  %v5232 = vmul.f32 %v5220, %v5225
  %v5233 = vmul.f32 %v5221, %v5230
  %5235 = vset.pattern.permute.xlu0 0
  %5236 = vperm.xlu0 %5235, %v4884
  %v5237 = vpop.permute.xlu0 %5236
  %5240 = vset.pattern.permute.xlu0 0
  %5241 = vperm.xlu0 %5240, %v4885
  %v5242 = vpop.permute.xlu0 %5241
  %v5244 = vadd.f32 %v5232, %v5237
  %v5245 = vadd.f32 %v5233, %v5242
  %vm5246 = vcmp.ge.f32.partialorder %v5244, 0.0
  %vm5247 = vcmp.ge.f32.partialorder %v5245, 0.0
  %v5248 = vmul.f32 %v5244, 0.01
  %v5249 = vmul.f32 %v5245, 0.01
  %v5250 = vsel %vm5246, %v5244, %v5248
  %v5251 = vsel %vm5247, %v5245, %v5249
  %v5252 = vld [vmem:[%s15] sm:$0xff]
  %v5253 = vld [vmem:[%s15 + $0x8] sm:$0xff]
  %v5254 = vld [vmem:[%s15 + $0x10] sm:$0xff]
  %v5255 = vld [vmem:[%s15 + $0x18] sm:$0xff]
  %v5256 = vld [vmem:[%s15 + $0x20] sm:$0xff]
  %v5257 = vld [vmem:[%s15 + $0x28] sm:$0xff]
  %v5258 = vld [vmem:[%s15 + $0x30] sm:$0xff]
  %v5259 = vld [vmem:[%s15 + $0x38] sm:$0xff]
  %v5260 = vld [vmem:[%s15 + $0x40] sm:$0xff]
  %v5261 = vld [vmem:[%s15 + $0x48] sm:$0xff]
  %v5262 = vld [vmem:[%s15 + $0x50] sm:$0xff]
  %v5263 = vld [vmem:[%s15 + $0x58] sm:$0xff]
  %v5264 = vld [vmem:[%s15 + $0x60] sm:$0xff]
  %v5265 = vld [vmem:[%s15 + $0x68] sm:$0xff]
  %v5266 = vld [vmem:[%s15 + $0x70] sm:$0xff]
  %v5267 = vld [vmem:[%s15 + $0x78] sm:$0x7]
  %5270 = vrot.lane.b32.xlu0 %v5250, 127
  %v5271 = vpop.permute.xlu0 %5270
  %5272 = vrot.lane.b32.xlu0 %v5251, 127
  %v5273 = vpop.permute.xlu0 %5272
  %v5276 = vmax.f32 %v5250, %v5271
  %v5277 = vmax.f32 %v5251, %v5273
  %v5279 = vsel %vm120, %v5276, 0
  %v5282 = vsel %vm120, %v5277, 0
  %v5285 = vsel %vm249, %v5267, 0
  %v5287 = vand.u32 %v5285, 4294901760
  %5288 = vmatpush.msra.mxu0 %v5287
  %v5289 = vand.u32 %v5266, 4294901760
  %5290 = vmatpush.msra.mxu0 %v5289
  %v5291 = vand.u32 %v5265, 4294901760
  %5292 = vmatpush.msra.mxu0 %v5291
  %v5293 = vand.u32 %v5264, 4294901760
  %5294 = vmatpush.msra.mxu0 %v5293
  %v5295 = vand.u32 %v5263, 4294901760
  %5296 = vmatpush.msra.mxu0 %v5295
  %v5297 = vand.u32 %v5262, 4294901760
  %5298 = vmatpush.msra.mxu0 %v5297
  %v5299 = vand.u32 %v5261, 4294901760
  %5300 = vmatpush.msra.mxu0 %v5299
  %v5301 = vand.u32 %v5260, 4294901760
  %5302 = vmatpush.msra.mxu0 %v5301
  %v5303 = vand.u32 %v5259, 4294901760
  %5304 = vmatpush.msra.mxu0 %v5303
  %v5305 = vand.u32 %v5258, 4294901760
  %5306 = vmatpush.msra.mxu0 %v5305
  %v5307 = vand.u32 %v5257, 4294901760
  %5308 = vmatpush.msra.mxu0 %v5307
  %v5309 = vand.u32 %v5256, 4294901760
  %5310 = vmatpush.msra.mxu0 %v5309
  %v5311 = vand.u32 %v5255, 4294901760
  %5312 = vmatpush.msra.mxu0 %v5311
  %v5313 = vand.u32 %v5254, 4294901760
  %5314 = vmatpush.msra.mxu0 %v5313
  %v5315 = vand.u32 %v5253, 4294901760
  %5316 = vmatpush.msra.mxu0 %v5315
  %v5317 = vand.u32 %v5252, 4294901760
  %5318 = vmatpush.msra.mxu0 %v5317
  %v5319 = vand.u32 %v5279, 4294901760
  %v5320 = vsub.f32 %v5279, %v5319
  %v5321 = vand.u32 %v5320, 4294901760
  %v5322 = vsub.f32 %v5320, %v5321
  %v5323 = vand.u32 %v5322, 4294901760
  %5324 = vmatmul.f32.gmra.mxu0 %v5323
  %v5325 = vpop.f32.mrf.mxu0
  %v5326 = vadd.f32 0.0, %v5325
  %v5327 = vand.u32 %v5282, 4294901760
  %v5328 = vsub.f32 %v5282, %v5327
  %v5329 = vand.u32 %v5328, 4294901760
  %v5330 = vsub.f32 %v5328, %v5329
  %v5331 = vand.u32 %v5330, 4294901760
  %5332 = vmatmul.f32.gmra.mxu0 %v5331
  %v5333 = vpop.f32.mrf.mxu0
  %v5334 = vadd.f32 0.0, %v5333
  %5335 = vdwg.mxu0
  %v5336 = vand.u32 %v5285, 4294901760
  %v5337 = vsub.f32 %v5285, %v5336
  %v5338 = vand.u32 %v5337, 4294901760
  %v5339 = vsub.f32 %v5337, %v5338
  %v5340 = vand.u32 %v5339, 4294901760
  %5341 = vmatpush.msra.mxu0 %v5340
  %v5342 = vand.u32 %v5266, 4294901760
  %v5343 = vsub.f32 %v5266, %v5342
  %v5344 = vand.u32 %v5343, 4294901760
  %v5345 = vsub.f32 %v5343, %v5344
  %v5346 = vand.u32 %v5345, 4294901760
  %5347 = vmatpush.msra.mxu0 %v5346
  %v5348 = vand.u32 %v5265, 4294901760
  %v5349 = vsub.f32 %v5265, %v5348
  %v5350 = vand.u32 %v5349, 4294901760
  %v5351 = vsub.f32 %v5349, %v5350
  %v5352 = vand.u32 %v5351, 4294901760
  %5353 = vmatpush.msra.mxu0 %v5352
  %v5354 = vand.u32 %v5264, 4294901760
  %v5355 = vsub.f32 %v5264, %v5354
  %v5356 = vand.u32 %v5355, 4294901760
  %v5357 = vsub.f32 %v5355, %v5356
  %v5358 = vand.u32 %v5357, 4294901760
  %5359 = vmatpush.msra.mxu0 %v5358
  %v5360 = vand.u32 %v5263, 4294901760
  %v5361 = vsub.f32 %v5263, %v5360
  %v5362 = vand.u32 %v5361, 4294901760
  %v5363 = vsub.f32 %v5361, %v5362
  %v5364 = vand.u32 %v5363, 4294901760
  %5365 = vmatpush.msra.mxu0 %v5364
  %v5366 = vand.u32 %v5262, 4294901760
  %v5367 = vsub.f32 %v5262, %v5366
  %v5368 = vand.u32 %v5367, 4294901760
  %v5369 = vsub.f32 %v5367, %v5368
  %v5370 = vand.u32 %v5369, 4294901760
  %5371 = vmatpush.msra.mxu0 %v5370
  %v5372 = vand.u32 %v5261, 4294901760
  %v5373 = vsub.f32 %v5261, %v5372
  %v5374 = vand.u32 %v5373, 4294901760
  %v5375 = vsub.f32 %v5373, %v5374
  %v5376 = vand.u32 %v5375, 4294901760
  %5377 = vmatpush.msra.mxu0 %v5376
  %v5378 = vand.u32 %v5260, 4294901760
  %v5379 = vsub.f32 %v5260, %v5378
  %v5380 = vand.u32 %v5379, 4294901760
  %v5381 = vsub.f32 %v5379, %v5380
  %v5382 = vand.u32 %v5381, 4294901760
  %5383 = vmatpush.msra.mxu0 %v5382
  %v5384 = vand.u32 %v5259, 4294901760
  %v5385 = vsub.f32 %v5259, %v5384
  %v5386 = vand.u32 %v5385, 4294901760
  %v5387 = vsub.f32 %v5385, %v5386
  %v5388 = vand.u32 %v5387, 4294901760
  %5389 = vmatpush.msra.mxu0 %v5388
  %v5390 = vand.u32 %v5258, 4294901760
  %v5391 = vsub.f32 %v5258, %v5390
  %v5392 = vand.u32 %v5391, 4294901760
  %v5393 = vsub.f32 %v5391, %v5392
  %v5394 = vand.u32 %v5393, 4294901760
  %5395 = vmatpush.msra.mxu0 %v5394
  %v5396 = vand.u32 %v5257, 4294901760
  %v5397 = vsub.f32 %v5257, %v5396
  %v5398 = vand.u32 %v5397, 4294901760
  %v5399 = vsub.f32 %v5397, %v5398
  %v5400 = vand.u32 %v5399, 4294901760
  %5401 = vmatpush.msra.mxu0 %v5400
  %v5402 = vand.u32 %v5256, 4294901760
  %v5403 = vsub.f32 %v5256, %v5402
  %v5404 = vand.u32 %v5403, 4294901760
  %v5405 = vsub.f32 %v5403, %v5404
  %v5406 = vand.u32 %v5405, 4294901760
  %5407 = vmatpush.msra.mxu0 %v5406
  %v5408 = vand.u32 %v5255, 4294901760
  %v5409 = vsub.f32 %v5255, %v5408
  %v5410 = vand.u32 %v5409, 4294901760
  %v5411 = vsub.f32 %v5409, %v5410
  %v5412 = vand.u32 %v5411, 4294901760
  %5413 = vmatpush.msra.mxu0 %v5412
  %v5414 = vand.u32 %v5254, 4294901760
  %v5415 = vsub.f32 %v5254, %v5414
  %v5416 = vand.u32 %v5415, 4294901760
  %v5417 = vsub.f32 %v5415, %v5416
  %v5418 = vand.u32 %v5417, 4294901760
  %5419 = vmatpush.msra.mxu0 %v5418
  %v5420 = vand.u32 %v5253, 4294901760
  %v5421 = vsub.f32 %v5253, %v5420
  %v5422 = vand.u32 %v5421, 4294901760
  %v5423 = vsub.f32 %v5421, %v5422
  %v5424 = vand.u32 %v5423, 4294901760
  %5425 = vmatpush.msra.mxu0 %v5424
  %v5426 = vand.u32 %v5252, 4294901760
  %v5427 = vsub.f32 %v5252, %v5426
  %v5428 = vand.u32 %v5427, 4294901760
  %v5429 = vsub.f32 %v5427, %v5428
  %v5430 = vand.u32 %v5429, 4294901760
  %5431 = vmatpush.msra.mxu0 %v5430
  %v5432 = vand.u32 %v5279, 4294901760
  %5433 = vmatmul.f32.gmra.mxu0 %v5432
  %v5434 = vpop.f32.mrf.mxu0
  %v5435 = vadd.f32 %v5326, %v5434
  %v5436 = vand.u32 %v5282, 4294901760
  %5437 = vmatmul.f32.gmra.mxu0 %v5436
  %v5438 = vpop.f32.mrf.mxu0
  %v5439 = vadd.f32 %v5334, %v5438
  %5440 = vdwg.mxu0
  %v5441 = vand.u32 %v5285, 4294901760
  %v5442 = vsub.f32 %v5285, %v5441
  %5443 = vmatpush.msra.mxu0 %v5442
  %v5444 = vand.u32 %v5266, 4294901760
  %v5445 = vsub.f32 %v5266, %v5444
  %5446 = vmatpush.msra.mxu0 %v5445
  %v5447 = vand.u32 %v5265, 4294901760
  %v5448 = vsub.f32 %v5265, %v5447
  %5449 = vmatpush.msra.mxu0 %v5448
  %v5450 = vand.u32 %v5264, 4294901760
  %v5451 = vsub.f32 %v5264, %v5450
  %5452 = vmatpush.msra.mxu0 %v5451
  %v5453 = vand.u32 %v5263, 4294901760
  %v5454 = vsub.f32 %v5263, %v5453
  %5455 = vmatpush.msra.mxu0 %v5454
  %v5456 = vand.u32 %v5262, 4294901760
  %v5457 = vsub.f32 %v5262, %v5456
  %5458 = vmatpush.msra.mxu0 %v5457
  %v5459 = vand.u32 %v5261, 4294901760
  %v5460 = vsub.f32 %v5261, %v5459
  %5461 = vmatpush.msra.mxu0 %v5460
  %v5462 = vand.u32 %v5260, 4294901760
  %v5463 = vsub.f32 %v5260, %v5462
  %5464 = vmatpush.msra.mxu0 %v5463
  %v5465 = vand.u32 %v5259, 4294901760
  %v5466 = vsub.f32 %v5259, %v5465
  %5467 = vmatpush.msra.mxu0 %v5466
  %v5468 = vand.u32 %v5258, 4294901760
  %v5469 = vsub.f32 %v5258, %v5468
  %5470 = vmatpush.msra.mxu0 %v5469
  %v5471 = vand.u32 %v5257, 4294901760
  %v5472 = vsub.f32 %v5257, %v5471
  %5473 = vmatpush.msra.mxu0 %v5472
  %v5474 = vand.u32 %v5256, 4294901760
  %v5475 = vsub.f32 %v5256, %v5474
  %5476 = vmatpush.msra.mxu0 %v5475
  %v5477 = vand.u32 %v5255, 4294901760
  %v5478 = vsub.f32 %v5255, %v5477
  %5479 = vmatpush.msra.mxu0 %v5478
  %v5480 = vand.u32 %v5254, 4294901760
  %v5481 = vsub.f32 %v5254, %v5480
  %5482 = vmatpush.msra.mxu0 %v5481
  %v5483 = vand.u32 %v5253, 4294901760
  %v5484 = vsub.f32 %v5253, %v5483
  %5485 = vmatpush.msra.mxu0 %v5484
  %v5486 = vand.u32 %v5252, 4294901760
  %v5487 = vsub.f32 %v5252, %v5486
  %5488 = vmatpush.msra.mxu0 %v5487
  %v5489 = vand.u32 %v5279, 4294901760
  %v5490 = vsub.f32 %v5279, %v5489
  %5491 = vmatmul.f32.gmra.mxu0 %v5490
  %v5492 = vpop.f32.mrf.mxu0
  %v5493 = vadd.f32 %v5435, %v5492
  %v5494 = vand.u32 %v5282, 4294901760
  %v5495 = vsub.f32 %v5282, %v5494
  %5496 = vmatmul.f32.gmra.mxu0 %v5495
  %v5497 = vpop.f32.mrf.mxu0
  %v5498 = vadd.f32 %v5439, %v5497
  %5499 = vdwg.mxu0
  %v5500 = vand.u32 %v5285, 4294901760
  %5501 = vmatpush.msra.mxu0 %v5500
  %v5502 = vand.u32 %v5266, 4294901760
  %5503 = vmatpush.msra.mxu0 %v5502
  %v5504 = vand.u32 %v5265, 4294901760
  %5505 = vmatpush.msra.mxu0 %v5504
  %v5506 = vand.u32 %v5264, 4294901760
  %5507 = vmatpush.msra.mxu0 %v5506
  %v5508 = vand.u32 %v5263, 4294901760
  %5509 = vmatpush.msra.mxu0 %v5508
  %v5510 = vand.u32 %v5262, 4294901760
  %5511 = vmatpush.msra.mxu0 %v5510
  %v5512 = vand.u32 %v5261, 4294901760
  %5513 = vmatpush.msra.mxu0 %v5512
  %v5514 = vand.u32 %v5260, 4294901760
  %5515 = vmatpush.msra.mxu0 %v5514
  %v5516 = vand.u32 %v5259, 4294901760
  %5517 = vmatpush.msra.mxu0 %v5516
  %v5518 = vand.u32 %v5258, 4294901760
  %5519 = vmatpush.msra.mxu0 %v5518
  %v5520 = vand.u32 %v5257, 4294901760
  %5521 = vmatpush.msra.mxu0 %v5520
  %v5522 = vand.u32 %v5256, 4294901760
  %5523 = vmatpush.msra.mxu0 %v5522
  %v5524 = vand.u32 %v5255, 4294901760
  %5525 = vmatpush.msra.mxu0 %v5524
  %v5526 = vand.u32 %v5254, 4294901760
  %5527 = vmatpush.msra.mxu0 %v5526
  %v5528 = vand.u32 %v5253, 4294901760
  %5529 = vmatpush.msra.mxu0 %v5528
  %v5530 = vand.u32 %v5252, 4294901760
  %5531 = vmatpush.msra.mxu0 %v5530
  %v5532 = vand.u32 %v5279, 4294901760
  %v5533 = vsub.f32 %v5279, %v5532
  %v5534 = vand.u32 %v5533, 4294901760
  %5535 = vmatmul.f32.gmra.mxu0 %v5534
  %v5536 = vpop.f32.mrf.mxu0
  %v5537 = vadd.f32 %v5493, %v5536
  %v5538 = vand.u32 %v5282, 4294901760
  %v5539 = vsub.f32 %v5282, %v5538
  %v5540 = vand.u32 %v5539, 4294901760
  %5541 = vmatmul.f32.gmra.mxu0 %v5540
  %v5542 = vpop.f32.mrf.mxu0
  %v5543 = vadd.f32 %v5498, %v5542
  %5544 = vdwg.mxu0
  %v5545 = vand.u32 %v5285, 4294901760
  %v5546 = vsub.f32 %v5285, %v5545
  %v5547 = vand.u32 %v5546, 4294901760
  %5548 = vmatpush.msra.mxu0 %v5547
  %v5549 = vand.u32 %v5266, 4294901760
  %v5550 = vsub.f32 %v5266, %v5549
  %v5551 = vand.u32 %v5550, 4294901760
  %5552 = vmatpush.msra.mxu0 %v5551
  %v5553 = vand.u32 %v5265, 4294901760
  %v5554 = vsub.f32 %v5265, %v5553
  %v5555 = vand.u32 %v5554, 4294901760
  %5556 = vmatpush.msra.mxu0 %v5555
  %v5557 = vand.u32 %v5264, 4294901760
  %v5558 = vsub.f32 %v5264, %v5557
  %v5559 = vand.u32 %v5558, 4294901760
  %5560 = vmatpush.msra.mxu0 %v5559
  %v5561 = vand.u32 %v5263, 4294901760
  %v5562 = vsub.f32 %v5263, %v5561
  %v5563 = vand.u32 %v5562, 4294901760
  %5564 = vmatpush.msra.mxu0 %v5563
  %v5565 = vand.u32 %v5262, 4294901760
  %v5566 = vsub.f32 %v5262, %v5565
  %v5567 = vand.u32 %v5566, 4294901760
  %5568 = vmatpush.msra.mxu0 %v5567
  %v5569 = vand.u32 %v5261, 4294901760
  %v5570 = vsub.f32 %v5261, %v5569
  %v5571 = vand.u32 %v5570, 4294901760
  %5572 = vmatpush.msra.mxu0 %v5571
  %v5573 = vand.u32 %v5260, 4294901760
  %v5574 = vsub.f32 %v5260, %v5573
  %v5575 = vand.u32 %v5574, 4294901760
  %5576 = vmatpush.msra.mxu0 %v5575
  %v5577 = vand.u32 %v5259, 4294901760
  %v5578 = vsub.f32 %v5259, %v5577
  %v5579 = vand.u32 %v5578, 4294901760
  %5580 = vmatpush.msra.mxu0 %v5579
  %v5581 = vand.u32 %v5258, 4294901760
  %v5582 = vsub.f32 %v5258, %v5581
  %v5583 = vand.u32 %v5582, 4294901760
  %5584 = vmatpush.msra.mxu0 %v5583
  %v5585 = vand.u32 %v5257, 4294901760
  %v5586 = vsub.f32 %v5257, %v5585
  %v5587 = vand.u32 %v5586, 4294901760
  %5588 = vmatpush.msra.mxu0 %v5587
  %v5589 = vand.u32 %v5256, 4294901760
  %v5590 = vsub.f32 %v5256, %v5589
  %v5591 = vand.u32 %v5590, 4294901760
  %5592 = vmatpush.msra.mxu0 %v5591
  %v5593 = vand.u32 %v5255, 4294901760
  %v5594 = vsub.f32 %v5255, %v5593
  %v5595 = vand.u32 %v5594, 4294901760
  %5596 = vmatpush.msra.mxu0 %v5595
  %v5597 = vand.u32 %v5254, 4294901760
  %v5598 = vsub.f32 %v5254, %v5597
  %v5599 = vand.u32 %v5598, 4294901760
  %5600 = vmatpush.msra.mxu0 %v5599
  %v5601 = vand.u32 %v5253, 4294901760
  %v5602 = vsub.f32 %v5253, %v5601
  %v5603 = vand.u32 %v5602, 4294901760
  %5604 = vmatpush.msra.mxu0 %v5603
  %v5605 = vand.u32 %v5252, 4294901760
  %v5606 = vsub.f32 %v5252, %v5605
  %v5607 = vand.u32 %v5606, 4294901760
  %5608 = vmatpush.msra.mxu0 %v5607
  %v5609 = vand.u32 %v5279, 4294901760
  %5610 = vmatmul.f32.gmra.mxu0 %v5609
  %v5611 = vpop.f32.mrf.mxu0
  %v5612 = vadd.f32 %v5537, %v5611
  %v5613 = vand.u32 %v5282, 4294901760
  %5614 = vmatmul.f32.gmra.mxu0 %v5613
  %v5615 = vpop.f32.mrf.mxu0
  %v5616 = vadd.f32 %v5543, %v5615
  %5617 = vdwg.mxu0
  %v5618 = vand.u32 %v5285, 4294901760
  %5619 = vmatpush.msra.mxu0 %v5618
  %v5620 = vand.u32 %v5266, 4294901760
  %5621 = vmatpush.msra.mxu0 %v5620
  %v5622 = vand.u32 %v5265, 4294901760
  %5623 = vmatpush.msra.mxu0 %v5622
  %v5624 = vand.u32 %v5264, 4294901760
  %5625 = vmatpush.msra.mxu0 %v5624
  %v5626 = vand.u32 %v5263, 4294901760
  %5627 = vmatpush.msra.mxu0 %v5626
  %v5628 = vand.u32 %v5262, 4294901760
  %5629 = vmatpush.msra.mxu0 %v5628
  %v5630 = vand.u32 %v5261, 4294901760
  %5631 = vmatpush.msra.mxu0 %v5630
  %v5632 = vand.u32 %v5260, 4294901760
  %5633 = vmatpush.msra.mxu0 %v5632
  %v5634 = vand.u32 %v5259, 4294901760
  %5635 = vmatpush.msra.mxu0 %v5634
  %v5636 = vand.u32 %v5258, 4294901760
  %5637 = vmatpush.msra.mxu0 %v5636
  %v5638 = vand.u32 %v5257, 4294901760
  %5639 = vmatpush.msra.mxu0 %v5638
  %v5640 = vand.u32 %v5256, 4294901760
  %5641 = vmatpush.msra.mxu0 %v5640
  %v5642 = vand.u32 %v5255, 4294901760
  %5643 = vmatpush.msra.mxu0 %v5642
  %v5644 = vand.u32 %v5254, 4294901760
  %5645 = vmatpush.msra.mxu0 %v5644
  %v5646 = vand.u32 %v5253, 4294901760
  %5647 = vmatpush.msra.mxu0 %v5646
  %v5648 = vand.u32 %v5252, 4294901760
  %5649 = vmatpush.msra.mxu0 %v5648
  %v5650 = vand.u32 %v5279, 4294901760
  %5651 = vmatmul.f32.gmra.mxu0 %v5650
  %v5652 = vpop.f32.mrf.mxu0
  %v5653 = vadd.f32 %v5612, %v5652
  %v5654 = vand.u32 %v5282, 4294901760
  %5655 = vmatmul.f32.gmra.mxu0 %v5654
  %v5656 = vpop.f32.mrf.mxu0
  %v5657 = vadd.f32 %v5616, %v5656
  %5658 = vdwg.mxu0
  %v5661 = vrot.slane %v5653, 1
  %v5662 = vrot.slane %v5657, 1
  %v5663 = vsel %vm261, %v5661, %v5662
  %5664 = vrot.lane.b32.xlu0 %v5661, 97
  %v5665 = vpop.permute.xlu0 %5664
  %5666 = vrot.lane.b32.xlu0 %v5663, 97
  %v5667 = vpop.permute.xlu0 %5666
  %5668 = vrot.lane.b32.xlu0 %v5662, 97
  %v5669 = vpop.permute.xlu0 %5668
  %v5673 = vsel %vm261, %v5657, %v5665
  %5674 = vst.msk [vmem:[%s16] sm:$0xff] %vm407, %v5653
  %5675 = vst.msk [vmem:[%s16 + $0x8] sm:$0xff] %vm407, %v5673
  %5676 = vst.msk [vmem:[%s16 + $0x10] sm:$0xff] %vm407, %v5667
  %vm5677 = vcmask 250880
  %5678 = vst.msk [vmem:[%s16 + $0x18] sm:$0x3f] %vm5677, %v5669
  // Predicated region
  $region66: #{extractor_forward.1} parent=0 // pred_check
    _
  $region67: #{extractor_forward.1} parent=0 // pred_check_branch
    %5680 = sbr.rel (0) target = $region69
  $region68: #{extractor_forward.1} parent=0 // pred_region
    _
  $region69: #{extractor_forward.1} parent=0 // pred_fallthru
    _
  // Predicated region
  $region70: #{extractor_forward.1} parent=0 // pred_check
    _
  $region71: #{extractor_forward.1} parent=0 // pred_check_branch
    %5682 = sbr.rel (0) target = $region73
  $region72: #{extractor_forward.1} parent=0 // pred_region
    _
  $region73: #{extractor_forward.1} parent=0 // pred_fallthru
    _

</llo_original>
